<compile_context>
chip_gen: v5e
topology: v5e:2x2
jax: 0.10.0
libtpu: 0.0.40
codegen_flags: <defaults>
</compile_context>

<pallas_src>
import math

import jax
import jax.numpy as jnp
import numpy as np
from jax.experimental import pallas as pl
from jax.experimental.pallas import tpu as pltpu

_LANES = 128


def _round_up(x, m):
    return (x + m - 1) // m * m


# ----------------------------------------------------------------------------
# Fused 3x3 conv (+ in-kernel channel concat) + folded-BN bias + ReLU
# ----------------------------------------------------------------------------
def _make_conv3x3_bn_relu_kernel(n_in, th, w):
    """Ref layout: [top_0, halo_0, ..., top_{n-1}, halo_{n-1}, wpk, bias, out].

      top_t  : (1, th, w+2, Ct)   main row slab of padded input t (bf16)
      halo_t : (1, 2,  w+2, Ct)   the 2 rows below the slab (bf16)
      wpk    : (3, 3*sumCt, 128)  per-dy packed weights, BN scale folded (bf16)
      bias   : (1, 128)           conv-bias + BN shift (f32)
      out    : (1, th, w, 128)
    """

    def kernel(*refs):
        wpk_ref = refs[2 * n_in]
        bias_ref = refs[2 * n_in + 1]
        out_ref = refs[2 * n_in + 2]
        tco = out_ref.shape[-1]

        tops = [refs[2 * t][0] for t in range(n_in)]        # (th, w+2, Ct)
        halos = [refs[2 * t + 1][0] for t in range(n_in)]   # (2,  w+2, Ct)

        acc = jnp.zeros((th * w, tco), jnp.float32)
        for dy in range(3):
            # im2col LHS for this dy: K = 3*sum(Ct).  The halo rows are folded
            # directly into the shifted row window (no separate slab copy).
            pieces = []
            for dx in range(3):
                for t in range(n_in):
                    if dy == 0:
                        rows = tops[t][:, dx:dx + w, :]
                    else:
                        rows = jnp.concatenate(
                            [tops[t][dy:, dx:dx + w, :],
                             halos[t][:dy, dx:dx + w, :]], axis=0)
                    pieces.append(rows)                      # (th, w, Ct)
            lhs = jnp.concatenate(pieces, axis=-1)           # (th, w, 3*sumCt)
            lhs = lhs.reshape(th * w, lhs.shape[-1])
            acc = acc + jnp.dot(lhs, wpk_ref[dy],
                                preferred_element_type=jnp.float32)

        y = jnp.maximum(acc + bias_ref[...], 0.0)
        out_ref[...] = y.reshape(1, th, w, tco).astype(out_ref.dtype)

    return kernel


def conv3x3_bn_relu(xs, ws, scale, bias, *, tile_h=8, out_dtype=None):
    """Fused Conv2d(k=3, s=1, p=1) over the channel-concat of `xs` + BN + ReLU.

    xs:    list of NHWC activations sharing (N, H, W); the concat is fused.
    ws:    matching list of (3, 3, Ci, Cout) weights.
    scale, bias: (Cout,) folded BN scale and (conv-bias * scale + BN shift).
    Returns (N, H, W, round_up(Cout, 128)); channels >= Cout are exactly zero.
    """
    N, H, W = xs[0].shape[:3]
    for x in xs:
        assert x.shape[:3] == (N, H, W)
    n_in = len(xs)
    cts = [int(x.shape[-1]) for x in xs]
    sumct = sum(cts)
    cout = int(ws[0].shape[-1])
    coutp = _round_up(cout, _LANES)
    out_dtype = xs[0].dtype if out_dtype is None else out_dtype

    assert H >= 2 and H % 2 == 0, "TODO(synk): odd or size-1 H unsupported"
    th = 2
    for cand in range(2, min(tile_h, H) + 1, 2):  # largest even divisor <= tile_h
        if H % cand == 0:
            th = cand
    n_hblk = H // th
    wp = W + 2

    # 1px spatial zero-pad (conv padding=1) + bf16 cast for DMA / MXU.
    xps = [jnp.pad(x, ((0, 0), (1, 1), (1, 1), (0, 0))).astype(jnp.bfloat16)
           for x in xs]

    # Fold the BN scale into the weights and pack them per dy; K order is
    # (dx, input, channel), matching the in-kernel im2col concat order.
    scale_f = scale.astype(jnp.float32)
    wsf = [w.astype(jnp.float32) * scale_f[None, None, None, :] for w in ws]
    wrows = [jnp.concatenate([wsf[t][dy, dx] for dx in range(3)
                              for t in range(n_in)], axis=0)     # (3*sumCt, cout)
             for dy in range(3)]
    wpk = jnp.stack(wrows, axis=0)                                # (3, 3*sumCt, cout)
    wpk = jnp.pad(wpk, ((0, 0), (0, 0), (0, coutp - cout))).astype(jnp.bfloat16)
    bias_p = jnp.pad(bias.astype(jnp.float32), (0, coutp - cout)).reshape(1, coutp)

    in_specs, operands = [], []
    for xp in xps:
        ct = xp.shape[-1]
        # Main th-row slab + 2-row halo (second BlockSpec on the same array).
        in_specs.append(pl.BlockSpec((1, th, wp, ct), lambda n, h, c: (n, h, 0, 0)))
        in_specs.append(pl.BlockSpec(
            (1, 2, wp, ct), lambda n, h, c: (n, (h + 1) * (th // 2), 0, 0)))
        operands += [xp, xp]
    # Packed weights: index map depends only on c, so they stay resident across
    # (n, h).  TODO(synk): for coutp//128 > 1 hoist c above h if the weight
    # stream outweighs the input slab.
    in_specs.append(pl.BlockSpec((3, 3 * sumct, _LANES), lambda n, h, c: (0, 0, c)))
    in_specs.append(pl.BlockSpec((1, _LANES), lambda n, h, c: (0, c)))
    operands += [wpk, bias_p]
    out_spec = pl.BlockSpec((1, th, W, _LANES), lambda n, h, c: (n, h, 0, c))

    flops = 2 * N * H * W * coutp * 9 * sumct
    bytes_accessed = (2 * sum(int(xp.size) for xp in xps) + 2 * int(wpk.size)
                      + 4 * int(bias_p.size)
                      + N * H * W * coutp * int(np.dtype(out_dtype).itemsize))

    return pl.pallas_call(
        _make_conv3x3_bn_relu_kernel(n_in, th, W),
        out_shape=jax.ShapeDtypeStruct((N, H, W, coutp), out_dtype),
        grid=(N, n_hblk, coutp // _LANES),
        in_specs=in_specs,
        out_specs=out_spec,
        compiler_params=pltpu.CompilerParams(
            dimension_semantics=("parallel", "parallel", "parallel"),
            vmem_limit_bytes=32 * 1024 * 1024),
        cost_estimate=pl.CostEstimate(flops=int(flops), transcendentals=0,
                                      bytes_accessed=int(bytes_accessed)),
    )(*operands)


# ----------------------------------------------------------------------------
# Bilinear 2x upsample (align_corners=True), NCHW in/out, channel-blocked grid
# ----------------------------------------------------------------------------
def _interp_matrix(n_in, n_out):
    """Dense align_corners=True linear-interpolation matrix (n_out, n_in)."""
    if n_in == 1:
        return jnp.asarray(np.ones((n_out, 1), np.float32))
    src = np.arange(n_out, dtype=np.float64) * (n_in - 1) / (n_out - 1)
    i0 = np.clip(np.floor(src).astype(np.int64), 0, n_in - 1)
    i1 = np.minimum(i0 + 1, n_in - 1)
    f = (src - i0).astype(np.float32)
    m = np.zeros((n_out, n_in), np.float32)
    m[np.arange(n_out), i0] += (1.0 - f)
    m[np.arange(n_out), i1] += f
    return jnp.asarray(m)


def _upsample2x_kernel(x_ref, ah_ref, awt_ref, o_ref):
    """x_ref: (1, cb, H, W); ah: (2H, H); awt: (W, 2W); o: (1, cb, 2H, 2W)."""
    cb, h, w = x_ref.shape[1:]
    h2, w2 = o_ref.shape[2:]
    x = x_ref[0].astype(jnp.float32)                             # (cb, H, W)
    # W-interp: one MXU matmul; W is already the lane dim in NCHW.
    u = jnp.dot(x.reshape(cb * h, w), awt_ref[...],
                preferred_element_type=jnp.float32)              # (cb*H, 2W)
    u = u.reshape(cb, h, w2)
    # H-interp: channel-batched matmul; only the small (cb, 2H, H) interp matrix
    # is broadcast (no (2H, 2W, W)-sized tensor as before).
    ahb = jnp.broadcast_to(ah_ref[...][None], (cb, h2, h))
    o = jnp.einsum('cih,chj->cij', ahb, u,
                   preferred_element_type=jnp.float32)           # (cb, 2H, 2W)
    o_ref[...] = o[None].astype(o_ref.dtype)


def upsample_bilinear_x2_nchw(x, *, max_cb=32):
    """nn.UpsamplingBilinear2d(scale_factor=2) (align_corners=True). NCHW in/out."""
    N, C, H, W = x.shape
    ah = _interp_matrix(H, 2 * H)             # (2H, H) compile-time constant
    awt = _interp_matrix(W, 2 * W).T          # (W, 2W)
    cb = 1
    for cand in range(1, min(C, max_cb) + 1):  # largest channel-block divisor
        if C % cand == 0:
            cb = cand

    flops = 2 * N * C * (H * 2 * W * W + 2 * H * 2 * W * H)
    bytes_accessed = 4 * (int(x.size) + int(ah.size) + int(awt.size)
                          + N * C * 2 * H * 2 * W)

    return pl.pallas_call(
        _upsample2x_kernel,
        out_shape=jax.ShapeDtypeStruct((N, C, 2 * H, 2 * W), x.dtype),
        grid=(N, C // cb),
        in_specs=[pl.BlockSpec((1, cb, H, W), lambda n, c: (n, c, 0, 0)),
                  pl.BlockSpec((2 * H, H), lambda n, c: (0, 0)),
                  pl.BlockSpec((W, 2 * W), lambda n, c: (0, 0))],
        out_specs=pl.BlockSpec((1, cb, 2 * H, 2 * W), lambda n, c: (n, c, 0, 0)),
        compiler_params=pltpu.CompilerParams(
            dimension_semantics=("parallel", "parallel"),
            vmem_limit_bytes=32 * 1024 * 1024),
        cost_estimate=pl.CostEstimate(flops=int(flops), transcendentals=0,
                                      bytes_accessed=int(bytes_accessed)),
    )(x, ah, awt)


# ----------------------------------------------------------------------------
# upSample(bilinear=True) forward: upsample -> pad -> (fused concat + conv) x2
# ----------------------------------------------------------------------------
def upsample_block_forward(x1_nchw, x2_nchw, params):
    """upSample(in_channels, out_channels, bilinear=True).forward(x1, x2).
    NCHW in/out (PyTorch layout); convs run internally in NHWC."""
    x1u = jnp.transpose(upsample_bilinear_x2_nchw(x1_nchw), (0, 2, 3, 1))  # NHWC
    x2 = jnp.transpose(x2_nchw, (0, 2, 3, 1))                              # NHWC

    # Preserve the PyTorch quirk: diffX (from size(2)/H) pads W and diffY (from
    # size(3)/W) pads H, because F.pad pads the last dim first.
    d_x = x2.shape[1] - x1u.shape[1]
    d_y = x2.shape[2] - x1u.shape[2]
    x1u = jnp.pad(x1u, ((0, 0),
                        (d_y // 2, d_y - d_y // 2),
                        (d_x // 2, d_x - d_x // 2),
                        (0, 0)))

    c1 = x1u.shape[-1]
    w1 = params["w1"]                                    # (3, 3, C1 + C2, inter)
    # Conv 1: skip-concat fused into the kernel (x1u channels first, then x2),
    # intermediate kept bf16 in HBM.
    h = conv3x3_bn_relu([x1u, x2],
                        [w1[:, :, :c1, :], w1[:, :, c1:, :]],
                        params["s1"], params["b1"],
                        out_dtype=jnp.bfloat16)

    # h is (N, H, W, 128k); channels >= inter are exactly zero.  Keep it padded
    # (lane-dense loads) and zero-pad conv2's Cin to match.
    w2 = params["w2"]                                    # (3, 3, inter, out)
    inter, out_c = w2.shape[2], w2.shape[3]
    w2p = jnp.pad(w2, ((0, 0), (0, 0), (0, h.shape[-1] - inter), (0, 0)))
    y = conv3x3_bn_relu([h], [w2p], params["s2"], params["b2"],
                        out_dtype=jnp.float32)

    y = y[..., :out_c]                                   # drop Cout lane padding
    return jnp.transpose(y, (0, 3, 1, 2))                # NHWC -> NCHW


# ----------------------------------------------------------------------------
# Deterministic synthetic parameters (BN eval-mode folded) + pure-JAX reference
# ----------------------------------------------------------------------------
def init_params(key, in_channels, out_channels):
    inter = in_channels // 2
    eps = 1e-5
    k1, k2, k3, k4 = jax.random.split(key, 4)
    w1 = jax.random.normal(k1, (3, 3, in_channels, inter), jnp.float32) / math.sqrt(9.0 * in_channels)
    b1 = 0.01 * jax.random.normal(k2, (inter,), jnp.float32)
    w2 = jax.random.normal(k3, (3, 3, inter, out_channels), jnp.float32) / math.sqrt(9.0 * inter)
    b2 = 0.01 * jax.random.normal(k4, (out_channels,), jnp.float32)
    # BN eval fold with default running stats: scale = 1/sqrt(var+eps), shift = 0.
    s1 = jnp.full((inter,), 1.0 / math.sqrt(1.0 + eps), jnp.float32)
    s2 = jnp.full((out_channels,), 1.0 / math.sqrt(1.0 + eps), jnp.float32)
    return dict(w1=w1, s1=s1, b1=b1 * s1, w2=w2, s2=s2, b2=b2 * s2)


def reference_forward(x1_nchw, x2_nchw, params):
    """Pure-JAX (non-Pallas) f32 reference for numerical validation."""
    x1 = jnp.transpose(x1_nchw, (0, 2, 3, 1))
    x2 = jnp.transpose(x2_nchw, (0, 2, 3, 1))
    _, H, W, _ = x1.shape
    ah = _interp_matrix(H, 2 * H)
    aw = _interp_matrix(W, 2 * W)
    up = jnp.einsum('ih,nhwc->niwc', ah, x1)
    up = jnp.einsum('jw,niwc->nijc', aw, up)
    d_x = x2.shape[1] - up.shape[1]
    d_y = x2.shape[2] - up.shape[2]
    up = jnp.pad(up, ((0, 0), (d_y // 2, d_y - d_y // 2),
                      (d_x // 2, d_x - d_x // 2), (0, 0)))
    cat = jnp.concatenate([up, x2], axis=-1)

    def conv_bn_relu(x, w, s, b):
        y = jax.lax.conv_general_dilated(
            x, w, window_strides=(1, 1), padding="SAME",
            dimension_numbers=("NHWC", "HWIO", "NHWC"))
        return jnp.maximum(y * s + b, 0.0)

    h = conv_bn_relu(cat, params["w1"], params["s1"], params["b1"])
    y = conv_bn_relu(h, params["w2"], params["s2"], params["b2"])
    return jnp.transpose(y, (0, 3, 1, 2))


# ----------------------------------------------------------------------------
# Main
# ----------------------------------------------------------------------------
if __name__ == "__main__":
    key = jax.random.PRNGKey(0)
    kx1, kx2, kp = jax.random.split(key, 3)

    in_channels, out_channels = 32, 16        # twoConvs(in, out, in // 2)
    n, h, w = 2, 8, 8                         # x1 spatial; x2 is 2x
    c1 = in_channels // 2
    c2 = in_channels - c1

    x1 = jax.random.normal(kx1, (n, c1, h, w), jnp.float32)            # NCHW
    x2 = jax.random.normal(kx2, (n, c2, 2 * h, 2 * w), jnp.float32)    # NCHW
    params = init_params(kp, in_channels, out_channels)

    fwd = jax.jit(upsample_block_forward)
    out = jax.block_until_ready(fwd(x1, x2, params))

    assert out.shape == (n, out_channels, 2 * h, 2 * w), out.shape
    assert out.dtype == jnp.float32
    assert bool(jnp.all(jnp.isfinite(out)))

    ref = jax.block_until_ready(jax.jit(reference_forward)(x1, x2, params))
    err = jnp.max(jnp.abs(out - ref))
    # Tolerance accounts for bf16 conv operands (review item); f32 accumulation.
    assert bool(err < 3e-2), f"max |pallas - ref| = {err}"

    print("KERNEL_OK")
</pallas_src>

<mosaic_0001>
module attributes {stable_mosaic.version = 11 : i64} {
  func.func @_upsample2x_kernel(%arg0: i32, %arg1: i32, %arg2: memref<1x16x8x8xf32, #tpu.memory_space<vmem>>, %arg3: memref<16x8xf32, #tpu.memory_space<vmem>>, %arg4: memref<8x16xf32, #tpu.memory_space<vmem>>, %arg5: memref<1x16x16x16xf32, #tpu.memory_space<vmem>>) attributes {dimension_semantics = [#tpu.dimension_semantics<parallel>, #tpu.dimension_semantics<parallel>], iteration_bounds = array<i64: 2, 1>, scalar_prefetch = 0 : i64, scratch_operands = 0 : i64, tpu.core_type = #tpu.core_type<tc>, window_params = [{transform_indices = @transform_0, window_bounds = array<i64: 1, 16, 8, 8>}, {pipeline_mode = #tpu.pipeline_mode<synchronous>, transform_indices = @transform_1, window_bounds = array<i64: 16, 8>}, {pipeline_mode = #tpu.pipeline_mode<synchronous>, transform_indices = @transform_2, window_bounds = array<i64: 8, 16>}, {transform_indices = @transform_3, window_bounds = array<i64: 1, 16, 16, 16>}]} {
    %c0 = arith.constant 0 : index
    %c0_0 = arith.constant 0 : index
    %c0_1 = arith.constant 0 : index
    %c0_2 = arith.constant 0 : index
    %0 = vector.load %arg2[%c0, %c0_0, %c0_1, %c0_2] : memref<1x16x8x8xf32, #tpu.memory_space<vmem>>, vector<1x16x8x8xf32>
    %1 = vector.shape_cast %0 : vector<1x16x8x8xf32> to vector<16x8x8xf32>
    %2 = vector.shape_cast %1 : vector<16x8x8xf32> to vector<128x8xf32>
    %c0_3 = arith.constant 0 : index
    %c0_4 = arith.constant 0 : index
    %3 = vector.load %arg4[%c0_3, %c0_4] : memref<8x16xf32, #tpu.memory_space<vmem>>, vector<8x16xf32>
    %cst = arith.constant dense<0.000000e+00> : vector<128x16xf32>
    %4 = tpu.matmul %2, %3, %cst {dimension_numbers = #tpu.dot_dimension_numbers<[1], [0], [0], [1], [0, 0, 1, 1], [], []>} : vector<128x8xf32>, vector<8x16xf32>, vector<128x16xf32> -> vector<128x16xf32>
    %5 = vector.shape_cast %4 : vector<128x16xf32> to vector<16x8x16xf32>
    %c0_5 = arith.constant 0 : index
    %c0_6 = arith.constant 0 : index
    %6 = vector.load %arg3[%c0_5, %c0_6] : memref<16x8xf32, #tpu.memory_space<vmem>>, vector<16x8xf32>
    %7 = vector.shape_cast %6 : vector<16x8xf32> to vector<1x16x8xf32>
    %8 = vector.shape_cast %7 : vector<1x16x8xf32> to vector<1x16x8xf32>
    %9 = vector.broadcast %8 : vector<1x16x8xf32> to vector<16x16x8xf32>
    "tpu.trace_start"() <{level = 10 : i32, message = "cih,chj->cij"}> : () -> ()
    %cst_7 = arith.constant dense<0.000000e+00> : vector<16x16x16xf32>
    %10 = tpu.matmul %9, %5, %cst_7 {dimension_numbers = #tpu.dot_dimension_numbers<[2], [1], [1], [2], [0, 0, 0, 1, 1, 2], [0], [0]>} : vector<16x16x8xf32>, vector<16x8x16xf32>, vector<16x16x16xf32> -> vector<16x16x16xf32>
    "tpu.trace_stop"() : () -> ()
    %11 = vector.shape_cast %10 : vector<16x16x16xf32> to vector<1x16x16x16xf32>
    %c0_8 = arith.constant 0 : index
    %c0_9 = arith.constant 0 : index
    %c0_10 = arith.constant 0 : index
    %c0_11 = arith.constant 0 : index
    %12 = vector.load %arg5[%c0_8, %c0_9, %c0_10, %c0_11] : memref<1x16x16x16xf32, #tpu.memory_space<vmem>>, vector<1x16x16x16xf32>
    tpu.vector_store %arg5[%c0_8, %c0_9, %c0_10, %c0_11], %11 {strides = array<i32>} : memref<1x16x16x16xf32, #tpu.memory_space<vmem>>, vector<1x16x16x16xf32>,
    return
  }
  func.func @transform_0(%arg0: i32, %arg1: i32) -> (i32, i32, i32, i32) {
    %c0_i32 = arith.constant 0 : i32
    %c0_i32_0 = arith.constant 0 : i32
    %c0_i32_1 = arith.constant 0 : i32
    return %arg0, %arg1, %c0_i32, %c0_i32_0 : i32, i32, i32, i32
  }
  func.func @transform_1(%arg0: i32, %arg1: i32) -> (i32, i32) {
    %c0_i32 = arith.constant 0 : i32
    %c0_i32_0 = arith.constant 0 : i32
    %c0_i32_1 = arith.constant 0 : i32
    return %c0_i32, %c0_i32_0 : i32, i32
  }
  func.func @transform_2(%arg0: i32, %arg1: i32) -> (i32, i32) {
    %c0_i32 = arith.constant 0 : i32
    %c0_i32_0 = arith.constant 0 : i32
    %c0_i32_1 = arith.constant 0 : i32
    return %c0_i32, %c0_i32_0 : i32, i32
  }
  func.func @transform_3(%arg0: i32, %arg1: i32) -> (i32, i32, i32, i32) {
    %c0_i32 = arith.constant 0 : i32
    %c0_i32_0 = arith.constant 0 : i32
    %c0_i32_1 = arith.constant 0 : i32
    return %arg0, %arg1, %c0_i32, %c0_i32_0 : i32, i32, i32, i32
  }
}

module attributes {stable_mosaic.version = 11 : i64} {
  func.func @kernel(%arg0: i32, %arg1: i32, %arg2: i32, %arg3: memref<1x8x18x16xbf16, #tpu.memory_space<vmem>>, %arg4: memref<1x2x18x16xbf16, #tpu.memory_space<vmem>>, %arg5: memref<1x8x18x16xbf16, #tpu.memory_space<vmem>>, %arg6: memref<1x2x18x16xbf16, #tpu.memory_space<vmem>>, %arg7: memref<3x96x128xbf16, #tpu.memory_space<vmem>>, %arg8: memref<1x128xf32, #tpu.memory_space<vmem>>, %arg9: memref<1x8x16x128xbf16, #tpu.memory_space<vmem>>) attributes {dimension_semantics = [#tpu.dimension_semantics<parallel>, #tpu.dimension_semantics<parallel>, #tpu.dimension_semantics<parallel>], iteration_bounds = array<i64: 2, 2, 1>, scalar_prefetch = 0 : i64, scratch_operands = 0 : i64, tpu.core_type = #tpu.core_type<tc>, window_params = [{transform_indices = @transform_0, window_bounds = array<i64: 1, 8, 18, 16>}, {transform_indices = @transform_1, window_bounds = array<i64: 1, 2, 18, 16>}, {transform_indices = @transform_2, window_bounds = array<i64: 1, 8, 18, 16>}, {transform_indices = @transform_3, window_bounds = array<i64: 1, 2, 18, 16>}, {transform_indices = @transform_4, window_bounds = array<i64: 3, 96, 128>}, {transform_indices = @transform_5, window_bounds = array<i64: 1, 128>}, {transform_indices = @transform_6, window_bounds = array<i64: 1, 8, 16, 128>}]} {
    %c0 = arith.constant 0 : index
    %c0_0 = arith.constant 0 : index
    %c0_1 = arith.constant 0 : index
    %c0_2 = arith.constant 0 : index
    %0 = vector.load %arg3[%c0, %c0_0, %c0_1, %c0_2] : memref<1x8x18x16xbf16, #tpu.memory_space<vmem>>, vector<1x8x18x16xbf16>
    %1 = vector.shape_cast %0 : vector<1x8x18x16xbf16> to vector<8x18x16xbf16>
    %c0_3 = arith.constant 0 : index
    %c0_4 = arith.constant 0 : index
    %c0_5 = arith.constant 0 : index
    %c0_6 = arith.constant 0 : index
    %2 = vector.load %arg5[%c0_3, %c0_4, %c0_5, %c0_6] : memref<1x8x18x16xbf16, #tpu.memory_space<vmem>>, vector<1x8x18x16xbf16>
    %3 = vector.shape_cast %2 : vector<1x8x18x16xbf16> to vector<8x18x16xbf16>
    %c0_7 = arith.constant 0 : index
    %c0_8 = arith.constant 0 : index
    %c0_9 = arith.constant 0 : index
    %c0_10 = arith.constant 0 : index
    %4 = vector.load %arg4[%c0_7, %c0_8, %c0_9, %c0_10] : memref<1x2x18x16xbf16, #tpu.memory_space<vmem>>, vector<1x2x18x16xbf16>
    %5 = vector.shape_cast %4 : vector<1x2x18x16xbf16> to vector<2x18x16xbf16>
    %c0_11 = arith.constant 0 : index
    %c0_12 = arith.constant 0 : index
    %c0_13 = arith.constant 0 : index
    %c0_14 = arith.constant 0 : index
    %6 = vector.load %arg6[%c0_11, %c0_12, %c0_13, %c0_14] : memref<1x2x18x16xbf16, #tpu.memory_space<vmem>>, vector<1x2x18x16xbf16>
    %7 = vector.shape_cast %6 : vector<1x2x18x16xbf16> to vector<2x18x16xbf16>
    %cst = arith.constant 0.000000e+00 : f32
    %8 = vector.broadcast %cst : f32 to vector<128x128xf32>
    %9 = vector.extract_strided_slice %1 {offsets = [0, 0, 0], sizes = [8, 16, 16], strides = [1, 1, 1]} : vector<8x18x16xbf16> to vector<8x16x16xbf16>
    %10 = vector.extract_strided_slice %3 {offsets = [0, 0, 0], sizes = [8, 16, 16], strides = [1, 1, 1]} : vector<8x18x16xbf16> to vector<8x16x16xbf16>
    %11 = vector.extract_strided_slice %1 {offsets = [0, 1, 0], sizes = [8, 16, 16], strides = [1, 1, 1]} : vector<8x18x16xbf16> to vector<8x16x16xbf16>
    %12 = vector.extract_strided_slice %3 {offsets = [0, 1, 0], sizes = [8, 16, 16], strides = [1, 1, 1]} : vector<8x18x16xbf16> to vector<8x16x16xbf16>
    %13 = vector.extract_strided_slice %1 {offsets = [0, 2, 0], sizes = [8, 16, 16], strides = [1, 1, 1]} : vector<8x18x16xbf16> to vector<8x16x16xbf16>
    %14 = vector.extract_strided_slice %3 {offsets = [0, 2, 0], sizes = [8, 16, 16], strides = [1, 1, 1]} : vector<8x18x16xbf16> to vector<8x16x16xbf16>
    %15 = tpu.concatenate %9, %10, %11, %12, %13, %14 in 2 : vector<8x16x16xbf16>, vector<8x16x16xbf16>, vector<8x16x16xbf16>, vector<8x16x16xbf16>, vector<8x16x16xbf16>, vector<8x16x16xbf16> -> vector<8x16x96xbf16>
    %16 = vector.shape_cast %15 : vector<8x16x96xbf16> to vector<128x96xbf16>
    %c0_15 = arith.constant 0 : index
    %c0_16 = arith.constant 0 : index
    %c0_17 = arith.constant 0 : index
    %17 = vector.load %arg7[%c0_15, %c0_16, %c0_17] : memref<3x96x128xbf16, #tpu.memory_space<vmem>>, vector<1x96x128xbf16>
    %18 = vector.shape_cast %17 : vector<1x96x128xbf16> to vector<96x128xbf16>
    %cst_18 = arith.constant dense<0.000000e+00> : vector<128x128xf32>
    %19 = tpu.matmul %16, %18, %cst_18 {dimension_numbers = #tpu.dot_dimension_numbers<[1], [0], [0], [1], [0, 0, 1, 1], [], []>} : vector<128x96xbf16>, vector<96x128xbf16>, vector<128x128xf32> -> vector<128x128xf32>
    %20 = arith.addf %8, %19 : vector<128x128xf32>
    %21 = vector.extract_strided_slice %1 {offsets = [1, 0, 0], sizes = [7, 16, 16], strides = [1, 1, 1]} : vector<8x18x16xbf16> to vector<7x16x16xbf16>
    %22 = vector.extract_strided_slice %5 {offsets = [0, 0, 0], sizes = [1, 16, 16], strides = [1, 1, 1]} : vector<2x18x16xbf16> to vector<1x16x16xbf16>
    %23 = tpu.concatenate %21, %22 in 0 : vector<7x16x16xbf16>, vector<1x16x16xbf16> -> vector<8x16x16xbf16>
    %24 = vector.extract_strided_slice %3 {offsets = [1, 0, 0], sizes = [7, 16, 16], strides = [1, 1, 1]} : vector<8x18x16xbf16> to vector<7x16x16xbf16>
    %25 = vector.extract_strided_slice %7 {offsets = [0, 0, 0], sizes = [1, 16, 16], strides = [1, 1, 1]} : vector<2x18x16xbf16> to vector<1x16x16xbf16>
    %26 = tpu.concatenate %24, %25 in 0 : vector<7x16x16xbf16>, vector<1x16x16xbf16> -> vector<8x16x16xbf16>
    %27 = vector.extract_strided_slice %1 {offsets = [1, 1, 0], sizes = [7, 16, 16], strides = [1, 1, 1]} : vector<8x18x16xbf16> to vector<7x16x16xbf16>
    %28 = vector.extract_strided_slice %5 {offsets = [0, 1, 0], sizes = [1, 16, 16], strides = [1, 1, 1]} : vector<2x18x16xbf16> to vector<1x16x16xbf16>
    %29 = tpu.concatenate %27, %28 in 0 : vector<7x16x16xbf16>, vector<1x16x16xbf16> -> vector<8x16x16xbf16>
    %30 = vector.extract_strided_slice %3 {offsets = [1, 1, 0], sizes = [7, 16, 16], strides = [1, 1, 1]} : vector<8x18x16xbf16> to vector<7x16x16xbf16>
    %31 = vector.extract_strided_slice %7 {offsets = [0, 1, 0], sizes = [1, 16, 16], strides = [1, 1, 1]} : vector<2x18x16xbf16> to vector<1x16x16xbf16>
    %32 = tpu.concatenate %30, %31 in 0 : vector<7x16x16xbf16>, vector<1x16x16xbf16> -> vector<8x16x16xbf16>
    %33 = vector.extract_strided_slice %1 {offsets = [1, 2, 0], sizes = [7, 16, 16], strides = [1, 1, 1]} : vector<8x18x16xbf16> to vector<7x16x16xbf16>
    %34 = vector.extract_strided_slice %5 {offsets = [0, 2, 0], sizes = [1, 16, 16], strides = [1, 1, 1]} : vector<2x18x16xbf16> to vector<1x16x16xbf16>
    %35 = tpu.concatenate %33, %34 in 0 : vector<7x16x16xbf16>, vector<1x16x16xbf16> -> vector<8x16x16xbf16>
    %36 = vector.extract_strided_slice %3 {offsets = [1, 2, 0], sizes = [7, 16, 16], strides = [1, 1, 1]} : vector<8x18x16xbf16> to vector<7x16x16xbf16>
    %37 = vector.extract_strided_slice %7 {offsets = [0, 2, 0], sizes = [1, 16, 16], strides = [1, 1, 1]} : vector<2x18x16xbf16> to vector<1x16x16xbf16>
    %38 = tpu.concatenate %36, %37 in 0 : vector<7x16x16xbf16>, vector<1x16x16xbf16> -> vector<8x16x16xbf16>
    %39 = tpu.concatenate %23, %26, %29, %32, %35, %38 in 2 : vector<8x16x16xbf16>, vector<8x16x16xbf16>, vector<8x16x16xbf16>, vector<8x16x16xbf16>, vector<8x16x16xbf16>, vector<8x16x16xbf16> -> vector<8x16x96xbf16>
    %40 = vector.shape_cast %39 : vector<8x16x96xbf16> to vector<128x96xbf16>
    %c1 = arith.constant 1 : index
    %c0_19 = arith.constant 0 : index
    %c0_20 = arith.constant 0 : index
    %41 = vector.load %arg7[%c1, %c0_19, %c0_20] : memref<3x96x128xbf16, #tpu.memory_space<vmem>>, vector<1x96x128xbf16>
    %42 = vector.shape_cast %41 : vector<1x96x128xbf16> to vector<96x128xbf16>
    %cst_21 = arith.constant dense<0.000000e+00> : vector<128x128xf32>
    %43 = tpu.matmul %40, %42, %cst_21 {dimension_numbers = #tpu.dot_dimension_numbers<[1], [0], [0], [1], [0, 0, 1, 1], [], []>} : vector<128x96xbf16>, vector<96x128xbf16>, vector<128x128xf32> -> vector<128x128xf32>
    %44 = arith.addf %20, %43 : vector<128x128xf32>
    %45 = vector.extract_strided_slice %1 {offsets = [2, 0, 0], sizes = [6, 16, 16], strides = [1, 1, 1]} : vector<8x18x16xbf16> to vector<6x16x16xbf16>
    %46 = vector.extract_strided_slice %5 {offsets = [0, 0, 0], sizes = [2, 16, 16], strides = [1, 1, 1]} : vector<2x18x16xbf16> to vector<2x16x16xbf16>
    %47 = tpu.concatenate %45, %46 in 0 : vector<6x16x16xbf16>, vector<2x16x16xbf16> -> vector<8x16x16xbf16>
    %48 = vector.extract_strided_slice %3 {offsets = [2, 0, 0], sizes = [6, 16, 16], strides = [1, 1, 1]} : vector<8x18x16xbf16> to vector<6x16x16xbf16>
    %49 = vector.extract_strided_slice %7 {offsets = [0, 0, 0], sizes = [2, 16, 16], strides = [1, 1, 1]} : vector<2x18x16xbf16> to vector<2x16x16xbf16>
    %50 = tpu.concatenate %48, %49 in 0 : vector<6x16x16xbf16>, vector<2x16x16xbf16> -> vector<8x16x16xbf16>
    %51 = vector.extract_strided_slice %1 {offsets = [2, 1, 0], sizes = [6, 16, 16], strides = [1, 1, 1]} : vector<8x18x16xbf16> to vector<6x16x16xbf16>
    %52 = vector.extract_strided_slice %5 {offsets = [0, 1, 0], sizes = [2, 16, 16], strides = [1, 1, 1]} : vector<2x18x16xbf16> to vector<2x16x16xbf16>
    %53 = tpu.concatenate %51, %52 in 0 : vector<6x16x16xbf16>, vector<2x16x16xbf16> -> vector<8x16x16xbf16>
    %54 = vector.extract_strided_slice %3 {offsets = [2, 1, 0], sizes = [6, 16, 16], strides = [1, 1, 1]} : vector<8x18x16xbf16> to vector<6x16x16xbf16>
    %55 = vector.extract_strided_slice %7 {offsets = [0, 1, 0], sizes = [2, 16, 16], strides = [1, 1, 1]} : vector<2x18x16xbf16> to vector<2x16x16xbf16>
    %56 = tpu.concatenate %54, %55 in 0 : vector<6x16x16xbf16>, vector<2x16x16xbf16> -> vector<8x16x16xbf16>
    %57 = vector.extract_strided_slice %1 {offsets = [2, 2, 0], sizes = [6, 16, 16], strides = [1, 1, 1]} : vector<8x18x16xbf16> to vector<6x16x16xbf16>
    %58 = vector.extract_strided_slice %5 {offsets = [0, 2, 0], sizes = [2, 16, 16], strides = [1, 1, 1]} : vector<2x18x16xbf16> to vector<2x16x16xbf16>
    %59 = tpu.concatenate %57, %58 in 0 : vector<6x16x16xbf16>, vector<2x16x16xbf16> -> vector<8x16x16xbf16>
    %60 = vector.extract_strided_slice %3 {offsets = [2, 2, 0], sizes = [6, 16, 16], strides = [1, 1, 1]} : vector<8x18x16xbf16> to vector<6x16x16xbf16>
    %61 = vector.extract_strided_slice %7 {offsets = [0, 2, 0], sizes = [2, 16, 16], strides = [1, 1, 1]} : vector<2x18x16xbf16> to vector<2x16x16xbf16>
    %62 = tpu.concatenate %60, %61 in 0 : vector<6x16x16xbf16>, vector<2x16x16xbf16> -> vector<8x16x16xbf16>
    %63 = tpu.concatenate %47, %50, %53, %56, %59, %62 in 2 : vector<8x16x16xbf16>, vector<8x16x16xbf16>, vector<8x16x16xbf16>, vector<8x16x16xbf16>, vector<8x16x16xbf16>, vector<8x16x16xbf16> -> vector<8x16x96xbf16>
    %64 = vector.shape_cast %63 : vector<8x16x96xbf16> to vector<128x96xbf16>
    %c2 = arith.constant 2 : index
    %c0_22 = arith.constant 0 : index
    %c0_23 = arith.constant 0 : index
    %65 = vector.load %arg7[%c2, %c0_22, %c0_23] : memref<3x96x128xbf16, #tpu.memory_space<vmem>>, vector<1x96x128xbf16>
    %66 = vector.shape_cast %65 : vector<1x96x128xbf16> to vector<96x128xbf16>
    %cst_24 = arith.constant dense<0.000000e+00> : vector<128x128xf32>
    %67 = tpu.matmul %64, %66, %cst_24 {dimension_numbers = #tpu.dot_dimension_numbers<[1], [0], [0], [1], [0, 0, 1, 1], [], []>} : vector<128x96xbf16>, vector<96x128xbf16>, vector<128x128xf32> -> vector<128x128xf32>
    %68 = arith.addf %44, %67 : vector<128x128xf32>
    %c0_25 = arith.constant 0 : index
    %c0_26 = arith.constant 0 : index
    %69 = vector.load %arg8[%c0_25, %c0_26] : memref<1x128xf32, #tpu.memory_space<vmem>>, vector<1x128xf32>
    %70 = vector.broadcast %69 : vector<1x128xf32> to vector<128x128xf32>
    %71 = arith.addf %68, %70 : vector<128x128xf32>
    %cst_27 = arith.constant 0.000000e+00 : f32
    %72 = vector.broadcast %cst_27 : f32 to vector<128x128xf32>
    %73 = arith.maximumf %71, %72 : vector<128x128xf32>
    %74 = vector.shape_cast %73 : vector<128x128xf32> to vector<1x8x16x128xf32>
    %75 = arith.truncf %74 : vector<1x8x16x128xf32> to vector<1x8x16x128xbf16>
    %c0_28 = arith.constant 0 : index
    %c0_29 = arith.constant 0 : index
    %c0_30 = arith.constant 0 : index
    %c0_31 = arith.constant 0 : index
    %76 = vector.load %arg9[%c0_28, %c0_29, %c0_30, %c0_31] : memref<1x8x16x128xbf16, #tpu.memory_space<vmem>>, vector<1x8x16x128xbf16>
    tpu.vector_store %arg9[%c0_28, %c0_29, %c0_30, %c0_31], %75 {strides = array<i32>} : memref<1x8x16x128xbf16, #tpu.memory_space<vmem>>, vector<1x8x16x128xbf16>,
    return
  }
  func.func @transform_0(%arg0: i32, %arg1: i32, %arg2: i32) -> (i32, i32, i32, i32) {
    %c0_i32 = arith.constant 0 : i32
    %c0_i32_0 = arith.constant 0 : i32
    %c0_i32_1 = arith.constant 0 : i32
    return %arg0, %arg1, %c0_i32, %c0_i32_0 : i32, i32, i32, i32
  }
  func.func @transform_1(%arg0: i32, %arg1: i32, %arg2: i32) -> (i32, i32, i32, i32) {
    %c1_i32 = arith.constant 1 : i32
    %0 = arith.addi %arg1, %c1_i32 : i32
    %c4_i32 = arith.constant 4 : i32
    %1 = arith.muli %0, %c4_i32 : i32
    %c0_i32 = arith.constant 0 : i32
    %c0_i32_0 = arith.constant 0 : i32
    %c0_i32_1 = arith.constant 0 : i32
    return %arg0, %1, %c0_i32, %c0_i32_0 : i32, i32, i32, i32
  }
  func.func @transform_2(%arg0: i32, %arg1: i32, %arg2: i32) -> (i32, i32, i32, i32) {
    %c0_i32 = arith.constant 0 : i32
    %c0_i32_0 = arith.constant 0 : i32
    %c0_i32_1 = arith.constant 0 : i32
    return %arg0, %arg1, %c0_i32, %c0_i32_0 : i32, i32, i32, i32
  }
  func.func @transform_3(%arg0: i32, %arg1: i32, %arg2: i32) -> (i32, i32, i32, i32) {
    %c1_i32 = arith.constant 1 : i32
    %0 = arith.addi %arg1, %c1_i32 : i32
    %c4_i32 = arith.constant 4 : i32
    %1 = arith.muli %0, %c4_i32 : i32
    %c0_i32 = arith.constant 0 : i32
    %c0_i32_0 = arith.constant 0 : i32
    %c0_i32_1 = arith.constant 0 : i32
    return %arg0, %1, %c0_i32, %c0_i32_0 : i32, i32, i32, i32
  }
  func.func @transform_4(%arg0: i32, %arg1: i32, %arg2: i32) -> (i32, i32, i32) {
    %c0_i32 = arith.constant 0 : i32
    %c0_i32_0 = arith.constant 0 : i32
    %c0_i32_1 = arith.constant 0 : i32
    return %c0_i32, %c0_i32_0, %arg2 : i32, i32, i32
  }
  func.func @transform_5(%arg0: i32, %arg1: i32, %arg2: i32) -> (i32, i32) {
    %c0_i32 = arith.constant 0 : i32
    %c0_i32_0 = arith.constant 0 : i32
    return %c0_i32, %arg2 : i32, i32
  }
  func.func @transform_6(%arg0: i32, %arg1: i32, %arg2: i32) -> (i32, i32, i32, i32) {
    %c0_i32 = arith.constant 0 : i32
    %c0_i32_0 = arith.constant 0 : i32
    return %arg0, %arg1, %c0_i32, %arg2 : i32, i32, i32, i32
  }
}

module attributes {stable_mosaic.version = 11 : i64} {
  func.func @kernel(%arg0: i32, %arg1: i32, %arg2: i32, %arg3: memref<1x8x18x128xbf16, #tpu.memory_space<vmem>>, %arg4: memref<1x2x18x128xbf16, #tpu.memory_space<vmem>>, %arg5: memref<3x384x128xbf16, #tpu.memory_space<vmem>>, %arg6: memref<1x128xf32, #tpu.memory_space<vmem>>, %arg7: memref<1x8x16x128xf32, #tpu.memory_space<vmem>>) attributes {dimension_semantics = [#tpu.dimension_semantics<parallel>, #tpu.dimension_semantics<parallel>, #tpu.dimension_semantics<parallel>], iteration_bounds = array<i64: 2, 2, 1>, scalar_prefetch = 0 : i64, scratch_operands = 0 : i64, tpu.core_type = #tpu.core_type<tc>, window_params = [{transform_indices = @transform_0, window_bounds = array<i64: 1, 8, 18, 128>}, {transform_indices = @transform_1, window_bounds = array<i64: 1, 2, 18, 128>}, {transform_indices = @transform_2, window_bounds = array<i64: 3, 384, 128>}, {transform_indices = @transform_3, window_bounds = array<i64: 1, 128>}, {transform_indices = @transform_4, window_bounds = array<i64: 1, 8, 16, 128>}]} {
    %c0 = arith.constant 0 : index
    %c0_0 = arith.constant 0 : index
    %c0_1 = arith.constant 0 : index
    %c0_2 = arith.constant 0 : index
    %0 = vector.load %arg3[%c0, %c0_0, %c0_1, %c0_2] : memref<1x8x18x128xbf16, #tpu.memory_space<vmem>>, vector<1x8x18x128xbf16>
    %1 = vector.shape_cast %0 : vector<1x8x18x128xbf16> to vector<8x18x128xbf16>
    %c0_3 = arith.constant 0 : index
    %c0_4 = arith.constant 0 : index
    %c0_5 = arith.constant 0 : index
    %c0_6 = arith.constant 0 : index
    %2 = vector.load %arg4[%c0_3, %c0_4, %c0_5, %c0_6] : memref<1x2x18x128xbf16, #tpu.memory_space<vmem>>, vector<1x2x18x128xbf16>
    %3 = vector.shape_cast %2 : vector<1x2x18x128xbf16> to vector<2x18x128xbf16>
    %cst = arith.constant 0.000000e+00 : f32
    %4 = vector.broadcast %cst : f32 to vector<128x128xf32>
    %5 = vector.extract_strided_slice %1 {offsets = [0, 0, 0], sizes = [8, 16, 128], strides = [1, 1, 1]} : vector<8x18x128xbf16> to vector<8x16x128xbf16>
    %6 = vector.extract_strided_slice %1 {offsets = [0, 1, 0], sizes = [8, 16, 128], strides = [1, 1, 1]} : vector<8x18x128xbf16> to vector<8x16x128xbf16>
    %7 = vector.extract_strided_slice %1 {offsets = [0, 2, 0], sizes = [8, 16, 128], strides = [1, 1, 1]} : vector<8x18x128xbf16> to vector<8x16x128xbf16>
    %8 = tpu.concatenate %5, %6, %7 in 2 : vector<8x16x128xbf16>, vector<8x16x128xbf16>, vector<8x16x128xbf16> -> vector<8x16x384xbf16>
    %9 = vector.shape_cast %8 : vector<8x16x384xbf16> to vector<128x384xbf16>
    %c0_7 = arith.constant 0 : index
    %c0_8 = arith.constant 0 : index
    %c0_9 = arith.constant 0 : index
    %10 = vector.load %arg5[%c0_7, %c0_8, %c0_9] : memref<3x384x128xbf16, #tpu.memory_space<vmem>>, vector<1x384x128xbf16>
    %11 = vector.shape_cast %10 : vector<1x384x128xbf16> to vector<384x128xbf16>
    %cst_10 = arith.constant dense<0.000000e+00> : vector<128x128xf32>
    %12 = tpu.matmul %9, %11, %cst_10 {dimension_numbers = #tpu.dot_dimension_numbers<[1], [0], [0], [1], [0, 0, 1, 1], [], []>} : vector<128x384xbf16>, vector<384x128xbf16>, vector<128x128xf32> -> vector<128x128xf32>
    %13 = arith.addf %4, %12 : vector<128x128xf32>
    %14 = vector.extract_strided_slice %1 {offsets = [1, 0, 0], sizes = [7, 16, 128], strides = [1, 1, 1]} : vector<8x18x128xbf16> to vector<7x16x128xbf16>
    %15 = vector.extract_strided_slice %3 {offsets = [0, 0, 0], sizes = [1, 16, 128], strides = [1, 1, 1]} : vector<2x18x128xbf16> to vector<1x16x128xbf16>
    %16 = tpu.concatenate %14, %15 in 0 : vector<7x16x128xbf16>, vector<1x16x128xbf16> -> vector<8x16x128xbf16>
    %17 = vector.extract_strided_slice %1 {offsets = [1, 1, 0], sizes = [7, 16, 128], strides = [1, 1, 1]} : vector<8x18x128xbf16> to vector<7x16x128xbf16>
    %18 = vector.extract_strided_slice %3 {offsets = [0, 1, 0], sizes = [1, 16, 128], strides = [1, 1, 1]} : vector<2x18x128xbf16> to vector<1x16x128xbf16>
    %19 = tpu.concatenate %17, %18 in 0 : vector<7x16x128xbf16>, vector<1x16x128xbf16> -> vector<8x16x128xbf16>
    %20 = vector.extract_strided_slice %1 {offsets = [1, 2, 0], sizes = [7, 16, 128], strides = [1, 1, 1]} : vector<8x18x128xbf16> to vector<7x16x128xbf16>
    %21 = vector.extract_strided_slice %3 {offsets = [0, 2, 0], sizes = [1, 16, 128], strides = [1, 1, 1]} : vector<2x18x128xbf16> to vector<1x16x128xbf16>
    %22 = tpu.concatenate %20, %21 in 0 : vector<7x16x128xbf16>, vector<1x16x128xbf16> -> vector<8x16x128xbf16>
    %23 = tpu.concatenate %16, %19, %22 in 2 : vector<8x16x128xbf16>, vector<8x16x128xbf16>, vector<8x16x128xbf16> -> vector<8x16x384xbf16>
    %24 = vector.shape_cast %23 : vector<8x16x384xbf16> to vector<128x384xbf16>
    %c1 = arith.constant 1 : index
    %c0_11 = arith.constant 0 : index
    %c0_12 = arith.constant 0 : index
    %25 = vector.load %arg5[%c1, %c0_11, %c0_12] : memref<3x384x128xbf16, #tpu.memory_space<vmem>>, vector<1x384x128xbf16>
    %26 = vector.shape_cast %25 : vector<1x384x128xbf16> to vector<384x128xbf16>
    %cst_13 = arith.constant dense<0.000000e+00> : vector<128x128xf32>
    %27 = tpu.matmul %24, %26, %cst_13 {dimension_numbers = #tpu.dot_dimension_numbers<[1], [0], [0], [1], [0, 0, 1, 1], [], []>} : vector<128x384xbf16>, vector<384x128xbf16>, vector<128x128xf32> -> vector<128x128xf32>
    %28 = arith.addf %13, %27 : vector<128x128xf32>
    %29 = vector.extract_strided_slice %1 {offsets = [2, 0, 0], sizes = [6, 16, 128], strides = [1, 1, 1]} : vector<8x18x128xbf16> to vector<6x16x128xbf16>
    %30 = vector.extract_strided_slice %3 {offsets = [0, 0, 0], sizes = [2, 16, 128], strides = [1, 1, 1]} : vector<2x18x128xbf16> to vector<2x16x128xbf16>
    %31 = tpu.concatenate %29, %30 in 0 : vector<6x16x128xbf16>, vector<2x16x128xbf16> -> vector<8x16x128xbf16>
    %32 = vector.extract_strided_slice %1 {offsets = [2, 1, 0], sizes = [6, 16, 128], strides = [1, 1, 1]} : vector<8x18x128xbf16> to vector<6x16x128xbf16>
    %33 = vector.extract_strided_slice %3 {offsets = [0, 1, 0], sizes = [2, 16, 128], strides = [1, 1, 1]} : vector<2x18x128xbf16> to vector<2x16x128xbf16>
    %34 = tpu.concatenate %32, %33 in 0 : vector<6x16x128xbf16>, vector<2x16x128xbf16> -> vector<8x16x128xbf16>
    %35 = vector.extract_strided_slice %1 {offsets = [2, 2, 0], sizes = [6, 16, 128], strides = [1, 1, 1]} : vector<8x18x128xbf16> to vector<6x16x128xbf16>
    %36 = vector.extract_strided_slice %3 {offsets = [0, 2, 0], sizes = [2, 16, 128], strides = [1, 1, 1]} : vector<2x18x128xbf16> to vector<2x16x128xbf16>
    %37 = tpu.concatenate %35, %36 in 0 : vector<6x16x128xbf16>, vector<2x16x128xbf16> -> vector<8x16x128xbf16>
    %38 = tpu.concatenate %31, %34, %37 in 2 : vector<8x16x128xbf16>, vector<8x16x128xbf16>, vector<8x16x128xbf16> -> vector<8x16x384xbf16>
    %39 = vector.shape_cast %38 : vector<8x16x384xbf16> to vector<128x384xbf16>
    %c2 = arith.constant 2 : index
    %c0_14 = arith.constant 0 : index
    %c0_15 = arith.constant 0 : index
    %40 = vector.load %arg5[%c2, %c0_14, %c0_15] : memref<3x384x128xbf16, #tpu.memory_space<vmem>>, vector<1x384x128xbf16>
    %41 = vector.shape_cast %40 : vector<1x384x128xbf16> to vector<384x128xbf16>
    %cst_16 = arith.constant dense<0.000000e+00> : vector<128x128xf32>
    %42 = tpu.matmul %39, %41, %cst_16 {dimension_numbers = #tpu.dot_dimension_numbers<[1], [0], [0], [1], [0, 0, 1, 1], [], []>} : vector<128x384xbf16>, vector<384x128xbf16>, vector<128x128xf32> -> vector<128x128xf32>
    %43 = arith.addf %28, %42 : vector<128x128xf32>
    %c0_17 = arith.constant 0 : index
    %c0_18 = arith.constant 0 : index
    %44 = vector.load %arg6[%c0_17, %c0_18] : memref<1x128xf32, #tpu.memory_space<vmem>>, vector<1x128xf32>
    %45 = vector.broadcast %44 : vector<1x128xf32> to vector<128x128xf32>
    %46 = arith.addf %43, %45 : vector<128x128xf32>
    %cst_19 = arith.constant 0.000000e+00 : f32
    %47 = vector.broadcast %cst_19 : f32 to vector<128x128xf32>
    %48 = arith.maximumf %46, %47 : vector<128x128xf32>
    %49 = vector.shape_cast %48 : vector<128x128xf32> to vector<1x8x16x128xf32>
    %c0_20 = arith.constant 0 : index
    %c0_21 = arith.constant 0 : index
    %c0_22 = arith.constant 0 : index
    %c0_23 = arith.constant 0 : index
    %50 = vector.load %arg7[%c0_20, %c0_21, %c0_22, %c0_23] : memref<1x8x16x128xf32, #tpu.memory_space<vmem>>, vector<1x8x16x128xf32>
    tpu.vector_store %arg7[%c0_20, %c0_21, %c0_22, %c0_23], %49 {strides = array<i32>} : memref<1x8x16x128xf32, #tpu.memory_space<vmem>>, vector<1x8x16x128xf32>,
    return
  }
  func.func @transform_0(%arg0: i32, %arg1: i32, %arg2: i32) -> (i32, i32, i32, i32) {
    %c0_i32 = arith.constant 0 : i32
    %c0_i32_0 = arith.constant 0 : i32
    %c0_i32_1 = arith.constant 0 : i32
    return %arg0, %arg1, %c0_i32, %c0_i32_0 : i32, i32, i32, i32
  }
  func.func @transform_1(%arg0: i32, %arg1: i32, %arg2: i32) -> (i32, i32, i32, i32) {
    %c1_i32 = arith.constant 1 : i32
    %0 = arith.addi %arg1, %c1_i32 : i32
    %c4_i32 = arith.constant 4 : i32
    %1 = arith.muli %0, %c4_i32 : i32
    %c0_i32 = arith.constant 0 : i32
    %c0_i32_0 = arith.constant 0 : i32
    %c0_i32_1 = arith.constant 0 : i32
    return %arg0, %1, %c0_i32, %c0_i32_0 : i32, i32, i32, i32
  }
  func.func @transform_2(%arg0: i32, %arg1: i32, %arg2: i32) -> (i32, i32, i32) {
    %c0_i32 = arith.constant 0 : i32
    %c0_i32_0 = arith.constant 0 : i32
    %c0_i32_1 = arith.constant 0 : i32
    return %c0_i32, %c0_i32_0, %arg2 : i32, i32, i32
  }
  func.func @transform_3(%arg0: i32, %arg1: i32, %arg2: i32) -> (i32, i32) {
    %c0_i32 = arith.constant 0 : i32
    %c0_i32_0 = arith.constant 0 : i32
    return %c0_i32, %arg2 : i32, i32
  }
  func.func @transform_4(%arg0: i32, %arg1: i32, %arg2: i32) -> (i32, i32, i32, i32) {
    %c0_i32 = arith.constant 0 : i32
    %c0_i32_0 = arith.constant 0 : i32
    return %arg0, %arg1, %c0_i32, %arg2 : i32, i32, i32, i32
  }
}

</mosaic_0001>

<llo_original>
// kernel: upsample_block_forward.3
$region0: #{upsample_block_forward.3}
  #allocation0 [shape = 'u32[]', space=smem, size = 0x4, offset = 0x4, fixed_abs, tag = 'smem constant byte address 0x4 - core index']
  #allocation1 [shape = 'u32[72,128]{1,0:T(1,128)}', space=vmem, size = 0x9000, scoped, tag = 'internal scratch']
  %s0 = inlined_call_operand.vmem [shape: f32[2,16,8,8], index: 0, kind: input, shape index: {}]
  %s1 = inlined_call_operand.vmem [shape: f32[16,8], index: 1, kind: input, shape index: {}]
  %s2 = inlined_call_operand.vmem [shape: f32[8,16], index: 2, kind: input, shape index: {}]
  %s3 = inlined_call_operand.vmem [shape: f32[2,16,16,16], index: 3, kind: output, shape index: {}]
  %s4 = sld [smem:[#allocation0]]
  $region45: #{upsample_block_forward.3} parent=0
    _
  %s6 = ssub.s32 1, %s4
  %s7 = scalar_select 0, %s6, %s4
  loop: start=0, step=1, limit=4
  $region2: #{upsample_block_forward.3} parent=0 // loop_pre_header
    _
  $region3: #{upsample_block_forward.3} parent=0 // loop_header
    %s9 = sphi 0, %s13
    %p10 = scmp.ge.s32.totalorder %s9, 4
    %s16 = sphi 0, %s28
    %s17 = sphi 0, %s24
    %s18 = sphi 0, %s16
    %s19 = sphi 0, %s17
    %s20 = sphi 0, %s18
    %s21 = sphi 0, %s19
    %s33 = sphi 0, %s35
    %s36 = sphi 0, %s33
    %s37 = sphi 0, %s36
    %s53 = sphi 0, %s37
    %s57 = sphi 0, %s57
    %s59 = sphi 0, %s57
    %s60 = sphi 0, %s59
    %s74 = sphi 0, %s60
    %s78 = sphi 0, %s78
    %s80 = sphi 0, %s78
    %s81 = sphi 0, %s80
    %s95 = sphi 0, %s81
    %s103 = sphi 0, %s105
    %s106 = sphi 0, %s103
    %s107 = sphi 0, %s106
    %s123 = sphi 0, %s107
  $region4: #{upsample_block_forward.3} parent=0 // loop_header_branch
    %12 = sbr.rel (%p10) target = $region8
  $region5: #{upsample_block_forward.3} parent=0 // loop_body
    %s14 = ssub.s32 %s9, 1
    %s15 = ssub.s32 %s9, 2
    %s22 = sadd.s32 1, %s17
    %p23 = scmp.ge.s32.totalorder %s22, 1
    %s24 = scalar_select %p23, 0, %s22
    %s25 = sadd.s32 1, %s16
    %s26 = scalar_select %p23, %s25, %s16
    %p27 = scmp.ge.s32.totalorder %s26, 2
    %s28 = scalar_select %p27, 0, %s26
    %s29 = ssub.s32 %s16, %s28
    %s30 = ssub.s32 %s17, %s24
    %s31 = sor.u32 %s29, %s30
    %p32 = scmp.eq.s32.totalorder %s31, 0
    %s34 = sadd.s32 %s33, 1
    %s35 = scalar_select %p32, %s33, %s34
    %p38 = pneg %p32
    %p39 = scmp.eq.s32.totalorder %s9, 1
    %p40 = por %p38, %p39
    %p41 = scmp.ne.s32.totalorder %s33, %s36
    %p42 = scmp.eq.s32.totalorder %s9, 0
    %p43 = por %p41, %p42
    %p44 = scmp.ne.s32.totalorder %s33, %s36
    %p45 = scmp.eq.s32.totalorder %s14, 1
    %p46 = por %p44, %p45
    %p47 = scmp.ne.s32.totalorder %s36, %s37
    %p48 = scmp.eq.s32.totalorder %s14, 0
    %p49 = por %p47, %p48
    %p50 = scmp.ne.s32.totalorder %s36, %s37
    %p51 = scmp.eq.s32.totalorder %s15, 1
    %p52 = por %p50, %p51
    %p54 = scmp.ne.s32.totalorder %s37, %s53
    %p55 = scmp.eq.s32.totalorder %s15, 0
    %p56 = por %p54, %p55
    %s58 = sadd.s32 %s57, 1
    %p61 = scmp.eq.s32.totalorder %s9, 1
    %p62 = scmp.ne.s32.totalorder %s57, %s59
    %p63 = scmp.eq.s32.totalorder %s9, 0
    %p64 = por %p62, %p63
    %p65 = scmp.ne.s32.totalorder %s57, %s59
    %p66 = scmp.eq.s32.totalorder %s14, 1
    %p67 = por %p65, %p66
    %p68 = scmp.ne.s32.totalorder %s59, %s60
    %p69 = scmp.eq.s32.totalorder %s14, 0
    %p70 = por %p68, %p69
    %p71 = scmp.ne.s32.totalorder %s59, %s60
    %p72 = scmp.eq.s32.totalorder %s15, 1
    %p73 = por %p71, %p72
    %p75 = scmp.ne.s32.totalorder %s60, %s74
    %p76 = scmp.eq.s32.totalorder %s15, 0
    %p77 = por %p75, %p76
    %s79 = sadd.s32 %s78, 1
    %p82 = scmp.eq.s32.totalorder %s9, 1
    %p83 = scmp.ne.s32.totalorder %s78, %s80
    %p84 = scmp.eq.s32.totalorder %s9, 0
    %p85 = por %p83, %p84
    %p86 = scmp.ne.s32.totalorder %s78, %s80
    %p87 = scmp.eq.s32.totalorder %s14, 1
    %p88 = por %p86, %p87
    %p89 = scmp.ne.s32.totalorder %s80, %s81
    %p90 = scmp.eq.s32.totalorder %s14, 0
    %p91 = por %p89, %p90
    %p92 = scmp.ne.s32.totalorder %s80, %s81
    %p93 = scmp.eq.s32.totalorder %s15, 1
    %p94 = por %p92, %p93
    %p96 = scmp.ne.s32.totalorder %s81, %s95
    %p97 = scmp.eq.s32.totalorder %s15, 0
    %p98 = por %p96, %p97
    %s99 = ssub.s32 %s16, %s28
    %s100 = ssub.s32 %s17, %s24
    %s101 = sor.u32 %s99, %s100
    %p102 = scmp.eq.s32.totalorder %s101, 0
    %s104 = sadd.s32 %s103, 1
    %s105 = scalar_select %p102, %s103, %s104
    %p108 = pneg %p102
    %p109 = scmp.eq.s32.totalorder %s9, 1
    %p110 = por %p108, %p109
    %p111 = scmp.ne.s32.totalorder %s103, %s106
    %p112 = scmp.eq.s32.totalorder %s9, 0
    %p113 = por %p111, %p112
    %p114 = scmp.ne.s32.totalorder %s103, %s106
    %p115 = scmp.eq.s32.totalorder %s14, 1
    %p116 = por %p114, %p115
    %p117 = scmp.ne.s32.totalorder %s106, %s107
    %p118 = scmp.eq.s32.totalorder %s14, 0
    %p119 = por %p117, %p118
    %p120 = scmp.ne.s32.totalorder %s106, %s107
    %p121 = scmp.eq.s32.totalorder %s15, 1
    %p122 = por %p120, %p121
    %p124 = scmp.ne.s32.totalorder %s107, %s123
    %p125 = scmp.eq.s32.totalorder %s15, 0
    %p126 = por %p124, %p125
    %p127 = scmp.le.s32.totalorder 1, %s9
    %p128 = scmp.lt.s32.totalorder %s9, 3
    %p129 = pnand %p127, %p128
    %p130 = pneg %p129
    // Predicated region
    $region9: #{upsample_block_forward.3} parent=5 // pred_check
      _
    $region10: #{upsample_block_forward.3} parent=5 // pred_check_branch
      %132 = sbr.rel (%p129) target = $region12
    $region11: #{upsample_block_forward.3} parent=5 // pred_region
      %s133 = ssub.s32 %s9, 1
      // Predicated region
      $region13: #{upsample_block_forward.3} parent=11 // pred_check
        %p134 = pneg %p70
      $region14: #{upsample_block_forward.3} parent=11 // pred_check_branch
        %136 = sbr.rel (%p134) target = $region16
      $region15: #{upsample_block_forward.3} parent=11 // pred_region
        _
      $region16: #{upsample_block_forward.3} parent=11 // pred_fallthru
        _
      // Predicated region
      $region17: #{upsample_block_forward.3} parent=11 // pred_check
        %p137 = pneg %p91
      $region18: #{upsample_block_forward.3} parent=11 // pred_check_branch
        %139 = sbr.rel (%p137) target = $region20
      $region19: #{upsample_block_forward.3} parent=11 // pred_region
        _
      $region20: #{upsample_block_forward.3} parent=11 // pred_fallthru
        _
    $region12: #{upsample_block_forward.3} parent=5 // pred_fallthru
      _
    %p140 = scmp.lt.s32.totalorder %s9, 2
    // Predicated region
    $region21: #{upsample_block_forward.3} parent=5 // pred_check
      %p141 = pneg %p140
    $region22: #{upsample_block_forward.3} parent=5 // pred_check_branch
      %143 = sbr.rel (%p141) target = $region24
    $region23: #{upsample_block_forward.3} parent=5 // pred_region
      // Predicated region
      $region25: #{upsample_block_forward.3} parent=23 // pred_check
        %p144 = pneg %p43
      $region26: #{upsample_block_forward.3} parent=23 // pred_check_branch
        %146 = sbr.rel (%p144) target = $region28
      $region27: #{upsample_block_forward.3} parent=23 // pred_region
        %s147 = smul.u32 16, %s17
        %p148 = scmp.lt.s32.totalorder %s16, 1
        %s149 = scalar_select %p148, %s16, 1
        %p150 = scmp.lt.s32.totalorder %s147, 15
        %s151 = scalar_select %p150, %s147, 15
        %s152 = smul.addr %s149, 16
        %s153 = sadd.s32 %s151, %s152
        %s154 = smul.addr %s153, 8
        %s155 = scalar_lea.vmem %s0, %s154
        %s156 = smul.u32 16, %s17
      $region28: #{upsample_block_forward.3} parent=23 // pred_fallthru
        _
    $region24: #{upsample_block_forward.3} parent=5 // pred_fallthru
      _
    %p157 = scmp.le.s32.totalorder 1, %s9
    %p158 = scmp.lt.s32.totalorder %s9, 3
    %p159 = pnand %p157, %p158
    %p160 = pneg %p159
    // Predicated region
    $region29: #{upsample_block_forward.3} parent=5 // pred_check
      _
    $region30: #{upsample_block_forward.3} parent=5 // pred_check_branch
      %162 = sbr.rel (%p159) target = $region32
    $region31: #{upsample_block_forward.3} parent=5 // pred_region
      %s163 = ssub.s32 %s9, 1
      %s164 = smul.u32 16, %s19
      %p165 = scmp.lt.s32.totalorder %s18, 1
      %s166 = scalar_select %p165, %s18, 1
      %p167 = scmp.lt.s32.totalorder %s164, 15
      %s168 = scalar_select %p167, %s164, 15
      %s169 = smul.addr %s166, 16
      %s170 = sadd.s32 %s168, %s169
      %s171 = smul.addr %s170, 8
      %s172 = scalar_lea.vmem %s0, %s171
      %p173 = pneg %p49
      %p174 = pneg %p46
      %p175 = pneg %p70
      %p176 = pneg %p67
      %p177 = pneg %p91
      %p178 = pneg %p88
      %p179 = pneg %p119
      %p180 = pneg %p116
      %s181 = smul.u32 16, %s19
      %p182 = scmp.lt.s32.totalorder %s18, 1
      %s183 = scalar_select %p182, %s18, 1
      %p184 = scmp.lt.s32.totalorder %s181, 15
      %s185 = scalar_select %p184, %s181, 15
      %s186 = smul.addr %s185, 2
      %s187 = smul.addr %s183, 32
      %s188 = sadd.s32 %s186, %s187
      %s189 = smul.addr %s188, 8
      %s190 = scalar_lea.vmem %s3, %s189
      %s191 = smul.u32 16, %s19
      %p192 = scmp.lt.s32.totalorder %s18, 1
      %s193 = scalar_select %p192, %s18, 1
      %p194 = scmp.lt.s32.totalorder %s191, 15
      %s195 = scalar_select %p194, %s191, 15
      %s196 = smul.addr %s193, 16
      %s197 = sadd.s32 %s195, %s196
      %s198 = smul.addr %s197, 8
      %s199 = scalar_lea.vmem %s0, %s198
      %s200 = smul.u32 16, %s19
      %s201 = smul.u32 16, %s19
      %p202 = scmp.lt.s32.totalorder %s18, 1
      %s203 = scalar_select %p202, %s18, 1
      %p204 = scmp.lt.s32.totalorder %s201, 15
      %s205 = scalar_select %p204, %s201, 15
      %s206 = smul.addr %s205, 2
      %s207 = smul.addr %s203, 32
      %s208 = sadd.s32 %s206, %s207
      %s209 = smul.addr %s208, 8
      %s210 = scalar_lea.vmem %s3, %s209
      %s211 = smul.u32 16, %s19
      %v212 = vld [vmem:[%s199] sm:$0xff]
      %v213 = vld [vmem:[%s199 + $0x8] sm:$0xff]
      %v214 = vld [vmem:[%s199 + $0x10] sm:$0xff]
      %v215 = vld [vmem:[%s199 + $0x18] sm:$0xff]
      %v216 = vld [vmem:[%s199 + $0x20] sm:$0xff]
      %v217 = vld [vmem:[%s199 + $0x28] sm:$0xff]
      %v218 = vld [vmem:[%s199 + $0x30] sm:$0xff]
      %v219 = vld [vmem:[%s199 + $0x38] sm:$0xff]
      %v220 = vld [vmem:[%s199 + $0x40] sm:$0xff]
      %v221 = vld [vmem:[%s199 + $0x48] sm:$0xff]
      %v222 = vld [vmem:[%s199 + $0x50] sm:$0xff]
      %v223 = vld [vmem:[%s199 + $0x58] sm:$0xff]
      %v224 = vld [vmem:[%s199 + $0x60] sm:$0xff]
      %v225 = vld [vmem:[%s199 + $0x68] sm:$0xff]
      %v226 = vld [vmem:[%s199 + $0x70] sm:$0xff]
      %v227 = vld [vmem:[%s199 + $0x78] sm:$0xff]
      %v228 = vld [vmem:[%s2] sm:$0xff]
      %vm229 = vcmask 64512
      %v231 = vsel %vm229, %v212, 0
      %v234 = vsel %vm229, %v213, 0
      %v237 = vsel %vm229, %v214, 0
      %v240 = vsel %vm229, %v215, 0
      %v243 = vsel %vm229, %v216, 0
      %v246 = vsel %vm229, %v217, 0
      %v249 = vsel %vm229, %v218, 0
      %v252 = vsel %vm229, %v219, 0
      %v255 = vsel %vm229, %v220, 0
      %v258 = vsel %vm229, %v221, 0
      %v261 = vsel %vm229, %v222, 0
      %v264 = vsel %vm229, %v223, 0
      %v267 = vsel %vm229, %v224, 0
      %v270 = vsel %vm229, %v225, 0
      %v273 = vsel %vm229, %v226, 0
      %v276 = vsel %vm229, %v227, 0
      %278 = vmatpush.msra.mxu0 0.0
      %279 = vmatpush.msra.mxu0 0.0
      %280 = vmatpush.msra.mxu0 0.0
      %281 = vmatpush.msra.mxu0 0.0
      %282 = vmatpush.msra.mxu0 0.0
      %283 = vmatpush.msra.mxu0 0.0
      %284 = vmatpush.msra.mxu0 0.0
      %285 = vmatpush.msra.mxu0 0.0
      %286 = vmatpush.msra.mxu0 0.0
      %287 = vmatpush.msra.mxu0 0.0
      %288 = vmatpush.msra.mxu0 0.0
      %289 = vmatpush.msra.mxu0 0.0
      %290 = vmatpush.msra.mxu0 0.0
      %291 = vmatpush.msra.mxu0 0.0
      %292 = vmatpush.msra.mxu0 0.0
      %293 = vmatpush.msra.mxu0 %v228
      %294 = vmatmul.f32.gmra.mxu0 %v231
      %v295 = vpop.f32.mrf.mxu0
      %v296 = vadd.f32 0.0, %v295
      %297 = vmatmul.f32.gmra.mxu0 %v234
      %v298 = vpop.f32.mrf.mxu0
      %v299 = vadd.f32 0.0, %v298
      %300 = vmatmul.f32.gmra.mxu0 %v237
      %v301 = vpop.f32.mrf.mxu0
      %v302 = vadd.f32 0.0, %v301
      %303 = vmatmul.f32.gmra.mxu0 %v240
      %v304 = vpop.f32.mrf.mxu0
      %v305 = vadd.f32 0.0, %v304
      %306 = vmatmul.f32.gmra.mxu0 %v243
      %v307 = vpop.f32.mrf.mxu0
      %v308 = vadd.f32 0.0, %v307
      %309 = vmatmul.f32.gmra.mxu0 %v246
      %v310 = vpop.f32.mrf.mxu0
      %v311 = vadd.f32 0.0, %v310
      %312 = vmatmul.f32.gmra.mxu0 %v249
      %v313 = vpop.f32.mrf.mxu0
      %v314 = vadd.f32 0.0, %v313
      %315 = vmatmul.f32.gmra.mxu0 %v252
      %v316 = vpop.f32.mrf.mxu0
      %v317 = vadd.f32 0.0, %v316
      %318 = vmatmul.f32.gmra.mxu0 %v255
      %v319 = vpop.f32.mrf.mxu0
      %v320 = vadd.f32 0.0, %v319
      %321 = vmatmul.f32.gmra.mxu0 %v258
      %v322 = vpop.f32.mrf.mxu0
      %v323 = vadd.f32 0.0, %v322
      %324 = vmatmul.f32.gmra.mxu0 %v261
      %v325 = vpop.f32.mrf.mxu0
      %v326 = vadd.f32 0.0, %v325
      %327 = vmatmul.f32.gmra.mxu0 %v264
      %v328 = vpop.f32.mrf.mxu0
      %v329 = vadd.f32 0.0, %v328
      %330 = vmatmul.f32.gmra.mxu0 %v267
      %v331 = vpop.f32.mrf.mxu0
      %v332 = vadd.f32 0.0, %v331
      %333 = vmatmul.f32.gmra.mxu0 %v270
      %v334 = vpop.f32.mrf.mxu0
      %v335 = vadd.f32 0.0, %v334
      %336 = vmatmul.f32.gmra.mxu0 %v273
      %v337 = vpop.f32.mrf.mxu0
      %v338 = vadd.f32 0.0, %v337
      %339 = vmatmul.f32.gmra.mxu0 %v276
      %v340 = vpop.f32.mrf.mxu0
      %v341 = vadd.f32 0.0, %v340
      %342 = vdwg.mxu0
      %v343 = vld [vmem:[%s1] sm:$0xff]
      %v344 = vld [vmem:[%s1 + $0x8] sm:$0xff]
      %v346 = vsel %vm229, %v343, 0
      %v349 = vsel %vm229, %v344, 0
      %351 = vmatpush.msra.mxu0 0.0
      %352 = vmatpush.msra.mxu0 0.0
      %353 = vmatpush.msra.mxu0 0.0
      %354 = vmatpush.msra.mxu0 0.0
      %355 = vmatpush.msra.mxu0 0.0
      %356 = vmatpush.msra.mxu0 0.0
      %357 = vmatpush.msra.mxu0 0.0
      %358 = vmatpush.msra.mxu0 0.0
      %359 = vmatpush.msra.mxu0 0.0
      %360 = vmatpush.msra.mxu0 0.0
      %361 = vmatpush.msra.mxu0 0.0
      %362 = vmatpush.msra.mxu0 0.0
      %363 = vmatpush.msra.mxu0 0.0
      %364 = vmatpush.msra.mxu0 0.0
      %365 = vmatpush.msra.mxu0 0.0
      %366 = vmatpush.msra.mxu0 %v296
      %367 = vmatmul.f32.gmra.mxu0 %v346
      %v368 = vpop.f32.mrf.mxu0
      %v369 = vadd.f32 0.0, %v368
      %370 = vmatmul.f32.gmra.mxu0 %v349
      %v371 = vpop.f32.mrf.mxu0
      %v372 = vadd.f32 0.0, %v371
      %373 = vdwg.mxu0
      %374 = vmatpush.msra.mxu0 0.0
      %375 = vmatpush.msra.mxu0 0.0
      %376 = vmatpush.msra.mxu0 0.0
      %377 = vmatpush.msra.mxu0 0.0
      %378 = vmatpush.msra.mxu0 0.0
      %379 = vmatpush.msra.mxu0 0.0
      %380 = vmatpush.msra.mxu0 0.0
      %381 = vmatpush.msra.mxu0 0.0
      %382 = vmatpush.msra.mxu0 0.0
      %383 = vmatpush.msra.mxu0 0.0
      %384 = vmatpush.msra.mxu0 0.0
      %385 = vmatpush.msra.mxu0 0.0
      %386 = vmatpush.msra.mxu0 0.0
      %387 = vmatpush.msra.mxu0 0.0
      %388 = vmatpush.msra.mxu0 0.0
      %389 = vmatpush.msra.mxu0 %v299
      %390 = vmatmul.f32.gmra.mxu0 %v346
      %v391 = vpop.f32.mrf.mxu0
      %v392 = vadd.f32 0.0, %v391
      %393 = vmatmul.f32.gmra.mxu0 %v349
      %v394 = vpop.f32.mrf.mxu0
      %v395 = vadd.f32 0.0, %v394
      %396 = vdwg.mxu0
      %397 = vmatpush.msra.mxu0 0.0
      %398 = vmatpush.msra.mxu0 0.0
      %399 = vmatpush.msra.mxu0 0.0
      %400 = vmatpush.msra.mxu0 0.0
      %401 = vmatpush.msra.mxu0 0.0
      %402 = vmatpush.msra.mxu0 0.0
      %403 = vmatpush.msra.mxu0 0.0
      %404 = vmatpush.msra.mxu0 0.0
      %405 = vmatpush.msra.mxu0 0.0
      %406 = vmatpush.msra.mxu0 0.0
      %407 = vmatpush.msra.mxu0 0.0
      %408 = vmatpush.msra.mxu0 0.0
      %409 = vmatpush.msra.mxu0 0.0
      %410 = vmatpush.msra.mxu0 0.0
      %411 = vmatpush.msra.mxu0 0.0
      %412 = vmatpush.msra.mxu0 %v302
      %413 = vmatmul.f32.gmra.mxu0 %v346
      %v414 = vpop.f32.mrf.mxu0
      %v415 = vadd.f32 0.0, %v414
      %416 = vmatmul.f32.gmra.mxu0 %v349
      %v417 = vpop.f32.mrf.mxu0
      %v418 = vadd.f32 0.0, %v417
      %419 = vdwg.mxu0
      %420 = vmatpush.msra.mxu0 0.0
      %421 = vmatpush.msra.mxu0 0.0
      %422 = vmatpush.msra.mxu0 0.0
      %423 = vmatpush.msra.mxu0 0.0
      %424 = vmatpush.msra.mxu0 0.0
      %425 = vmatpush.msra.mxu0 0.0
      %426 = vmatpush.msra.mxu0 0.0
      %427 = vmatpush.msra.mxu0 0.0
      %428 = vmatpush.msra.mxu0 0.0
      %429 = vmatpush.msra.mxu0 0.0
      %430 = vmatpush.msra.mxu0 0.0
      %431 = vmatpush.msra.mxu0 0.0
      %432 = vmatpush.msra.mxu0 0.0
      %433 = vmatpush.msra.mxu0 0.0
      %434 = vmatpush.msra.mxu0 0.0
      %435 = vmatpush.msra.mxu0 %v305
      %436 = vmatmul.f32.gmra.mxu0 %v346
      %v437 = vpop.f32.mrf.mxu0
      %v438 = vadd.f32 0.0, %v437
      %439 = vmatmul.f32.gmra.mxu0 %v349
      %v440 = vpop.f32.mrf.mxu0
      %v441 = vadd.f32 0.0, %v440
      %442 = vdwg.mxu0
      %443 = vmatpush.msra.mxu0 0.0
      %444 = vmatpush.msra.mxu0 0.0
      %445 = vmatpush.msra.mxu0 0.0
      %446 = vmatpush.msra.mxu0 0.0
      %447 = vmatpush.msra.mxu0 0.0
      %448 = vmatpush.msra.mxu0 0.0
      %449 = vmatpush.msra.mxu0 0.0
      %450 = vmatpush.msra.mxu0 0.0
      %451 = vmatpush.msra.mxu0 0.0
      %452 = vmatpush.msra.mxu0 0.0
      %453 = vmatpush.msra.mxu0 0.0
      %454 = vmatpush.msra.mxu0 0.0
      %455 = vmatpush.msra.mxu0 0.0
      %456 = vmatpush.msra.mxu0 0.0
      %457 = vmatpush.msra.mxu0 0.0
      %458 = vmatpush.msra.mxu0 %v308
      %459 = vmatmul.f32.gmra.mxu0 %v346
      %v460 = vpop.f32.mrf.mxu0
      %v461 = vadd.f32 0.0, %v460
      %462 = vmatmul.f32.gmra.mxu0 %v349
      %v463 = vpop.f32.mrf.mxu0
      %v464 = vadd.f32 0.0, %v463
      %465 = vdwg.mxu0
      %466 = vmatpush.msra.mxu0 0.0
      %467 = vmatpush.msra.mxu0 0.0
      %468 = vmatpush.msra.mxu0 0.0
      %469 = vmatpush.msra.mxu0 0.0
      %470 = vmatpush.msra.mxu0 0.0
      %471 = vmatpush.msra.mxu0 0.0
      %472 = vmatpush.msra.mxu0 0.0
      %473 = vmatpush.msra.mxu0 0.0
      %474 = vmatpush.msra.mxu0 0.0
      %475 = vmatpush.msra.mxu0 0.0
      %476 = vmatpush.msra.mxu0 0.0
      %477 = vmatpush.msra.mxu0 0.0
      %478 = vmatpush.msra.mxu0 0.0
      %479 = vmatpush.msra.mxu0 0.0
      %480 = vmatpush.msra.mxu0 0.0
      %481 = vmatpush.msra.mxu0 %v311
      %482 = vmatmul.f32.gmra.mxu0 %v346
      %v483 = vpop.f32.mrf.mxu0
      %v484 = vadd.f32 0.0, %v483
      %485 = vmatmul.f32.gmra.mxu0 %v349
      %v486 = vpop.f32.mrf.mxu0
      %v487 = vadd.f32 0.0, %v486
      %488 = vdwg.mxu0
      %489 = vmatpush.msra.mxu0 0.0
      %490 = vmatpush.msra.mxu0 0.0
      %491 = vmatpush.msra.mxu0 0.0
      %492 = vmatpush.msra.mxu0 0.0
      %493 = vmatpush.msra.mxu0 0.0
      %494 = vmatpush.msra.mxu0 0.0
      %495 = vmatpush.msra.mxu0 0.0
      %496 = vmatpush.msra.mxu0 0.0
      %497 = vmatpush.msra.mxu0 0.0
      %498 = vmatpush.msra.mxu0 0.0
      %499 = vmatpush.msra.mxu0 0.0
      %500 = vmatpush.msra.mxu0 0.0
      %501 = vmatpush.msra.mxu0 0.0
      %502 = vmatpush.msra.mxu0 0.0
      %503 = vmatpush.msra.mxu0 0.0
      %504 = vmatpush.msra.mxu0 %v314
      %505 = vmatmul.f32.gmra.mxu0 %v346
      %v506 = vpop.f32.mrf.mxu0
      %v507 = vadd.f32 0.0, %v506
      %508 = vmatmul.f32.gmra.mxu0 %v349
      %v509 = vpop.f32.mrf.mxu0
      %v510 = vadd.f32 0.0, %v509
      %511 = vdwg.mxu0
      %512 = vmatpush.msra.mxu0 0.0
      %513 = vmatpush.msra.mxu0 0.0
      %514 = vmatpush.msra.mxu0 0.0
      %515 = vmatpush.msra.mxu0 0.0
      %516 = vmatpush.msra.mxu0 0.0
      %517 = vmatpush.msra.mxu0 0.0
      %518 = vmatpush.msra.mxu0 0.0
      %519 = vmatpush.msra.mxu0 0.0
      %520 = vmatpush.msra.mxu0 0.0
      %521 = vmatpush.msra.mxu0 0.0
      %522 = vmatpush.msra.mxu0 0.0
      %523 = vmatpush.msra.mxu0 0.0
      %524 = vmatpush.msra.mxu0 0.0
      %525 = vmatpush.msra.mxu0 0.0
      %526 = vmatpush.msra.mxu0 0.0
      %527 = vmatpush.msra.mxu0 %v317
      %528 = vmatmul.f32.gmra.mxu0 %v346
      %v529 = vpop.f32.mrf.mxu0
      %v530 = vadd.f32 0.0, %v529
      %531 = vmatmul.f32.gmra.mxu0 %v349
      %v532 = vpop.f32.mrf.mxu0
      %v533 = vadd.f32 0.0, %v532
      %534 = vdwg.mxu0
      %535 = vmatpush.msra.mxu0 0.0
      %536 = vmatpush.msra.mxu0 0.0
      %537 = vmatpush.msra.mxu0 0.0
      %538 = vmatpush.msra.mxu0 0.0
      %539 = vmatpush.msra.mxu0 0.0
      %540 = vmatpush.msra.mxu0 0.0
      %541 = vmatpush.msra.mxu0 0.0
      %542 = vmatpush.msra.mxu0 0.0
      %543 = vmatpush.msra.mxu0 0.0
      %544 = vmatpush.msra.mxu0 0.0
      %545 = vmatpush.msra.mxu0 0.0
      %546 = vmatpush.msra.mxu0 0.0
      %547 = vmatpush.msra.mxu0 0.0
      %548 = vmatpush.msra.mxu0 0.0
      %549 = vmatpush.msra.mxu0 0.0
      %550 = vmatpush.msra.mxu0 %v320
      %551 = vmatmul.f32.gmra.mxu0 %v346
      %v552 = vpop.f32.mrf.mxu0
      %v553 = vadd.f32 0.0, %v552
      %554 = vmatmul.f32.gmra.mxu0 %v349
      %v555 = vpop.f32.mrf.mxu0
      %v556 = vadd.f32 0.0, %v555
      %557 = vdwg.mxu0
      %558 = vmatpush.msra.mxu0 0.0
      %559 = vmatpush.msra.mxu0 0.0
      %560 = vmatpush.msra.mxu0 0.0
      %561 = vmatpush.msra.mxu0 0.0
      %562 = vmatpush.msra.mxu0 0.0
      %563 = vmatpush.msra.mxu0 0.0
      %564 = vmatpush.msra.mxu0 0.0
      %565 = vmatpush.msra.mxu0 0.0
      %566 = vmatpush.msra.mxu0 0.0
      %567 = vmatpush.msra.mxu0 0.0
      %568 = vmatpush.msra.mxu0 0.0
      %569 = vmatpush.msra.mxu0 0.0
      %570 = vmatpush.msra.mxu0 0.0
      %571 = vmatpush.msra.mxu0 0.0
      %572 = vmatpush.msra.mxu0 0.0
      %573 = vmatpush.msra.mxu0 %v323
      %574 = vmatmul.f32.gmra.mxu0 %v346
      %v575 = vpop.f32.mrf.mxu0
      %v576 = vadd.f32 0.0, %v575
      %577 = vmatmul.f32.gmra.mxu0 %v349
      %v578 = vpop.f32.mrf.mxu0
      %v579 = vadd.f32 0.0, %v578
      %580 = vdwg.mxu0
      %581 = vmatpush.msra.mxu0 0.0
      %582 = vmatpush.msra.mxu0 0.0
      %583 = vmatpush.msra.mxu0 0.0
      %584 = vmatpush.msra.mxu0 0.0
      %585 = vmatpush.msra.mxu0 0.0
      %586 = vmatpush.msra.mxu0 0.0
      %587 = vmatpush.msra.mxu0 0.0
      %588 = vmatpush.msra.mxu0 0.0
      %589 = vmatpush.msra.mxu0 0.0
      %590 = vmatpush.msra.mxu0 0.0
      %591 = vmatpush.msra.mxu0 0.0
      %592 = vmatpush.msra.mxu0 0.0
      %593 = vmatpush.msra.mxu0 0.0
      %594 = vmatpush.msra.mxu0 0.0
      %595 = vmatpush.msra.mxu0 0.0
      %596 = vmatpush.msra.mxu0 %v326
      %597 = vmatmul.f32.gmra.mxu0 %v346
      %v598 = vpop.f32.mrf.mxu0
      %v599 = vadd.f32 0.0, %v598
      %600 = vmatmul.f32.gmra.mxu0 %v349
      %v601 = vpop.f32.mrf.mxu0
      %v602 = vadd.f32 0.0, %v601
      %603 = vdwg.mxu0
      %604 = vmatpush.msra.mxu0 0.0
      %605 = vmatpush.msra.mxu0 0.0
      %606 = vmatpush.msra.mxu0 0.0
      %607 = vmatpush.msra.mxu0 0.0
      %608 = vmatpush.msra.mxu0 0.0
      %609 = vmatpush.msra.mxu0 0.0
      %610 = vmatpush.msra.mxu0 0.0
      %611 = vmatpush.msra.mxu0 0.0
      %612 = vmatpush.msra.mxu0 0.0
      %613 = vmatpush.msra.mxu0 0.0
      %614 = vmatpush.msra.mxu0 0.0
      %615 = vmatpush.msra.mxu0 0.0
      %616 = vmatpush.msra.mxu0 0.0
      %617 = vmatpush.msra.mxu0 0.0
      %618 = vmatpush.msra.mxu0 0.0
      %619 = vmatpush.msra.mxu0 %v329
      %620 = vmatmul.f32.gmra.mxu0 %v346
      %v621 = vpop.f32.mrf.mxu0
      %v622 = vadd.f32 0.0, %v621
      %623 = vmatmul.f32.gmra.mxu0 %v349
      %v624 = vpop.f32.mrf.mxu0
      %v625 = vadd.f32 0.0, %v624
      %626 = vdwg.mxu0
      %627 = vmatpush.msra.mxu0 0.0
      %628 = vmatpush.msra.mxu0 0.0
      %629 = vmatpush.msra.mxu0 0.0
      %630 = vmatpush.msra.mxu0 0.0
      %631 = vmatpush.msra.mxu0 0.0
      %632 = vmatpush.msra.mxu0 0.0
      %633 = vmatpush.msra.mxu0 0.0
      %634 = vmatpush.msra.mxu0 0.0
      %635 = vmatpush.msra.mxu0 0.0
      %636 = vmatpush.msra.mxu0 0.0
      %637 = vmatpush.msra.mxu0 0.0
      %638 = vmatpush.msra.mxu0 0.0
      %639 = vmatpush.msra.mxu0 0.0
      %640 = vmatpush.msra.mxu0 0.0
      %641 = vmatpush.msra.mxu0 0.0
      %642 = vmatpush.msra.mxu0 %v332
      %643 = vmatmul.f32.gmra.mxu0 %v346
      %v644 = vpop.f32.mrf.mxu0
      %v645 = vadd.f32 0.0, %v644
      %646 = vmatmul.f32.gmra.mxu0 %v349
      %v647 = vpop.f32.mrf.mxu0
      %v648 = vadd.f32 0.0, %v647
      %649 = vdwg.mxu0
      %650 = vmatpush.msra.mxu0 0.0
      %651 = vmatpush.msra.mxu0 0.0
      %652 = vmatpush.msra.mxu0 0.0
      %653 = vmatpush.msra.mxu0 0.0
      %654 = vmatpush.msra.mxu0 0.0
      %655 = vmatpush.msra.mxu0 0.0
      %656 = vmatpush.msra.mxu0 0.0
      %657 = vmatpush.msra.mxu0 0.0
      %658 = vmatpush.msra.mxu0 0.0
      %659 = vmatpush.msra.mxu0 0.0
      %660 = vmatpush.msra.mxu0 0.0
      %661 = vmatpush.msra.mxu0 0.0
      %662 = vmatpush.msra.mxu0 0.0
      %663 = vmatpush.msra.mxu0 0.0
      %664 = vmatpush.msra.mxu0 0.0
      %665 = vmatpush.msra.mxu0 %v335
      %666 = vmatmul.f32.gmra.mxu0 %v346
      %v667 = vpop.f32.mrf.mxu0
      %v668 = vadd.f32 0.0, %v667
      %669 = vmatmul.f32.gmra.mxu0 %v349
      %v670 = vpop.f32.mrf.mxu0
      %v671 = vadd.f32 0.0, %v670
      %672 = vdwg.mxu0
      %673 = vmatpush.msra.mxu0 0.0
      %674 = vmatpush.msra.mxu0 0.0
      %675 = vmatpush.msra.mxu0 0.0
      %676 = vmatpush.msra.mxu0 0.0
      %677 = vmatpush.msra.mxu0 0.0
      %678 = vmatpush.msra.mxu0 0.0
      %679 = vmatpush.msra.mxu0 0.0
      %680 = vmatpush.msra.mxu0 0.0
      %681 = vmatpush.msra.mxu0 0.0
      %682 = vmatpush.msra.mxu0 0.0
      %683 = vmatpush.msra.mxu0 0.0
      %684 = vmatpush.msra.mxu0 0.0
      %685 = vmatpush.msra.mxu0 0.0
      %686 = vmatpush.msra.mxu0 0.0
      %687 = vmatpush.msra.mxu0 0.0
      %688 = vmatpush.msra.mxu0 %v338
      %689 = vmatmul.f32.gmra.mxu0 %v346
      %v690 = vpop.f32.mrf.mxu0
      %v691 = vadd.f32 0.0, %v690
      %692 = vmatmul.f32.gmra.mxu0 %v349
      %v693 = vpop.f32.mrf.mxu0
      %v694 = vadd.f32 0.0, %v693
      %695 = vdwg.mxu0
      %696 = vmatpush.msra.mxu0 0.0
      %697 = vmatpush.msra.mxu0 0.0
      %698 = vmatpush.msra.mxu0 0.0
      %699 = vmatpush.msra.mxu0 0.0
      %700 = vmatpush.msra.mxu0 0.0
      %701 = vmatpush.msra.mxu0 0.0
      %702 = vmatpush.msra.mxu0 0.0
      %703 = vmatpush.msra.mxu0 0.0
      %704 = vmatpush.msra.mxu0 0.0
      %705 = vmatpush.msra.mxu0 0.0
      %706 = vmatpush.msra.mxu0 0.0
      %707 = vmatpush.msra.mxu0 0.0
      %708 = vmatpush.msra.mxu0 0.0
      %709 = vmatpush.msra.mxu0 0.0
      %710 = vmatpush.msra.mxu0 0.0
      %711 = vmatpush.msra.mxu0 %v341
      %712 = vmatmul.f32.gmra.mxu0 %v346
      %v713 = vpop.f32.mrf.mxu0
      %v714 = vadd.f32 0.0, %v713
      %715 = vmatmul.f32.gmra.mxu0 %v349
      %v716 = vpop.f32.mrf.mxu0
      %v717 = vadd.f32 0.0, %v716
      %718 = vdwg.mxu0
      %vm719 = vcmask 130048
      %720 = vst.msk [vmem:[%s210] sm:$0xff] %vm719, %v369
      %721 = vst.msk [vmem:[%s210 + $0x8] sm:$0xff] %vm719, %v372
      %722 = vst.msk [vmem:[%s210 + $0x10] sm:$0xff] %vm719, %v392
      %723 = vst.msk [vmem:[%s210 + $0x18] sm:$0xff] %vm719, %v395
      %724 = vst.msk [vmem:[%s210 + $0x20] sm:$0xff] %vm719, %v415
      %725 = vst.msk [vmem:[%s210 + $0x28] sm:$0xff] %vm719, %v418
      %726 = vst.msk [vmem:[%s210 + $0x30] sm:$0xff] %vm719, %v438
      %727 = vst.msk [vmem:[%s210 + $0x38] sm:$0xff] %vm719, %v441
      %728 = vst.msk [vmem:[%s210 + $0x40] sm:$0xff] %vm719, %v461
      %729 = vst.msk [vmem:[%s210 + $0x48] sm:$0xff] %vm719, %v464
      %730 = vst.msk [vmem:[%s210 + $0x50] sm:$0xff] %vm719, %v484
      %731 = vst.msk [vmem:[%s210 + $0x58] sm:$0xff] %vm719, %v487
      %732 = vst.msk [vmem:[%s210 + $0x60] sm:$0xff] %vm719, %v507
      %733 = vst.msk [vmem:[%s210 + $0x68] sm:$0xff] %vm719, %v510
      %734 = vst.msk [vmem:[%s210 + $0x70] sm:$0xff] %vm719, %v530
      %735 = vst.msk [vmem:[%s210 + $0x78] sm:$0xff] %vm719, %v533
      %736 = vst.msk [vmem:[%s210 + $0x80] sm:$0xff] %vm719, %v553
      %737 = vst.msk [vmem:[%s210 + $0x88] sm:$0xff] %vm719, %v556
      %738 = vst.msk [vmem:[%s210 + $0x90] sm:$0xff] %vm719, %v576
      %739 = vst.msk [vmem:[%s210 + $0x98] sm:$0xff] %vm719, %v579
      %740 = vst.msk [vmem:[%s210 + $0xa0] sm:$0xff] %vm719, %v599
      %741 = vst.msk [vmem:[%s210 + $0xa8] sm:$0xff] %vm719, %v602
      %742 = vst.msk [vmem:[%s210 + $0xb0] sm:$0xff] %vm719, %v622
      %743 = vst.msk [vmem:[%s210 + $0xb8] sm:$0xff] %vm719, %v625
      %744 = vst.msk [vmem:[%s210 + $0xc0] sm:$0xff] %vm719, %v645
      %745 = vst.msk [vmem:[%s210 + $0xc8] sm:$0xff] %vm719, %v648
      %746 = vst.msk [vmem:[%s210 + $0xd0] sm:$0xff] %vm719, %v668
      %747 = vst.msk [vmem:[%s210 + $0xd8] sm:$0xff] %vm719, %v671
      %748 = vst.msk [vmem:[%s210 + $0xe0] sm:$0xff] %vm719, %v691
      %749 = vst.msk [vmem:[%s210 + $0xe8] sm:$0xff] %vm719, %v694
      %750 = vst.msk [vmem:[%s210 + $0xf0] sm:$0xff] %vm719, %v714
      %751 = vst.msk [vmem:[%s210 + $0xf8] sm:$0xff] %vm719, %v717
      %s752 = smul.u32 16, %s19
      %p753 = scmp.lt.s32.totalorder %s18, 1
      %s754 = scalar_select %p753, %s18, 1
      %p755 = scmp.lt.s32.totalorder %s752, 15
      %s756 = scalar_select %p755, %s752, 15
      %s757 = smul.addr %s756, 2
      %s758 = smul.addr %s754, 32
      %s759 = sadd.s32 %s757, %s758
      %s760 = smul.addr %s759, 8
      %s761 = scalar_lea.vmem %s3, %s760
      // Predicated region
      $region33: #{upsample_block_forward.3} parent=31 // pred_check
        %p762 = pneg %p116
      $region34: #{upsample_block_forward.3} parent=31 // pred_check_branch
        %764 = sbr.rel (%p762) target = $region36
      $region35: #{upsample_block_forward.3} parent=31 // pred_region
        %s765 = smul.u32 16, %s19
      $region36: #{upsample_block_forward.3} parent=31 // pred_fallthru
        _
    $region32: #{upsample_block_forward.3} parent=5 // pred_fallthru
      _
    %p766 = scmp.le.s32.totalorder 2, %s9
    // Predicated region
    $region37: #{upsample_block_forward.3} parent=5 // pred_check
      %p767 = pneg %p766
    $region38: #{upsample_block_forward.3} parent=5 // pred_check_branch
      %769 = sbr.rel (%p767) target = $region40
    $region39: #{upsample_block_forward.3} parent=5 // pred_region
      %s770 = ssub.s32 %s9, 2
      // Predicated region
      $region41: #{upsample_block_forward.3} parent=39 // pred_check
        %p771 = pneg %p122
      $region42: #{upsample_block_forward.3} parent=39 // pred_check_branch
        %773 = sbr.rel (%p771) target = $region44
      $region43: #{upsample_block_forward.3} parent=39 // pred_region
        %s774 = smul.u32 16, %s21
        %p775 = scmp.lt.s32.totalorder %s20, 1
        %s776 = scalar_select %p775, %s20, 1
        %p777 = scmp.lt.s32.totalorder %s774, 15
        %s778 = scalar_select %p777, %s774, 15
        %s779 = smul.addr %s778, 2
        %s780 = smul.addr %s776, 32
        %s781 = sadd.s32 %s779, %s780
        %s782 = smul.addr %s781, 8
        %s783 = scalar_lea.vmem %s3, %s782
      $region44: #{upsample_block_forward.3} parent=39 // pred_fallthru
        _
    $region40: #{upsample_block_forward.3} parent=5 // pred_fallthru
      _
  $region6: #{upsample_block_forward.3} parent=0 // loop_footer
    %s13 = sadd.s32 1, %s9
  $region7: #{upsample_block_forward.3} parent=0 // loop_footer_branch
    %8 = sbr.rel target = $region3
  $region8: #{upsample_block_forward.3} parent=0 // loop_exit
    _

// kernel: upsample_block_forward.4
$region0: #{upsample_block_forward.4}
  #allocation0 [shape = 'u32[]', space=smem, size = 0x4, offset = 0x4, fixed_abs, tag = 'smem constant byte address 0x4 - core index']
  #allocation1 [shape = 'u32[72,128]{1,0:T(1,128)}', space=vmem, size = 0x9000, scoped, tag = 'internal scratch']
  %s0 = inlined_call_operand.vmem [shape: bf16[2,18,18,16], index: 0, kind: input, shape index: {}, may-alias: {0,1}]
  %s1 = inlined_call_operand.vmem [shape: bf16[2,18,18,16], index: 1, kind: input, shape index: {}, may-alias: {0,1}]
  %s2 = inlined_call_operand.vmem [shape: bf16[2,18,18,16], index: 2, kind: input, shape index: {}, may-alias: {2,3}]
  %s3 = inlined_call_operand.vmem [shape: bf16[2,18,18,16], index: 3, kind: input, shape index: {}, may-alias: {2,3}]
  %s4 = inlined_call_operand.vmem [shape: bf16[3,96,128], index: 4, kind: input, shape index: {}]
  %s5 = inlined_call_operand.vmem [shape: f32[1,128], index: 5, kind: input, shape index: {}]
  %s6 = inlined_call_operand.vmem [shape: bf16[2,16,16,128], index: 6, kind: output, shape index: {}]
  %s7 = sld [smem:[#allocation0]]
  $region57: #{upsample_block_forward.4} parent=0
    _
  %s9 = ssub.s32 1, %s7
  %s10 = scalar_select 0, %s9, %s7
  loop: start=0, step=1, limit=6
  $region2: #{upsample_block_forward.4} parent=0 // loop_pre_header
    _
  $region3: #{upsample_block_forward.4} parent=0 // loop_header
    %s12 = sphi 0, %s16
    %p13 = scmp.ge.s32.totalorder %s12, 6
    %s19 = sphi 0, %s38
    %s20 = sphi 0, %s34
    %s21 = sphi 0, %s30
    %s22 = sphi 0, %s19
    %s23 = sphi 0, %s20
    %s24 = sphi 0, %s21
    %s25 = sphi 0, %s22
    %s26 = sphi 0, %s23
    %s27 = sphi 0, %s24
    %s43 = sphi 0, %s45
    %s46 = sphi 0, %s43
    %s47 = sphi 0, %s46
    %s63 = sphi 0, %s47
    %s75 = sphi 0, %s77
    %s78 = sphi 0, %s75
    %s79 = sphi 0, %s78
    %s95 = sphi 0, %s79
    %s103 = sphi 0, %s105
    %s106 = sphi 0, %s103
    %s107 = sphi 0, %s106
    %s123 = sphi 0, %s107
    %s135 = sphi 0, %s137
    %s138 = sphi 0, %s135
    %s139 = sphi 0, %s138
    %s155 = sphi 0, %s139
    %s161 = sphi 0, %s163
    %s164 = sphi 0, %s161
    %s165 = sphi 0, %s164
    %s181 = sphi 0, %s165
    %s187 = sphi 0, %s189
    %s190 = sphi 0, %s187
    %s191 = sphi 0, %s190
    %s207 = sphi 0, %s191
    %s217 = sphi 0, %s219
    %s220 = sphi 0, %s217
    %s221 = sphi 0, %s220
    %s237 = sphi 0, %s221
  $region4: #{upsample_block_forward.4} parent=0 // loop_header_branch
    %15 = sbr.rel (%p13) target = $region8
  $region5: #{upsample_block_forward.4} parent=0 // loop_body
    %s17 = ssub.s32 %s12, 1
    %s18 = ssub.s32 %s12, 2
    %s28 = sadd.s32 1, %s21
    %p29 = scmp.ge.s32.totalorder %s28, 1
    %s30 = scalar_select %p29, 0, %s28
    %s31 = sadd.s32 1, %s20
    %s32 = scalar_select %p29, %s31, %s20
    %p33 = scmp.ge.s32.totalorder %s32, 2
    %s34 = scalar_select %p33, 0, %s32
    %s35 = sadd.s32 1, %s19
    %s36 = scalar_select %p33, %s35, %s19
    %p37 = scmp.ge.s32.totalorder %s36, 2
    %s38 = scalar_select %p37, 0, %s36
    %s39 = ssub.s32 %s19, %s38
    %s40 = ssub.s32 %s20, %s34
    %s41 = sor.u32 %s39, %s40
    %p42 = scmp.eq.s32.totalorder %s41, 0
    %s44 = sadd.s32 %s43, 1
    %s45 = scalar_select %p42, %s43, %s44
    %p48 = pneg %p42
    %p49 = scmp.eq.s32.totalorder %s12, 3
    %p50 = por %p48, %p49
    %p51 = scmp.ne.s32.totalorder %s43, %s46
    %p52 = scmp.eq.s32.totalorder %s12, 0
    %p53 = por %p51, %p52
    %p54 = scmp.ne.s32.totalorder %s43, %s46
    %p55 = scmp.eq.s32.totalorder %s17, 3
    %p56 = por %p54, %p55
    %p57 = scmp.ne.s32.totalorder %s46, %s47
    %p58 = scmp.eq.s32.totalorder %s17, 0
    %p59 = por %p57, %p58
    %p60 = scmp.ne.s32.totalorder %s46, %s47
    %p61 = scmp.eq.s32.totalorder %s18, 3
    %p62 = por %p60, %p61
    %p64 = scmp.ne.s32.totalorder %s47, %s63
    %p65 = scmp.eq.s32.totalorder %s18, 0
    %p66 = por %p64, %p65
    %s67 = sadd.s32 %s20, 1
    %s68 = smul.u32 %s67, 4
    %s69 = sadd.s32 %s34, 1
    %s70 = smul.u32 %s69, 4
    %s71 = ssub.s32 %s19, %s38
    %s72 = ssub.s32 %s68, %s70
    %s73 = sor.u32 %s71, %s72
    %p74 = scmp.eq.s32.totalorder %s73, 0
    %s76 = sadd.s32 %s75, 1
    %s77 = scalar_select %p74, %s75, %s76
    %p80 = pneg %p74
    %p81 = scmp.eq.s32.totalorder %s12, 3
    %p82 = por %p80, %p81
    %p83 = scmp.ne.s32.totalorder %s75, %s78
    %p84 = scmp.eq.s32.totalorder %s12, 0
    %p85 = por %p83, %p84
    %p86 = scmp.ne.s32.totalorder %s75, %s78
    %p87 = scmp.eq.s32.totalorder %s17, 3
    %p88 = por %p86, %p87
    %p89 = scmp.ne.s32.totalorder %s78, %s79
    %p90 = scmp.eq.s32.totalorder %s17, 0
    %p91 = por %p89, %p90
    %p92 = scmp.ne.s32.totalorder %s78, %s79
    %p93 = scmp.eq.s32.totalorder %s18, 3
    %p94 = por %p92, %p93
    %p96 = scmp.ne.s32.totalorder %s79, %s95
    %p97 = scmp.eq.s32.totalorder %s18, 0
    %p98 = por %p96, %p97
    %s99 = ssub.s32 %s19, %s38
    %s100 = ssub.s32 %s20, %s34
    %s101 = sor.u32 %s99, %s100
    %p102 = scmp.eq.s32.totalorder %s101, 0
    %s104 = sadd.s32 %s103, 1
    %s105 = scalar_select %p102, %s103, %s104
    %p108 = pneg %p102
    %p109 = scmp.eq.s32.totalorder %s12, 3
    %p110 = por %p108, %p109
    %p111 = scmp.ne.s32.totalorder %s103, %s106
    %p112 = scmp.eq.s32.totalorder %s12, 0
    %p113 = por %p111, %p112
    %p114 = scmp.ne.s32.totalorder %s103, %s106
    %p115 = scmp.eq.s32.totalorder %s17, 3
    %p116 = por %p114, %p115
    %p117 = scmp.ne.s32.totalorder %s106, %s107
    %p118 = scmp.eq.s32.totalorder %s17, 0
    %p119 = por %p117, %p118
    %p120 = scmp.ne.s32.totalorder %s106, %s107
    %p121 = scmp.eq.s32.totalorder %s18, 3
    %p122 = por %p120, %p121
    %p124 = scmp.ne.s32.totalorder %s107, %s123
    %p125 = scmp.eq.s32.totalorder %s18, 0
    %p126 = por %p124, %p125
    %s127 = sadd.s32 %s20, 1
    %s128 = smul.u32 %s127, 4
    %s129 = sadd.s32 %s34, 1
    %s130 = smul.u32 %s129, 4
    %s131 = ssub.s32 %s19, %s38
    %s132 = ssub.s32 %s128, %s130
    %s133 = sor.u32 %s131, %s132
    %p134 = scmp.eq.s32.totalorder %s133, 0
    %s136 = sadd.s32 %s135, 1
    %s137 = scalar_select %p134, %s135, %s136
    %p140 = pneg %p134
    %p141 = scmp.eq.s32.totalorder %s12, 3
    %p142 = por %p140, %p141
    %p143 = scmp.ne.s32.totalorder %s135, %s138
    %p144 = scmp.eq.s32.totalorder %s12, 0
    %p145 = por %p143, %p144
    %p146 = scmp.ne.s32.totalorder %s135, %s138
    %p147 = scmp.eq.s32.totalorder %s17, 3
    %p148 = por %p146, %p147
    %p149 = scmp.ne.s32.totalorder %s138, %s139
    %p150 = scmp.eq.s32.totalorder %s17, 0
    %p151 = por %p149, %p150
    %p152 = scmp.ne.s32.totalorder %s138, %s139
    %p153 = scmp.eq.s32.totalorder %s18, 3
    %p154 = por %p152, %p153
    %p156 = scmp.ne.s32.totalorder %s139, %s155
    %p157 = scmp.eq.s32.totalorder %s18, 0
    %p158 = por %p156, %p157
    %s159 = ssub.s32 %s21, %s30
    %p160 = scmp.eq.s32.totalorder %s159, 0
    %s162 = sadd.s32 %s161, 1
    %s163 = scalar_select %p160, %s161, %s162
    %p166 = pneg %p160
    %p167 = scmp.eq.s32.totalorder %s12, 3
    %p168 = por %p166, %p167
    %p169 = scmp.ne.s32.totalorder %s161, %s164
    %p170 = scmp.eq.s32.totalorder %s12, 0
    %p171 = por %p169, %p170
    %p172 = scmp.ne.s32.totalorder %s161, %s164
    %p173 = scmp.eq.s32.totalorder %s17, 3
    %p174 = por %p172, %p173
    %p175 = scmp.ne.s32.totalorder %s164, %s165
    %p176 = scmp.eq.s32.totalorder %s17, 0
    %p177 = por %p175, %p176
    %p178 = scmp.ne.s32.totalorder %s164, %s165
    %p179 = scmp.eq.s32.totalorder %s18, 3
    %p180 = por %p178, %p179
    %p182 = scmp.ne.s32.totalorder %s165, %s181
    %p183 = scmp.eq.s32.totalorder %s18, 0
    %p184 = por %p182, %p183
    %s185 = ssub.s32 %s21, %s30
    %p186 = scmp.eq.s32.totalorder %s185, 0
    %s188 = sadd.s32 %s187, 1
    %s189 = scalar_select %p186, %s187, %s188
    %p192 = pneg %p186
    %p193 = scmp.eq.s32.totalorder %s12, 3
    %p194 = por %p192, %p193
    %p195 = scmp.ne.s32.totalorder %s187, %s190
    %p196 = scmp.eq.s32.totalorder %s12, 0
    %p197 = por %p195, %p196
    %p198 = scmp.ne.s32.totalorder %s187, %s190
    %p199 = scmp.eq.s32.totalorder %s17, 3
    %p200 = por %p198, %p199
    %p201 = scmp.ne.s32.totalorder %s190, %s191
    %p202 = scmp.eq.s32.totalorder %s17, 0
    %p203 = por %p201, %p202
    %p204 = scmp.ne.s32.totalorder %s190, %s191
    %p205 = scmp.eq.s32.totalorder %s18, 3
    %p206 = por %p204, %p205
    %p208 = scmp.ne.s32.totalorder %s191, %s207
    %p209 = scmp.eq.s32.totalorder %s18, 0
    %p210 = por %p208, %p209
    %s211 = ssub.s32 %s19, %s38
    %s212 = ssub.s32 %s20, %s34
    %s213 = sor.u32 %s211, %s212
    %s214 = ssub.s32 %s21, %s30
    %s215 = sor.u32 %s213, %s214
    %p216 = scmp.eq.s32.totalorder %s215, 0
    %s218 = sadd.s32 %s217, 1
    %s219 = scalar_select %p216, %s217, %s218
    %p222 = pneg %p216
    %p223 = scmp.eq.s32.totalorder %s12, 3
    %p224 = por %p222, %p223
    %p225 = scmp.ne.s32.totalorder %s217, %s220
    %p226 = scmp.eq.s32.totalorder %s12, 0
    %p227 = por %p225, %p226
    %p228 = scmp.ne.s32.totalorder %s217, %s220
    %p229 = scmp.eq.s32.totalorder %s17, 3
    %p230 = por %p228, %p229
    %p231 = scmp.ne.s32.totalorder %s220, %s221
    %p232 = scmp.eq.s32.totalorder %s17, 0
    %p233 = por %p231, %p232
    %p234 = scmp.ne.s32.totalorder %s220, %s221
    %p235 = scmp.eq.s32.totalorder %s18, 3
    %p236 = por %p234, %p235
    %p238 = scmp.ne.s32.totalorder %s221, %s237
    %p239 = scmp.eq.s32.totalorder %s18, 0
    %p240 = por %p238, %p239
    %p241 = scmp.le.s32.totalorder 1, %s12
    %p242 = scmp.lt.s32.totalorder %s12, 5
    %p243 = pnand %p241, %p242
    %p244 = pneg %p243
    // Predicated region
    $region9: #{upsample_block_forward.4} parent=5 // pred_check
      _
    $region10: #{upsample_block_forward.4} parent=5 // pred_check_branch
      %246 = sbr.rel (%p243) target = $region12
    $region11: #{upsample_block_forward.4} parent=5 // pred_region
      %s247 = ssub.s32 %s12, 1
      // Predicated region
      $region13: #{upsample_block_forward.4} parent=11 // pred_check
        %p248 = pneg %p177
      $region14: #{upsample_block_forward.4} parent=11 // pred_check_branch
        %250 = sbr.rel (%p248) target = $region16
      $region15: #{upsample_block_forward.4} parent=11 // pred_region
        %p251 = scmp.lt.s32.totalorder %s24, 0
        %s252 = scalar_select %p251, %s24, 0
        %s253 = smul.addr %s252, 4
        %s254 = scalar_lea.vmem %s4, %s253
      $region16: #{upsample_block_forward.4} parent=11 // pred_fallthru
        _
      // Predicated region
      $region17: #{upsample_block_forward.4} parent=11 // pred_check
        %p255 = pneg %p203
      $region18: #{upsample_block_forward.4} parent=11 // pred_check_branch
        %257 = sbr.rel (%p255) target = $region20
      $region19: #{upsample_block_forward.4} parent=11 // pred_region
        %p258 = scmp.lt.s32.totalorder %s24, 0
        %s259 = scalar_select %p258, %s24, 0
        %s260 = scalar_lea.vmem %s5, %s259
      $region20: #{upsample_block_forward.4} parent=11 // pred_fallthru
        _
    $region12: #{upsample_block_forward.4} parent=5 // pred_fallthru
      _
    %p261 = scmp.lt.s32.totalorder %s12, 4
    // Predicated region
    $region21: #{upsample_block_forward.4} parent=5 // pred_check
      %p262 = pneg %p261
    $region22: #{upsample_block_forward.4} parent=5 // pred_check_branch
      %264 = sbr.rel (%p262) target = $region24
    $region23: #{upsample_block_forward.4} parent=5 // pred_region
      // Predicated region
      $region25: #{upsample_block_forward.4} parent=23 // pred_check
        %p265 = pneg %p53
      $region26: #{upsample_block_forward.4} parent=23 // pred_check_branch
        %267 = sbr.rel (%p265) target = $region28
      $region27: #{upsample_block_forward.4} parent=23 // pred_region
        %s268 = smul.u32 8, %s20
        %s269 = ssub.s32 18, %s268
        %p270 = scmp.lt.s32.totalorder %s269, 8
        %s271 = scalar_select %p270, %s269, 8
        %s272 = smul.u32 4, %s271
        %s273 = smul.u32 %s272, 3
        %p274 = scmp.lt.s32.totalorder %s19, 1
        %s275 = scalar_select %p274, %s19, 1
        %p276 = scmp.lt.s32.totalorder %s268, 17
        %s277 = scalar_select %p276, %s268, 17
        %s278 = smul.addr %s277, 3
        %s279 = smul.addr %s275, 54
        %s280 = sadd.s32 %s278, %s279
        %s281 = smul.addr %s280, 4
        %s282 = scalar_lea.vmem %s0, %s281
        %s283 = smul.u32 8, %s20
        %s284 = ssub.s32 18, %s283
        %p285 = scmp.lt.s32.totalorder %s284, 8
        %s286 = scalar_select %p285, %s284, 8
        %s287 = smul.u32 4, %s286
        %s288 = smul.u32 %s287, 3
      $region28: #{upsample_block_forward.4} parent=23 // pred_fallthru
        _
      // Predicated region
      $region29: #{upsample_block_forward.4} parent=23 // pred_check
        %p289 = pneg %p85
      $region30: #{upsample_block_forward.4} parent=23 // pred_check_branch
        %291 = sbr.rel (%p289) target = $region32
      $region31: #{upsample_block_forward.4} parent=23 // pred_region
        %s292 = sadd.s32 %s20, 1
        %s293 = smul.u32 %s292, 4
        %s294 = smul.u32 2, %s293
        %p295 = scmp.lt.s32.totalorder %s19, 1
        %s296 = scalar_select %p295, %s19, 1
        %p297 = scmp.lt.s32.totalorder %s294, 17
        %s298 = scalar_select %p297, %s294, 17
        %s299 = smul.addr %s298, 3
        %s300 = smul.addr %s296, 54
        %s301 = sadd.s32 %s299, %s300
        %s302 = smul.addr %s301, 4
        %s303 = scalar_lea.vmem %s1, %s302
        %s304 = sadd.s32 %s20, 1
        %s305 = smul.u32 %s304, 4
        %s306 = smul.u32 2, %s305
      $region32: #{upsample_block_forward.4} parent=23 // pred_fallthru
        _
      // Predicated region
      $region33: #{upsample_block_forward.4} parent=23 // pred_check
        %p307 = pneg %p113
      $region34: #{upsample_block_forward.4} parent=23 // pred_check_branch
        %309 = sbr.rel (%p307) target = $region36
      $region35: #{upsample_block_forward.4} parent=23 // pred_region
        %s310 = smul.u32 8, %s20
        %s311 = ssub.s32 18, %s310
        %p312 = scmp.lt.s32.totalorder %s311, 8
        %s313 = scalar_select %p312, %s311, 8
        %s314 = smul.u32 4, %s313
        %s315 = smul.u32 %s314, 3
        %p316 = scmp.lt.s32.totalorder %s19, 1
        %s317 = scalar_select %p316, %s19, 1
        %p318 = scmp.lt.s32.totalorder %s310, 17
        %s319 = scalar_select %p318, %s310, 17
        %s320 = smul.addr %s319, 3
        %s321 = smul.addr %s317, 54
        %s322 = sadd.s32 %s320, %s321
        %s323 = smul.addr %s322, 4
        %s324 = scalar_lea.vmem %s2, %s323
        %s325 = smul.u32 8, %s20
        %s326 = ssub.s32 18, %s325
        %p327 = scmp.lt.s32.totalorder %s326, 8
        %s328 = scalar_select %p327, %s326, 8
        %s329 = smul.u32 4, %s328
        %s330 = smul.u32 %s329, 3
      $region36: #{upsample_block_forward.4} parent=23 // pred_fallthru
        _
      // Predicated region
      $region37: #{upsample_block_forward.4} parent=23 // pred_check
        %p331 = pneg %p145
      $region38: #{upsample_block_forward.4} parent=23 // pred_check_branch
        %333 = sbr.rel (%p331) target = $region40
      $region39: #{upsample_block_forward.4} parent=23 // pred_region
        %s334 = sadd.s32 %s20, 1
        %s335 = smul.u32 %s334, 4
        %s336 = smul.u32 2, %s335
        %p337 = scmp.lt.s32.totalorder %s19, 1
        %s338 = scalar_select %p337, %s19, 1
        %p339 = scmp.lt.s32.totalorder %s336, 17
        %s340 = scalar_select %p339, %s336, 17
        %s341 = smul.addr %s340, 3
        %s342 = smul.addr %s338, 54
        %s343 = sadd.s32 %s341, %s342
        %s344 = smul.addr %s343, 4
        %s345 = scalar_lea.vmem %s3, %s344
        %s346 = sadd.s32 %s20, 1
        %s347 = smul.u32 %s346, 4
        %s348 = smul.u32 2, %s347
      $region40: #{upsample_block_forward.4} parent=23 // pred_fallthru
        _
    $region24: #{upsample_block_forward.4} parent=5 // pred_fallthru
      _
    %p349 = scmp.le.s32.totalorder 1, %s12
    %p350 = scmp.lt.s32.totalorder %s12, 5
    %p351 = pnand %p349, %p350
    %p352 = pneg %p351
    // Predicated region
    $region41: #{upsample_block_forward.4} parent=5 // pred_check
      _
    $region42: #{upsample_block_forward.4} parent=5 // pred_check_branch
      %354 = sbr.rel (%p351) target = $region44
    $region43: #{upsample_block_forward.4} parent=5 // pred_region
      %s355 = ssub.s32 %s12, 1
      %s356 = smul.u32 8, %s23
      %s357 = ssub.s32 18, %s356
      %p358 = scmp.lt.s32.totalorder %s357, 8
      %s359 = scalar_select %p358, %s357, 8
      %s360 = smul.u32 4, %s359
      %s361 = smul.u32 %s360, 3
      %p362 = scmp.lt.s32.totalorder %s22, 1
      %s363 = scalar_select %p362, %s22, 1
      %p364 = scmp.lt.s32.totalorder %s356, 17
      %s365 = scalar_select %p364, %s356, 17
      %s366 = smul.addr %s365, 3
      %s367 = smul.addr %s363, 54
      %s368 = sadd.s32 %s366, %s367
      %s369 = smul.addr %s368, 4
      %s370 = scalar_lea.vmem %s0, %s369
      %p371 = pneg %p59
      %p372 = pneg %p56
      %s373 = sadd.s32 %s23, 1
      %s374 = smul.u32 %s373, 4
      %s375 = smul.u32 2, %s374
      %p376 = scmp.lt.s32.totalorder %s22, 1
      %s377 = scalar_select %p376, %s22, 1
      %p378 = scmp.lt.s32.totalorder %s375, 17
      %s379 = scalar_select %p378, %s375, 17
      %s380 = smul.addr %s379, 3
      %s381 = smul.addr %s377, 54
      %s382 = sadd.s32 %s380, %s381
      %s383 = smul.addr %s382, 4
      %s384 = scalar_lea.vmem %s1, %s383
      %p385 = pneg %p91
      %p386 = pneg %p88
      %s387 = smul.u32 8, %s23
      %s388 = ssub.s32 18, %s387
      %p389 = scmp.lt.s32.totalorder %s388, 8
      %s390 = scalar_select %p389, %s388, 8
      %s391 = smul.u32 4, %s390
      %s392 = smul.u32 %s391, 3
      %p393 = scmp.lt.s32.totalorder %s22, 1
      %s394 = scalar_select %p393, %s22, 1
      %p395 = scmp.lt.s32.totalorder %s387, 17
      %s396 = scalar_select %p395, %s387, 17
      %s397 = smul.addr %s396, 3
      %s398 = smul.addr %s394, 54
      %s399 = sadd.s32 %s397, %s398
      %s400 = smul.addr %s399, 4
      %s401 = scalar_lea.vmem %s2, %s400
      %p402 = pneg %p119
      %p403 = pneg %p116
      %s404 = sadd.s32 %s23, 1
      %s405 = smul.u32 %s404, 4
      %s406 = smul.u32 2, %s405
      %p407 = scmp.lt.s32.totalorder %s22, 1
      %s408 = scalar_select %p407, %s22, 1
      %p409 = scmp.lt.s32.totalorder %s406, 17
      %s410 = scalar_select %p409, %s406, 17
      %s411 = smul.addr %s410, 3
      %s412 = smul.addr %s408, 54
      %s413 = sadd.s32 %s411, %s412
      %s414 = smul.addr %s413, 4
      %s415 = scalar_lea.vmem %s3, %s414
      %p416 = pneg %p151
      %p417 = pneg %p148
      %p418 = scmp.lt.s32.totalorder %s24, 0
      %s419 = scalar_select %p418, %s24, 0
      %s420 = smul.addr %s419, 4
      %s421 = scalar_lea.vmem %s4, %s420
      %p422 = pneg %p177
      %p423 = pneg %p174
      %p424 = scmp.lt.s32.totalorder %s24, 0
      %s425 = scalar_select %p424, %s24, 0
      %s426 = scalar_lea.vmem %s5, %s425
      %p427 = pneg %p203
      %p428 = pneg %p200
      %p429 = pneg %p233
      %p430 = pneg %p230
      %s431 = smul.u32 8, %s23
      %p432 = scmp.lt.s32.totalorder %s22, 1
      %s433 = scalar_select %p432, %s22, 1
      %p434 = scmp.lt.s32.totalorder %s431, 15
      %s435 = scalar_select %p434, %s431, 15
      %p436 = scmp.lt.s32.totalorder %s24, 0
      %s437 = scalar_select %p436, %s24, 0
      %s438 = smul.addr %s435, 2
      %s439 = sadd.s32 %s437, %s438
      %s440 = smul.addr %s433, 32
      %s441 = sadd.s32 %s439, %s440
      %s442 = smul.addr %s441, 4
      %s443 = scalar_lea.vmem %s6, %s442
      %s444 = smul.u32 8, %s23
      %s445 = ssub.s32 18, %s444
      %p446 = scmp.lt.s32.totalorder %s445, 8
      %s447 = scalar_select %p446, %s445, 8
      %s448 = smul.u32 4, %s447
      %s449 = smul.u32 %s448, 3
      %p450 = scmp.lt.s32.totalorder %s22, 1
      %s451 = scalar_select %p450, %s22, 1
      %p452 = scmp.lt.s32.totalorder %s444, 17
      %s453 = scalar_select %p452, %s444, 17
      %s454 = smul.addr %s453, 3
      %s455 = smul.addr %s451, 54
      %s456 = sadd.s32 %s454, %s455
      %s457 = smul.addr %s456, 4
      %s458 = scalar_lea.vmem %s0, %s457
      %s459 = smul.u32 8, %s23
      %s460 = ssub.s32 18, %s459
      %p461 = scmp.lt.s32.totalorder %s460, 8
      %s462 = scalar_select %p461, %s460, 8
      %s463 = smul.u32 4, %s462
      %s464 = smul.u32 %s463, 3
      %s465 = sadd.s32 %s23, 1
      %s466 = smul.u32 %s465, 4
      %s467 = smul.u32 2, %s466
      %p468 = scmp.lt.s32.totalorder %s22, 1
      %s469 = scalar_select %p468, %s22, 1
      %p470 = scmp.lt.s32.totalorder %s467, 17
      %s471 = scalar_select %p470, %s467, 17
      %s472 = smul.addr %s471, 3
      %s473 = smul.addr %s469, 54
      %s474 = sadd.s32 %s472, %s473
      %s475 = smul.addr %s474, 4
      %s476 = scalar_lea.vmem %s1, %s475
      %s477 = sadd.s32 %s23, 1
      %s478 = smul.u32 %s477, 4
      %s479 = smul.u32 2, %s478
      %s480 = smul.u32 8, %s23
      %s481 = ssub.s32 18, %s480
      %p482 = scmp.lt.s32.totalorder %s481, 8
      %s483 = scalar_select %p482, %s481, 8
      %s484 = smul.u32 4, %s483
      %s485 = smul.u32 %s484, 3
      %p486 = scmp.lt.s32.totalorder %s22, 1
      %s487 = scalar_select %p486, %s22, 1
      %p488 = scmp.lt.s32.totalorder %s480, 17
      %s489 = scalar_select %p488, %s480, 17
      %s490 = smul.addr %s489, 3
      %s491 = smul.addr %s487, 54
      %s492 = sadd.s32 %s490, %s491
      %s493 = smul.addr %s492, 4
      %s494 = scalar_lea.vmem %s2, %s493
      %s495 = smul.u32 8, %s23
      %s496 = ssub.s32 18, %s495
      %p497 = scmp.lt.s32.totalorder %s496, 8
      %s498 = scalar_select %p497, %s496, 8
      %s499 = smul.u32 4, %s498
      %s500 = smul.u32 %s499, 3
      %s501 = sadd.s32 %s23, 1
      %s502 = smul.u32 %s501, 4
      %s503 = smul.u32 2, %s502
      %p504 = scmp.lt.s32.totalorder %s22, 1
      %s505 = scalar_select %p504, %s22, 1
      %p506 = scmp.lt.s32.totalorder %s503, 17
      %s507 = scalar_select %p506, %s503, 17
      %s508 = smul.addr %s507, 3
      %s509 = smul.addr %s505, 54
      %s510 = sadd.s32 %s508, %s509
      %s511 = smul.addr %s510, 4
      %s512 = scalar_lea.vmem %s3, %s511
      %s513 = sadd.s32 %s23, 1
      %s514 = smul.u32 %s513, 4
      %s515 = smul.u32 2, %s514
      %p516 = scmp.lt.s32.totalorder %s24, 0
      %s517 = scalar_select %p516, %s24, 0
      %s518 = smul.addr %s517, 4
      %s519 = scalar_lea.vmem %s4, %s518
      %p520 = scmp.lt.s32.totalorder %s24, 0
      %s521 = scalar_select %p520, %s24, 0
      %s522 = scalar_lea.vmem %s5, %s521
      %s523 = smul.u32 8, %s23
      %p524 = scmp.lt.s32.totalorder %s22, 1
      %s525 = scalar_select %p524, %s22, 1
      %p526 = scmp.lt.s32.totalorder %s523, 15
      %s527 = scalar_select %p526, %s523, 15
      %p528 = scmp.lt.s32.totalorder %s24, 0
      %s529 = scalar_select %p528, %s24, 0
      %s530 = smul.addr %s527, 2
      %s531 = sadd.s32 %s529, %s530
      %s532 = smul.addr %s525, 32
      %s533 = sadd.s32 %s531, %s532
      %s534 = smul.addr %s533, 4
      %s535 = scalar_lea.vmem %s6, %s534
      %s536 = smul.u32 8, %s23
      %v538 = vld [vmem:[%s458] sm:$0xf]
      %v539 = vld [vmem:[%s458 + $0x4] sm:$0xf]
      %v540 = vld [vmem:[%s458 + $0x8] sm:$0x1]
      %v541 = vld [vmem:[%s458 + $0xc] sm:$0xf]
      %v542 = vld [vmem:[%s458 + $0x10] sm:$0xf]
      %v543 = vld [vmem:[%s458 + $0x14] sm:$0x1]
      %v544 = vld [vmem:[%s458 + $0x18] sm:$0xf]
      %v545 = vld [vmem:[%s458 + $0x1c] sm:$0xf]
      %v546 = vld [vmem:[%s458 + $0x20] sm:$0x1]
      %v547 = vld [vmem:[%s458 + $0x24] sm:$0xf]
      %v548 = vld [vmem:[%s458 + $0x28] sm:$0xf]
      %v549 = vld [vmem:[%s458 + $0x2c] sm:$0x1]
      %v550 = vld [vmem:[%s458 + $0x30] sm:$0xf]
      %v551 = vld [vmem:[%s458 + $0x34] sm:$0xf]
      %v552 = vld [vmem:[%s458 + $0x38] sm:$0x1]
      %v553 = vld [vmem:[%s458 + $0x3c] sm:$0xf]
      %v554 = vld [vmem:[%s458 + $0x40] sm:$0xf]
      %v555 = vld [vmem:[%s458 + $0x44] sm:$0x1]
      %v556 = vld [vmem:[%s458 + $0x48] sm:$0xf]
      %v557 = vld [vmem:[%s458 + $0x4c] sm:$0xf]
      %v558 = vld [vmem:[%s458 + $0x50] sm:$0x1]
      %v559 = vld [vmem:[%s458 + $0x54] sm:$0xf]
      %v560 = vld [vmem:[%s458 + $0x58] sm:$0xf]
      %v561 = vld [vmem:[%s458 + $0x5c] sm:$0x1]
      %v562 = vld [vmem:[%s494] sm:$0xf]
      %v563 = vld [vmem:[%s494 + $0x4] sm:$0xf]
      %v564 = vld [vmem:[%s494 + $0x8] sm:$0x1]
      %v565 = vld [vmem:[%s494 + $0xc] sm:$0xf]
      %v566 = vld [vmem:[%s494 + $0x10] sm:$0xf]
      %v567 = vld [vmem:[%s494 + $0x14] sm:$0x1]
      %v568 = vld [vmem:[%s494 + $0x18] sm:$0xf]
      %v569 = vld [vmem:[%s494 + $0x1c] sm:$0xf]
      %v570 = vld [vmem:[%s494 + $0x20] sm:$0x1]
      %v571 = vld [vmem:[%s494 + $0x24] sm:$0xf]
      %v572 = vld [vmem:[%s494 + $0x28] sm:$0xf]
      %v573 = vld [vmem:[%s494 + $0x2c] sm:$0x1]
      %v574 = vld [vmem:[%s494 + $0x30] sm:$0xf]
      %v575 = vld [vmem:[%s494 + $0x34] sm:$0xf]
      %v576 = vld [vmem:[%s494 + $0x38] sm:$0x1]
      %v577 = vld [vmem:[%s494 + $0x3c] sm:$0xf]
      %v578 = vld [vmem:[%s494 + $0x40] sm:$0xf]
      %v579 = vld [vmem:[%s494 + $0x44] sm:$0x1]
      %v580 = vld [vmem:[%s494 + $0x48] sm:$0xf]
      %v581 = vld [vmem:[%s494 + $0x4c] sm:$0xf]
      %v582 = vld [vmem:[%s494 + $0x50] sm:$0x1]
      %v583 = vld [vmem:[%s494 + $0x54] sm:$0xf]
      %v584 = vld [vmem:[%s494 + $0x58] sm:$0xf]
      %v585 = vld [vmem:[%s494 + $0x5c] sm:$0x1]
      %v586 = vld [vmem:[%s476] sm:$0xf]
      %v587 = vld [vmem:[%s476 + $0x4] sm:$0xf]
      %v588 = vld [vmem:[%s476 + $0x8] sm:$0x1]
      %v589 = vld [vmem:[%s476 + $0xc] sm:$0xf]
      %v590 = vld [vmem:[%s476 + $0x10] sm:$0xf]
      %v591 = vld [vmem:[%s476 + $0x14] sm:$0x1]
      %v592 = vld [vmem:[%s512] sm:$0xf]
      %v593 = vld [vmem:[%s512 + $0x4] sm:$0xf]
      %v594 = vld [vmem:[%s512 + $0x8] sm:$0x1]
      %v595 = vld [vmem:[%s512 + $0xc] sm:$0xf]
      %v596 = vld [vmem:[%s512 + $0x10] sm:$0xf]
      %v597 = vld [vmem:[%s512 + $0x14] sm:$0x1]
      %v614 = vunpack.c.l.b16 %v538
      %v615 = vunpack.c.l.b16 %v539
      %v616 = vunpack.c.l.b16 %v541
      %v617 = vunpack.c.l.b16 %v542
      %v618 = vunpack.c.l.b16 %v544
      %v619 = vunpack.c.l.b16 %v545
      %v620 = vunpack.c.l.b16 %v547
      %v621 = vunpack.c.l.b16 %v548
      %v622 = vunpack.c.l.b16 %v550
      %v623 = vunpack.c.l.b16 %v551
      %v624 = vunpack.c.l.b16 %v553
      %v625 = vunpack.c.l.b16 %v554
      %v626 = vunpack.c.l.b16 %v556
      %v627 = vunpack.c.l.b16 %v557
      %v628 = vunpack.c.l.b16 %v559
      %v629 = vunpack.c.l.b16 %v560
      %v630 = vpack.c.b16 %v615, %v614
      %v631 = vpack.c.b16 %v617, %v616
      %v632 = vpack.c.b16 %v619, %v618
      %v633 = vpack.c.b16 %v621, %v620
      %v634 = vpack.c.b16 %v623, %v622
      %v635 = vpack.c.b16 %v625, %v624
      %v636 = vpack.c.b16 %v627, %v626
      %v637 = vpack.c.b16 %v629, %v628
      %v654 = vunpack.c.l.b16 %v562
      %v655 = vunpack.c.l.b16 %v563
      %v656 = vunpack.c.l.b16 %v565
      %v657 = vunpack.c.l.b16 %v566
      %v658 = vunpack.c.l.b16 %v568
      %v659 = vunpack.c.l.b16 %v569
      %v660 = vunpack.c.l.b16 %v571
      %v661 = vunpack.c.l.b16 %v572
      %v662 = vunpack.c.l.b16 %v574
      %v663 = vunpack.c.l.b16 %v575
      %v664 = vunpack.c.l.b16 %v577
      %v665 = vunpack.c.l.b16 %v578
      %v666 = vunpack.c.l.b16 %v580
      %v667 = vunpack.c.l.b16 %v581
      %v668 = vunpack.c.l.b16 %v583
      %v669 = vunpack.c.l.b16 %v584
      %v670 = vpack.c.b16 %v655, %v654
      %v671 = vpack.c.b16 %v657, %v656
      %v672 = vpack.c.b16 %v659, %v658
      %v673 = vpack.c.b16 %v661, %v660
      %v674 = vpack.c.b16 %v663, %v662
      %v675 = vpack.c.b16 %v665, %v664
      %v676 = vpack.c.b16 %v667, %v666
      %v677 = vpack.c.b16 %v669, %v668
      %678 = vrot.lane.b32.xlu0 %v670, 16
      %v679 = vpop.permute.xlu0 %678
      %680 = vrot.lane.b32.xlu0 %v671, 16
      %v681 = vpop.permute.xlu0 %680
      %682 = vrot.lane.b32.xlu0 %v672, 16
      %v683 = vpop.permute.xlu0 %682
      %684 = vrot.lane.b32.xlu0 %v673, 16
      %v685 = vpop.permute.xlu0 %684
      %686 = vrot.lane.b32.xlu0 %v674, 16
      %v687 = vpop.permute.xlu0 %686
      %688 = vrot.lane.b32.xlu0 %v675, 16
      %v689 = vpop.permute.xlu0 %688
      %690 = vrot.lane.b32.xlu0 %v676, 16
      %v691 = vpop.permute.xlu0 %690
      %692 = vrot.lane.b32.xlu0 %v677, 16
      %v693 = vpop.permute.xlu0 %692
      %v702 = vunpack.c.l.b16 %v540
      %v703 = vunpack.c.l.b16 %v543
      %v704 = vunpack.c.l.b16 %v546
      %v705 = vunpack.c.l.b16 %v549
      %v706 = vunpack.c.l.b16 %v552
      %v707 = vunpack.c.l.b16 %v555
      %v708 = vunpack.c.l.b16 %v558
      %v709 = vunpack.c.l.b16 %v561
      %v710 = vpack.c.b16 %v702, %v702
      %v711 = vpack.c.b16 %v703, %v703
      %v712 = vpack.c.b16 %v704, %v704
      %v713 = vpack.c.b16 %v705, %v705
      %v714 = vpack.c.b16 %v706, %v706
      %v715 = vpack.c.b16 %v707, %v707
      %v716 = vpack.c.b16 %v708, %v708
      %v717 = vpack.c.b16 %v709, %v709
      %vm718 = vsmask.f32 7424
      %v720 = vshrl.u32 %v630, 16
      %v722 = vshll.u32 %v630, 16
      %v724 = vrot.slane %v722, 1
      %v725 = vor.u32 %v720, %v724
      %v727 = vshll.u32 %v710, 16
      %v729 = vrot.slane %v727, 1
      %v730 = vsel %vm718, %v725, %v729
      %v732 = vshrl.u32 %v631, 16
      %v734 = vshll.u32 %v631, 16
      %v736 = vrot.slane %v734, 1
      %v737 = vor.u32 %v732, %v736
      %v739 = vshll.u32 %v711, 16
      %v741 = vrot.slane %v739, 1
      %v742 = vsel %vm718, %v737, %v741
      %v744 = vshrl.u32 %v632, 16
      %v746 = vshll.u32 %v632, 16
      %v748 = vrot.slane %v746, 1
      %v749 = vor.u32 %v744, %v748
      %v751 = vshll.u32 %v712, 16
      %v753 = vrot.slane %v751, 1
      %v754 = vsel %vm718, %v749, %v753
      %v756 = vshrl.u32 %v633, 16
      %v758 = vshll.u32 %v633, 16
      %v760 = vrot.slane %v758, 1
      %v761 = vor.u32 %v756, %v760
      %v763 = vshll.u32 %v713, 16
      %v765 = vrot.slane %v763, 1
      %v766 = vsel %vm718, %v761, %v765
      %v768 = vshrl.u32 %v634, 16
      %v770 = vshll.u32 %v634, 16
      %v772 = vrot.slane %v770, 1
      %v773 = vor.u32 %v768, %v772
      %v775 = vshll.u32 %v714, 16
      %v777 = vrot.slane %v775, 1
      %v778 = vsel %vm718, %v773, %v777
      %v780 = vshrl.u32 %v635, 16
      %v782 = vshll.u32 %v635, 16
      %v784 = vrot.slane %v782, 1
      %v785 = vor.u32 %v780, %v784
      %v787 = vshll.u32 %v715, 16
      %v789 = vrot.slane %v787, 1
      %v790 = vsel %vm718, %v785, %v789
      %v792 = vshrl.u32 %v636, 16
      %v794 = vshll.u32 %v636, 16
      %v796 = vrot.slane %v794, 1
      %v797 = vor.u32 %v792, %v796
      %v799 = vshll.u32 %v716, 16
      %v801 = vrot.slane %v799, 1
      %v802 = vsel %vm718, %v797, %v801
      %v804 = vshrl.u32 %v637, 16
      %v806 = vshll.u32 %v637, 16
      %v808 = vrot.slane %v806, 1
      %v809 = vor.u32 %v804, %v808
      %v811 = vshll.u32 %v717, 16
      %v813 = vrot.slane %v811, 1
      %v814 = vsel %vm718, %v809, %v813
      %815 = vrot.lane.b32.xlu0 %v730, 32
      %v816 = vpop.permute.xlu0 %815
      %817 = vrot.lane.b32.xlu0 %v742, 32
      %v818 = vpop.permute.xlu0 %817
      %819 = vrot.lane.b32.xlu0 %v754, 32
      %v820 = vpop.permute.xlu0 %819
      %821 = vrot.lane.b32.xlu0 %v766, 32
      %v822 = vpop.permute.xlu0 %821
      %823 = vrot.lane.b32.xlu0 %v778, 32
      %v824 = vpop.permute.xlu0 %823
      %825 = vrot.lane.b32.xlu0 %v790, 32
      %v826 = vpop.permute.xlu0 %825
      %827 = vrot.lane.b32.xlu0 %v802, 32
      %v828 = vpop.permute.xlu0 %827
      %829 = vrot.lane.b32.xlu0 %v814, 32
      %v830 = vpop.permute.xlu0 %829
      %v839 = vunpack.c.l.b16 %v564
      %v840 = vunpack.c.l.b16 %v567
      %v841 = vunpack.c.l.b16 %v570
      %v842 = vunpack.c.l.b16 %v573
      %v843 = vunpack.c.l.b16 %v576
      %v844 = vunpack.c.l.b16 %v579
      %v845 = vunpack.c.l.b16 %v582
      %v846 = vunpack.c.l.b16 %v585
      %v847 = vpack.c.b16 %v839, %v839
      %v848 = vpack.c.b16 %v840, %v840
      %v849 = vpack.c.b16 %v841, %v841
      %v850 = vpack.c.b16 %v842, %v842
      %v851 = vpack.c.b16 %v843, %v843
      %v852 = vpack.c.b16 %v844, %v844
      %v853 = vpack.c.b16 %v845, %v845
      %v854 = vpack.c.b16 %v846, %v846
      %v856 = vshrl.u32 %v670, 16
      %v858 = vshll.u32 %v670, 16
      %v860 = vrot.slane %v858, 1
      %v861 = vor.u32 %v856, %v860
      %v863 = vshll.u32 %v847, 16
      %v865 = vrot.slane %v863, 1
      %v866 = vsel %vm718, %v861, %v865
      %v868 = vshrl.u32 %v671, 16
      %v870 = vshll.u32 %v671, 16
      %v872 = vrot.slane %v870, 1
      %v873 = vor.u32 %v868, %v872
      %v875 = vshll.u32 %v848, 16
      %v877 = vrot.slane %v875, 1
      %v878 = vsel %vm718, %v873, %v877
      %v880 = vshrl.u32 %v672, 16
      %v882 = vshll.u32 %v672, 16
      %v884 = vrot.slane %v882, 1
      %v885 = vor.u32 %v880, %v884
      %v887 = vshll.u32 %v849, 16
      %v889 = vrot.slane %v887, 1
      %v890 = vsel %vm718, %v885, %v889
      %v892 = vshrl.u32 %v673, 16
      %v894 = vshll.u32 %v673, 16
      %v896 = vrot.slane %v894, 1
      %v897 = vor.u32 %v892, %v896
      %v899 = vshll.u32 %v850, 16
      %v901 = vrot.slane %v899, 1
      %v902 = vsel %vm718, %v897, %v901
      %v904 = vshrl.u32 %v674, 16
      %v906 = vshll.u32 %v674, 16
      %v908 = vrot.slane %v906, 1
      %v909 = vor.u32 %v904, %v908
      %v911 = vshll.u32 %v851, 16
      %v913 = vrot.slane %v911, 1
      %v914 = vsel %vm718, %v909, %v913
      %v916 = vshrl.u32 %v675, 16
      %v918 = vshll.u32 %v675, 16
      %v920 = vrot.slane %v918, 1
      %v921 = vor.u32 %v916, %v920
      %v923 = vshll.u32 %v852, 16
      %v925 = vrot.slane %v923, 1
      %v926 = vsel %vm718, %v921, %v925
      %v928 = vshrl.u32 %v676, 16
      %v930 = vshll.u32 %v676, 16
      %v932 = vrot.slane %v930, 1
      %v933 = vor.u32 %v928, %v932
      %v935 = vshll.u32 %v853, 16
      %v937 = vrot.slane %v935, 1
      %v938 = vsel %vm718, %v933, %v937
      %v940 = vshrl.u32 %v677, 16
      %v942 = vshll.u32 %v677, 16
      %v944 = vrot.slane %v942, 1
      %v945 = vor.u32 %v940, %v944
      %v947 = vshll.u32 %v854, 16
      %v949 = vrot.slane %v947, 1
      %v950 = vsel %vm718, %v945, %v949
      %951 = vrot.lane.b32.xlu0 %v866, 48
      %v952 = vpop.permute.xlu0 %951
      %953 = vrot.lane.b32.xlu0 %v878, 48
      %v954 = vpop.permute.xlu0 %953
      %955 = vrot.lane.b32.xlu0 %v890, 48
      %v956 = vpop.permute.xlu0 %955
      %957 = vrot.lane.b32.xlu0 %v902, 48
      %v958 = vpop.permute.xlu0 %957
      %959 = vrot.lane.b32.xlu0 %v914, 48
      %v960 = vpop.permute.xlu0 %959
      %961 = vrot.lane.b32.xlu0 %v926, 48
      %v962 = vpop.permute.xlu0 %961
      %963 = vrot.lane.b32.xlu0 %v938, 48
      %v964 = vpop.permute.xlu0 %963
      %965 = vrot.lane.b32.xlu0 %v950, 48
      %v966 = vpop.permute.xlu0 %965
      %vm967 = vcmask 1046528
      %v968 = vrot.slane %v630, 1
      %v969 = vrot.slane %v710, 1
      %v970 = vsel %vm967, %v968, %v969
      %v971 = vrot.slane %v631, 1
      %v972 = vrot.slane %v711, 1
      %v973 = vsel %vm967, %v971, %v972
      %v974 = vrot.slane %v632, 1
      %v975 = vrot.slane %v712, 1
      %v976 = vsel %vm967, %v974, %v975
      %v977 = vrot.slane %v633, 1
      %v978 = vrot.slane %v713, 1
      %v979 = vsel %vm967, %v977, %v978
      %v980 = vrot.slane %v634, 1
      %v981 = vrot.slane %v714, 1
      %v982 = vsel %vm967, %v980, %v981
      %v983 = vrot.slane %v635, 1
      %v984 = vrot.slane %v715, 1
      %v985 = vsel %vm967, %v983, %v984
      %v986 = vrot.slane %v636, 1
      %v987 = vrot.slane %v716, 1
      %v988 = vsel %vm967, %v986, %v987
      %v989 = vrot.slane %v637, 1
      %v990 = vrot.slane %v717, 1
      %v991 = vsel %vm967, %v989, %v990
      %992 = vrot.lane.b32.xlu0 %v970, 64
      %v993 = vpop.permute.xlu0 %992
      %994 = vrot.lane.b32.xlu0 %v973, 64
      %v995 = vpop.permute.xlu0 %994
      %996 = vrot.lane.b32.xlu0 %v976, 64
      %v997 = vpop.permute.xlu0 %996
      %998 = vrot.lane.b32.xlu0 %v979, 64
      %v999 = vpop.permute.xlu0 %998
      %1000 = vrot.lane.b32.xlu0 %v982, 64
      %v1001 = vpop.permute.xlu0 %1000
      %1002 = vrot.lane.b32.xlu0 %v985, 64
      %v1003 = vpop.permute.xlu0 %1002
      %1004 = vrot.lane.b32.xlu0 %v988, 64
      %v1005 = vpop.permute.xlu0 %1004
      %1006 = vrot.lane.b32.xlu0 %v991, 64
      %v1007 = vpop.permute.xlu0 %1006
      %v1008 = vrot.slane %v670, 1
      %v1009 = vrot.slane %v847, 1
      %v1010 = vsel %vm967, %v1008, %v1009
      %v1011 = vrot.slane %v671, 1
      %v1012 = vrot.slane %v848, 1
      %v1013 = vsel %vm967, %v1011, %v1012
      %v1014 = vrot.slane %v672, 1
      %v1015 = vrot.slane %v849, 1
      %v1016 = vsel %vm967, %v1014, %v1015
      %v1017 = vrot.slane %v673, 1
      %v1018 = vrot.slane %v850, 1
      %v1019 = vsel %vm967, %v1017, %v1018
      %v1020 = vrot.slane %v674, 1
      %v1021 = vrot.slane %v851, 1
      %v1022 = vsel %vm967, %v1020, %v1021
      %v1023 = vrot.slane %v675, 1
      %v1024 = vrot.slane %v852, 1
      %v1025 = vsel %vm967, %v1023, %v1024
      %v1026 = vrot.slane %v676, 1
      %v1027 = vrot.slane %v853, 1
      %v1028 = vsel %vm967, %v1026, %v1027
      %v1029 = vrot.slane %v677, 1
      %v1030 = vrot.slane %v854, 1
      %v1031 = vsel %vm967, %v1029, %v1030
      %1032 = vrot.lane.b32.xlu0 %v1010, 80
      %v1033 = vpop.permute.xlu0 %1032
      %1034 = vrot.lane.b32.xlu0 %v1013, 80
      %v1035 = vpop.permute.xlu0 %1034
      %1036 = vrot.lane.b32.xlu0 %v1016, 80
      %v1037 = vpop.permute.xlu0 %1036
      %1038 = vrot.lane.b32.xlu0 %v1019, 80
      %v1039 = vpop.permute.xlu0 %1038
      %1040 = vrot.lane.b32.xlu0 %v1022, 80
      %v1041 = vpop.permute.xlu0 %1040
      %1042 = vrot.lane.b32.xlu0 %v1025, 80
      %v1043 = vpop.permute.xlu0 %1042
      %1044 = vrot.lane.b32.xlu0 %v1028, 80
      %v1045 = vpop.permute.xlu0 %1044
      %1046 = vrot.lane.b32.xlu0 %v1031, 80
      %v1047 = vpop.permute.xlu0 %1046
      %vm1048 = vcmask 130048
      %v1050 = vsel %vm1048, %v630, %v679
      %v1052 = vsel %vm1048, %v631, %v681
      %v1054 = vsel %vm1048, %v632, %v683
      %v1056 = vsel %vm1048, %v633, %v685
      %v1058 = vsel %vm1048, %v634, %v687
      %v1060 = vsel %vm1048, %v635, %v689
      %v1062 = vsel %vm1048, %v636, %v691
      %v1064 = vsel %vm1048, %v637, %v693
      %vm1065 = vcmask 261120
      %v1067 = vsel %vm1065, %v1050, %v816
      %v1069 = vsel %vm1065, %v1052, %v818
      %v1071 = vsel %vm1065, %v1054, %v820
      %v1073 = vsel %vm1065, %v1056, %v822
      %v1075 = vsel %vm1065, %v1058, %v824
      %v1077 = vsel %vm1065, %v1060, %v826
      %v1079 = vsel %vm1065, %v1062, %v828
      %v1081 = vsel %vm1065, %v1064, %v830
      %vm1082 = vcmask 392192
      %v1084 = vsel %vm1082, %v1067, %v952
      %v1086 = vsel %vm1082, %v1069, %v954
      %v1088 = vsel %vm1082, %v1071, %v956
      %v1090 = vsel %vm1082, %v1073, %v958
      %v1092 = vsel %vm1082, %v1075, %v960
      %v1094 = vsel %vm1082, %v1077, %v962
      %v1096 = vsel %vm1082, %v1079, %v964
      %v1098 = vsel %vm1082, %v1081, %v966
      %vm1099 = vcmask 523264
      %v1101 = vsel %vm1099, %v1084, %v993
      %v1103 = vsel %vm1099, %v1086, %v995
      %v1105 = vsel %vm1099, %v1088, %v997
      %v1107 = vsel %vm1099, %v1090, %v999
      %v1109 = vsel %vm1099, %v1092, %v1001
      %v1111 = vsel %vm1099, %v1094, %v1003
      %v1113 = vsel %vm1099, %v1096, %v1005
      %v1115 = vsel %vm1099, %v1098, %v1007
      %vm1116 = vcmask 654336
      %v1118 = vsel %vm1116, %v1101, %v1033
      %v1120 = vsel %vm1116, %v1103, %v1035
      %v1122 = vsel %vm1116, %v1105, %v1037
      %v1124 = vsel %vm1116, %v1107, %v1039
      %v1126 = vsel %vm1116, %v1109, %v1041
      %v1128 = vsel %vm1116, %v1111, %v1043
      %v1130 = vsel %vm1116, %v1113, %v1045
      %v1132 = vsel %vm1116, %v1115, %v1047
      %v1133 = vld [vmem:[%s519] sm:$0xf]
      %v1134 = vld [vmem:[%s519 + $0x4] sm:$0xf]
      %v1135 = vld [vmem:[%s519 + $0x8] sm:$0xf]
      %v1136 = vld [vmem:[%s519 + $0xc] sm:$0xf]
      %v1137 = vld [vmem:[%s519 + $0x10] sm:$0xf]
      %v1138 = vld [vmem:[%s519 + $0x14] sm:$0xf]
      %v1139 = vld [vmem:[%s519 + $0x18] sm:$0xf]
      %v1140 = vld [vmem:[%s519 + $0x1c] sm:$0xf]
      %v1141 = vld [vmem:[%s519 + $0x20] sm:$0xf]
      %v1142 = vld [vmem:[%s519 + $0x24] sm:$0xf]
      %v1143 = vld [vmem:[%s519 + $0x28] sm:$0xf]
      %v1144 = vld [vmem:[%s519 + $0x2c] sm:$0xf]
      %v1147 = vunpack.c.l.b16 %v586
      %v1148 = vunpack.c.l.b16 %v587
      %v1149 = vpack.c.b16 %v1148, %v1147
      %v1152 = vunpack.c.l.b16 %v592
      %v1153 = vunpack.c.l.b16 %v593
      %v1154 = vpack.c.b16 %v1153, %v1152
      %1155 = vrot.lane.b32.xlu0 %v1154, 16
      %v1156 = vpop.permute.xlu0 %1155
      %v1158 = vunpack.c.l.b16 %v588
      %v1159 = vpack.c.b16 %v1158, %v1158
      %v1161 = vshrl.u32 %v1149, 16
      %v1163 = vshll.u32 %v1149, 16
      %v1165 = vrot.slane %v1163, 1
      %v1166 = vor.u32 %v1161, %v1165
      %v1168 = vshll.u32 %v1159, 16
      %v1170 = vrot.slane %v1168, 1
      %v1171 = vsel %vm718, %v1166, %v1170
      %1172 = vrot.lane.b32.xlu0 %v1171, 32
      %v1173 = vpop.permute.xlu0 %1172
      %v1175 = vunpack.c.l.b16 %v594
      %v1176 = vpack.c.b16 %v1175, %v1175
      %v1178 = vshrl.u32 %v1154, 16
      %v1180 = vshll.u32 %v1154, 16
      %v1182 = vrot.slane %v1180, 1
      %v1183 = vor.u32 %v1178, %v1182
      %v1185 = vshll.u32 %v1176, 16
      %v1187 = vrot.slane %v1185, 1
      %v1188 = vsel %vm718, %v1183, %v1187
      %1189 = vrot.lane.b32.xlu0 %v1188, 48
      %v1190 = vpop.permute.xlu0 %1189
      %v1191 = vrot.slane %v1149, 1
      %v1192 = vrot.slane %v1159, 1
      %v1193 = vsel %vm967, %v1191, %v1192
      %1194 = vrot.lane.b32.xlu0 %v1193, 64
      %v1195 = vpop.permute.xlu0 %1194
      %v1196 = vrot.slane %v1154, 1
      %v1197 = vrot.slane %v1176, 1
      %v1198 = vsel %vm967, %v1196, %v1197
      %1199 = vrot.lane.b32.xlu0 %v1198, 80
      %v1200 = vpop.permute.xlu0 %1199
      %v1202 = vsel %vm1048, %v1149, %v1156
      %v1204 = vsel %vm1065, %v1202, %v1173
      %v1206 = vsel %vm1082, %v1204, %v1190
      %v1208 = vsel %vm1099, %v1206, %v1195
      %v1210 = vsel %vm1116, %v1208, %v1200
      %s1211 = scalar_lea.vmem %s519, 48
      %v1212 = vld [vmem:[%s1211] sm:$0xf]
      %v1213 = vld [vmem:[%s1211 + $0x4] sm:$0xf]
      %v1214 = vld [vmem:[%s1211 + $0x8] sm:$0xf]
      %v1215 = vld [vmem:[%s1211 + $0xc] sm:$0xf]
      %v1216 = vld [vmem:[%s1211 + $0x10] sm:$0xf]
      %v1217 = vld [vmem:[%s1211 + $0x14] sm:$0xf]
      %v1218 = vld [vmem:[%s1211 + $0x18] sm:$0xf]
      %v1219 = vld [vmem:[%s1211 + $0x1c] sm:$0xf]
      %v1220 = vld [vmem:[%s1211 + $0x20] sm:$0xf]
      %v1221 = vld [vmem:[%s1211 + $0x24] sm:$0xf]
      %v1222 = vld [vmem:[%s1211 + $0x28] sm:$0xf]
      %v1223 = vld [vmem:[%s1211 + $0x2c] sm:$0xf]
      %v1236 = vunpack.c.l.b16 %v1212
      %v1237 = vunpack.c.l.b16 %v1213
      %v1238 = vunpack.c.l.b16 %v1214
      %v1239 = vunpack.c.l.b16 %v1215
      %v1240 = vunpack.c.l.b16 %v1216
      %v1241 = vunpack.c.l.b16 %v1217
      %v1242 = vunpack.c.l.b16 %v1218
      %v1243 = vunpack.c.l.b16 %v1219
      %v1244 = vunpack.c.l.b16 %v1220
      %v1245 = vunpack.c.l.b16 %v1221
      %v1246 = vunpack.c.l.b16 %v1222
      %v1247 = vunpack.c.l.b16 %v1223
      %v1248 = vpack.c.b16 %v1237, %v1236
      %v1249 = vpack.c.b16 %v1239, %v1238
      %v1250 = vpack.c.b16 %v1241, %v1240
      %v1251 = vpack.c.b16 %v1243, %v1242
      %v1252 = vpack.c.b16 %v1245, %v1244
      %v1253 = vpack.c.b16 %v1247, %v1246
      %vm1260 = vcmask 785408
      %v1261 = vsel %vm1260, %v1120, 0
      %v1263 = vsel %vm1260, %v1122, 0
      %v1265 = vsel %vm1260, %v1124, 0
      %v1267 = vsel %vm1260, %v1126, 0
      %v1269 = vsel %vm1260, %v1128, 0
      %v1271 = vsel %vm1260, %v1130, 0
      %v1273 = vsel %vm1260, %v1132, 0
      %v1275 = vsel %vm1260, %v1210, 0
      %1277 = vmatpush.bf16.msra.mxu0 0
      %1278 = vmatpush.bf16.msra.mxu0 0
      %1279 = vmatpush.bf16.msra.mxu0 %v1253
      %1280 = vmatpush.bf16.msra.mxu0 %v1252
      %1281 = vmatpush.bf16.msra.mxu0 %v1251
      %1282 = vmatpush.bf16.msra.mxu0 %v1250
      %1283 = vmatpush.bf16.msra.mxu0 %v1249
      %1284 = vmatpush.bf16.msra.mxu0 %v1248
      %1285 = vmatmul.bf16.gmra.mxu0 %v1261
      %v1286 = vpop.f32.mrf.mxu0
      %v1287 = vadd.f32 0.0, %v1286
      %v1288 = vpop.f32.mrf.mxu0
      %v1289 = vadd.f32 0.0, %v1288
      %1290 = vmatmul.bf16.gmra.mxu0 %v1263
      %v1291 = vpop.f32.mrf.mxu0
      %v1292 = vadd.f32 0.0, %v1291
      %v1293 = vpop.f32.mrf.mxu0
      %v1294 = vadd.f32 0.0, %v1293
      %1295 = vmatmul.bf16.gmra.mxu0 %v1265
      %v1296 = vpop.f32.mrf.mxu0
      %v1297 = vadd.f32 0.0, %v1296
      %v1298 = vpop.f32.mrf.mxu0
      %v1299 = vadd.f32 0.0, %v1298
      %1300 = vmatmul.bf16.gmra.mxu0 %v1267
      %v1301 = vpop.f32.mrf.mxu0
      %v1302 = vadd.f32 0.0, %v1301
      %v1303 = vpop.f32.mrf.mxu0
      %v1304 = vadd.f32 0.0, %v1303
      %1305 = vmatmul.bf16.gmra.mxu0 %v1269
      %v1306 = vpop.f32.mrf.mxu0
      %v1307 = vadd.f32 0.0, %v1306
      %v1308 = vpop.f32.mrf.mxu0
      %v1309 = vadd.f32 0.0, %v1308
      %1310 = vmatmul.bf16.gmra.mxu0 %v1271
      %v1311 = vpop.f32.mrf.mxu0
      %v1312 = vadd.f32 0.0, %v1311
      %v1313 = vpop.f32.mrf.mxu0
      %v1314 = vadd.f32 0.0, %v1313
      %1315 = vmatmul.bf16.gmra.mxu0 %v1273
      %v1316 = vpop.f32.mrf.mxu0
      %v1317 = vadd.f32 0.0, %v1316
      %v1318 = vpop.f32.mrf.mxu0
      %v1319 = vadd.f32 0.0, %v1318
      %1320 = vmatmul.bf16.gmra.mxu0 %v1275
      %v1321 = vpop.f32.mrf.mxu0
      %v1322 = vadd.f32 0.0, %v1321
      %v1323 = vpop.f32.mrf.mxu0
      %v1324 = vadd.f32 0.0, %v1323
      %1325 = vdwg.mxu0
      %v1338 = vunpack.c.l.b16 %v1133
      %v1339 = vunpack.c.l.b16 %v1134
      %v1340 = vunpack.c.l.b16 %v1135
      %v1341 = vunpack.c.l.b16 %v1136
      %v1342 = vunpack.c.l.b16 %v1137
      %v1343 = vunpack.c.l.b16 %v1138
      %v1344 = vunpack.c.l.b16 %v1139
      %v1345 = vunpack.c.l.b16 %v1140
      %v1346 = vunpack.c.l.b16 %v1141
      %v1347 = vunpack.c.l.b16 %v1142
      %v1348 = vunpack.c.l.b16 %v1143
      %v1349 = vunpack.c.l.b16 %v1144
      %v1350 = vpack.c.b16 %v1339, %v1338
      %v1351 = vpack.c.b16 %v1341, %v1340
      %v1352 = vpack.c.b16 %v1343, %v1342
      %v1353 = vpack.c.b16 %v1345, %v1344
      %v1354 = vpack.c.b16 %v1347, %v1346
      %v1355 = vpack.c.b16 %v1349, %v1348
      %v1362 = vsel %vm1260, %v1118, 0
      %1364 = vmatpush.bf16.msra.mxu0 0
      %1365 = vmatpush.bf16.msra.mxu0 0
      %1366 = vmatpush.bf16.msra.mxu0 %v1355
      %1367 = vmatpush.bf16.msra.mxu0 %v1354
      %1368 = vmatpush.bf16.msra.mxu0 %v1353
      %1369 = vmatpush.bf16.msra.mxu0 %v1352
      %1370 = vmatpush.bf16.msra.mxu0 %v1351
      %1371 = vmatpush.bf16.msra.mxu0 %v1350
      %1372 = vmatmul.bf16.gmra.mxu0 %v1362
      %v1373 = vpop.f32.mrf.mxu0
      %v1374 = vadd.f32 %v1287, %v1373
      %v1375 = vpop.f32.mrf.mxu0
      %v1376 = vadd.f32 %v1289, %v1375
      %1377 = vmatmul.bf16.gmra.mxu0 %v1261
      %v1378 = vpop.f32.mrf.mxu0
      %v1379 = vadd.f32 %v1292, %v1378
      %v1380 = vpop.f32.mrf.mxu0
      %v1381 = vadd.f32 %v1294, %v1380
      %1382 = vmatmul.bf16.gmra.mxu0 %v1263
      %v1383 = vpop.f32.mrf.mxu0
      %v1384 = vadd.f32 %v1297, %v1383
      %v1385 = vpop.f32.mrf.mxu0
      %v1386 = vadd.f32 %v1299, %v1385
      %1387 = vmatmul.bf16.gmra.mxu0 %v1265
      %v1388 = vpop.f32.mrf.mxu0
      %v1389 = vadd.f32 %v1302, %v1388
      %v1390 = vpop.f32.mrf.mxu0
      %v1391 = vadd.f32 %v1304, %v1390
      %1392 = vmatmul.bf16.gmra.mxu0 %v1267
      %v1393 = vpop.f32.mrf.mxu0
      %v1394 = vadd.f32 %v1307, %v1393
      %v1395 = vpop.f32.mrf.mxu0
      %v1396 = vadd.f32 %v1309, %v1395
      %1397 = vmatmul.bf16.gmra.mxu0 %v1269
      %v1398 = vpop.f32.mrf.mxu0
      %v1399 = vadd.f32 %v1312, %v1398
      %v1400 = vpop.f32.mrf.mxu0
      %v1401 = vadd.f32 %v1314, %v1400
      %1402 = vmatmul.bf16.gmra.mxu0 %v1271
      %v1403 = vpop.f32.mrf.mxu0
      %v1404 = vadd.f32 %v1317, %v1403
      %v1405 = vpop.f32.mrf.mxu0
      %v1406 = vadd.f32 %v1319, %v1405
      %1407 = vmatmul.bf16.gmra.mxu0 %v1273
      %v1408 = vpop.f32.mrf.mxu0
      %v1409 = vadd.f32 %v1322, %v1408
      %v1410 = vpop.f32.mrf.mxu0
      %v1411 = vadd.f32 %v1324, %v1410
      %1412 = vdwg.mxu0
      %v1415 = vunpack.c.l.b16 %v589
      %v1416 = vunpack.c.l.b16 %v590
      %v1417 = vpack.c.b16 %v1416, %v1415
      %v1420 = vunpack.c.l.b16 %v595
      %v1421 = vunpack.c.l.b16 %v596
      %v1422 = vpack.c.b16 %v1421, %v1420
      %1423 = vrot.lane.b32.xlu0 %v1422, 16
      %v1424 = vpop.permute.xlu0 %1423
      %v1426 = vunpack.c.l.b16 %v591
      %v1427 = vpack.c.b16 %v1426, %v1426
      %v1429 = vshrl.u32 %v1417, 16
      %v1431 = vshll.u32 %v1417, 16
      %v1433 = vrot.slane %v1431, 1
      %v1434 = vor.u32 %v1429, %v1433
      %v1436 = vshll.u32 %v1427, 16
      %v1438 = vrot.slane %v1436, 1
      %v1439 = vsel %vm718, %v1434, %v1438
      %1440 = vrot.lane.b32.xlu0 %v1439, 32
      %v1441 = vpop.permute.xlu0 %1440
      %v1443 = vunpack.c.l.b16 %v597
      %v1444 = vpack.c.b16 %v1443, %v1443
      %v1446 = vshrl.u32 %v1422, 16
      %v1448 = vshll.u32 %v1422, 16
      %v1450 = vrot.slane %v1448, 1
      %v1451 = vor.u32 %v1446, %v1450
      %v1453 = vshll.u32 %v1444, 16
      %v1455 = vrot.slane %v1453, 1
      %v1456 = vsel %vm718, %v1451, %v1455
      %1457 = vrot.lane.b32.xlu0 %v1456, 48
      %v1458 = vpop.permute.xlu0 %1457
      %v1459 = vrot.slane %v1417, 1
      %v1460 = vrot.slane %v1427, 1
      %v1461 = vsel %vm967, %v1459, %v1460
      %1462 = vrot.lane.b32.xlu0 %v1461, 64
      %v1463 = vpop.permute.xlu0 %1462
      %v1464 = vrot.slane %v1422, 1
      %v1465 = vrot.slane %v1444, 1
      %v1466 = vsel %vm967, %v1464, %v1465
      %1467 = vrot.lane.b32.xlu0 %v1466, 80
      %v1468 = vpop.permute.xlu0 %1467
      %v1470 = vsel %vm1048, %v1417, %v1424
      %v1472 = vsel %vm1065, %v1470, %v1441
      %v1474 = vsel %vm1082, %v1472, %v1458
      %v1476 = vsel %vm1099, %v1474, %v1463
      %v1478 = vsel %vm1116, %v1476, %v1468
      %s1479 = scalar_lea.vmem %s519, 96
      %v1480 = vld [vmem:[%s1479] sm:$0xf]
      %v1481 = vld [vmem:[%s1479 + $0x4] sm:$0xf]
      %v1482 = vld [vmem:[%s1479 + $0x8] sm:$0xf]
      %v1483 = vld [vmem:[%s1479 + $0xc] sm:$0xf]
      %v1484 = vld [vmem:[%s1479 + $0x10] sm:$0xf]
      %v1485 = vld [vmem:[%s1479 + $0x14] sm:$0xf]
      %v1486 = vld [vmem:[%s1479 + $0x18] sm:$0xf]
      %v1487 = vld [vmem:[%s1479 + $0x1c] sm:$0xf]
      %v1488 = vld [vmem:[%s1479 + $0x20] sm:$0xf]
      %v1489 = vld [vmem:[%s1479 + $0x24] sm:$0xf]
      %v1490 = vld [vmem:[%s1479 + $0x28] sm:$0xf]
      %v1491 = vld [vmem:[%s1479 + $0x2c] sm:$0xf]
      %v1504 = vunpack.c.l.b16 %v1480
      %v1505 = vunpack.c.l.b16 %v1481
      %v1506 = vunpack.c.l.b16 %v1482
      %v1507 = vunpack.c.l.b16 %v1483
      %v1508 = vunpack.c.l.b16 %v1484
      %v1509 = vunpack.c.l.b16 %v1485
      %v1510 = vunpack.c.l.b16 %v1486
      %v1511 = vunpack.c.l.b16 %v1487
      %v1512 = vunpack.c.l.b16 %v1488
      %v1513 = vunpack.c.l.b16 %v1489
      %v1514 = vunpack.c.l.b16 %v1490
      %v1515 = vunpack.c.l.b16 %v1491
      %v1516 = vpack.c.b16 %v1505, %v1504
      %v1517 = vpack.c.b16 %v1507, %v1506
      %v1518 = vpack.c.b16 %v1509, %v1508
      %v1519 = vpack.c.b16 %v1511, %v1510
      %v1520 = vpack.c.b16 %v1513, %v1512
      %v1521 = vpack.c.b16 %v1515, %v1514
      %v1528 = vsel %vm1260, %v1478, 0
      %1530 = vmatpush.bf16.msra.mxu0 0
      %1531 = vmatpush.bf16.msra.mxu0 0
      %1532 = vmatpush.bf16.msra.mxu0 %v1521
      %1533 = vmatpush.bf16.msra.mxu0 %v1520
      %1534 = vmatpush.bf16.msra.mxu0 %v1519
      %1535 = vmatpush.bf16.msra.mxu0 %v1518
      %1536 = vmatpush.bf16.msra.mxu0 %v1517
      %1537 = vmatpush.bf16.msra.mxu0 %v1516
      %1538 = vmatmul.bf16.gmra.mxu0 %v1263
      %v1539 = vpop.f32.mrf.mxu0
      %v1540 = vadd.f32 0.0, %v1539
      %v1541 = vpop.f32.mrf.mxu0
      %v1542 = vadd.f32 0.0, %v1541
      %1543 = vmatmul.bf16.gmra.mxu0 %v1265
      %v1544 = vpop.f32.mrf.mxu0
      %v1545 = vadd.f32 0.0, %v1544
      %v1546 = vpop.f32.mrf.mxu0
      %v1547 = vadd.f32 0.0, %v1546
      %1548 = vmatmul.bf16.gmra.mxu0 %v1267
      %v1549 = vpop.f32.mrf.mxu0
      %v1550 = vadd.f32 0.0, %v1549
      %v1551 = vpop.f32.mrf.mxu0
      %v1552 = vadd.f32 0.0, %v1551
      %1553 = vmatmul.bf16.gmra.mxu0 %v1269
      %v1554 = vpop.f32.mrf.mxu0
      %v1555 = vadd.f32 0.0, %v1554
      %v1556 = vpop.f32.mrf.mxu0
      %v1557 = vadd.f32 0.0, %v1556
      %1558 = vmatmul.bf16.gmra.mxu0 %v1271
      %v1559 = vpop.f32.mrf.mxu0
      %v1560 = vadd.f32 0.0, %v1559
      %v1561 = vpop.f32.mrf.mxu0
      %v1562 = vadd.f32 0.0, %v1561
      %1563 = vmatmul.bf16.gmra.mxu0 %v1273
      %v1564 = vpop.f32.mrf.mxu0
      %v1565 = vadd.f32 0.0, %v1564
      %v1566 = vpop.f32.mrf.mxu0
      %v1567 = vadd.f32 0.0, %v1566
      %1568 = vmatmul.bf16.gmra.mxu0 %v1275
      %v1569 = vpop.f32.mrf.mxu0
      %v1570 = vadd.f32 0.0, %v1569
      %v1571 = vpop.f32.mrf.mxu0
      %v1572 = vadd.f32 0.0, %v1571
      %1573 = vmatmul.bf16.gmra.mxu0 %v1528
      %v1574 = vpop.f32.mrf.mxu0
      %v1575 = vadd.f32 0.0, %v1574
      %v1576 = vpop.f32.mrf.mxu0
      %v1577 = vadd.f32 0.0, %v1576
      %1578 = vdwg.mxu0
      %v1579 = vadd.f32 %v1374, %v1540
      %v1580 = vadd.f32 %v1376, %v1542
      %v1581 = vadd.f32 %v1379, %v1545
      %v1582 = vadd.f32 %v1381, %v1547
      %v1583 = vadd.f32 %v1384, %v1550
      %v1584 = vadd.f32 %v1386, %v1552
      %v1585 = vadd.f32 %v1389, %v1555
      %v1586 = vadd.f32 %v1391, %v1557
      %v1587 = vadd.f32 %v1394, %v1560
      %v1588 = vadd.f32 %v1396, %v1562
      %v1589 = vadd.f32 %v1399, %v1565
      %v1590 = vadd.f32 %v1401, %v1567
      %v1591 = vadd.f32 %v1404, %v1570
      %v1592 = vadd.f32 %v1406, %v1572
      %v1593 = vadd.f32 %v1409, %v1575
      %v1594 = vadd.f32 %v1411, %v1577
      %v1595 = vld [vmem:[%s522] sm:$0x1]
      %v1597 = vperm.slane %v1595, 0
      %v1599 = vadd.f32 %v1579, %v1597
      %v1600 = vadd.f32 %v1580, %v1597
      %v1601 = vadd.f32 %v1581, %v1597
      %v1602 = vadd.f32 %v1582, %v1597
      %v1603 = vadd.f32 %v1583, %v1597
      %v1604 = vadd.f32 %v1584, %v1597
      %v1605 = vadd.f32 %v1585, %v1597
      %v1606 = vadd.f32 %v1586, %v1597
      %v1607 = vadd.f32 %v1587, %v1597
      %v1608 = vadd.f32 %v1588, %v1597
      %v1609 = vadd.f32 %v1589, %v1597
      %v1610 = vadd.f32 %v1590, %v1597
      %v1611 = vadd.f32 %v1591, %v1597
      %v1612 = vadd.f32 %v1592, %v1597
      %v1613 = vadd.f32 %v1593, %v1597
      %v1614 = vadd.f32 %v1594, %v1597
      %v1615 = vmax.f32 %v1599, 0.0
      %v1616 = vmax.f32 %v1600, 0.0
      %v1617 = vmax.f32 %v1601, 0.0
      %v1618 = vmax.f32 %v1602, 0.0
      %v1619 = vmax.f32 %v1603, 0.0
      %v1620 = vmax.f32 %v1604, 0.0
      %v1621 = vmax.f32 %v1605, 0.0
      %v1622 = vmax.f32 %v1606, 0.0
      %v1623 = vmax.f32 %v1607, 0.0
      %v1624 = vmax.f32 %v1608, 0.0
      %v1625 = vmax.f32 %v1609, 0.0
      %v1626 = vmax.f32 %v1610, 0.0
      %v1627 = vmax.f32 %v1611, 0.0
      %v1628 = vmax.f32 %v1612, 0.0
      %v1629 = vmax.f32 %v1613, 0.0
      %v1630 = vmax.f32 %v1614, 0.0
      %v1631 = vpack.c.bf16 %v1615, %v1615
      %v1632 = vpack.c.bf16 %v1616, %v1616
      %v1633 = vpack.c.bf16 %v1617, %v1617
      %v1634 = vpack.c.bf16 %v1618, %v1618
      %v1635 = vpack.c.bf16 %v1619, %v1619
      %v1636 = vpack.c.bf16 %v1620, %v1620
      %v1637 = vpack.c.bf16 %v1621, %v1621
      %v1638 = vpack.c.bf16 %v1622, %v1622
      %v1639 = vpack.c.bf16 %v1623, %v1623
      %v1640 = vpack.c.bf16 %v1624, %v1624
      %v1641 = vpack.c.bf16 %v1625, %v1625
      %v1642 = vpack.c.bf16 %v1626, %v1626
      %v1643 = vpack.c.bf16 %v1627, %v1627
      %v1644 = vpack.c.bf16 %v1628, %v1628
      %v1645 = vpack.c.bf16 %v1629, %v1629
      %v1646 = vpack.c.bf16 %v1630, %v1630
      %1647 = vst [vmem:[%s535] sm:$0xf] %v1631
      %1648 = vst [vmem:[%s535 + $0x4] sm:$0xf] %v1632
      %1649 = vst [vmem:[%s535 + $0x8] sm:$0xf] %v1633
      %1650 = vst [vmem:[%s535 + $0xc] sm:$0xf] %v1634
      %1651 = vst [vmem:[%s535 + $0x10] sm:$0xf] %v1635
      %1652 = vst [vmem:[%s535 + $0x14] sm:$0xf] %v1636
      %1653 = vst [vmem:[%s535 + $0x18] sm:$0xf] %v1637
      %1654 = vst [vmem:[%s535 + $0x1c] sm:$0xf] %v1638
      %1655 = vst [vmem:[%s535 + $0x20] sm:$0xf] %v1639
      %1656 = vst [vmem:[%s535 + $0x24] sm:$0xf] %v1640
      %1657 = vst [vmem:[%s535 + $0x28] sm:$0xf] %v1641
      %1658 = vst [vmem:[%s535 + $0x2c] sm:$0xf] %v1642
      %1659 = vst [vmem:[%s535 + $0x30] sm:$0xf] %v1643
      %1660 = vst [vmem:[%s535 + $0x34] sm:$0xf] %v1644
      %1661 = vst [vmem:[%s535 + $0x38] sm:$0xf] %v1645
      %1662 = vst [vmem:[%s535 + $0x3c] sm:$0xf] %v1646
      %s1663 = smul.u32 8, %s23
      %p1664 = scmp.lt.s32.totalorder %s22, 1
      %s1665 = scalar_select %p1664, %s22, 1
      %p1666 = scmp.lt.s32.totalorder %s1663, 15
      %s1667 = scalar_select %p1666, %s1663, 15
      %p1668 = scmp.lt.s32.totalorder %s24, 0
      %s1669 = scalar_select %p1668, %s24, 0
      %s1670 = smul.addr %s1667, 2
      %s1671 = sadd.s32 %s1669, %s1670
      %s1672 = smul.addr %s1665, 32
      %s1673 = sadd.s32 %s1671, %s1672
      %s1674 = smul.addr %s1673, 4
      %s1675 = scalar_lea.vmem %s6, %s1674
      // Predicated region
      $region45: #{upsample_block_forward.4} parent=43 // pred_check
        %p1676 = pneg %p230
      $region46: #{upsample_block_forward.4} parent=43 // pred_check_branch
        %1678 = sbr.rel (%p1676) target = $region48
      $region47: #{upsample_block_forward.4} parent=43 // pred_region
        %s1679 = smul.u32 8, %s23
      $region48: #{upsample_block_forward.4} parent=43 // pred_fallthru
        _
    $region44: #{upsample_block_forward.4} parent=5 // pred_fallthru
      _
    %p1680 = scmp.le.s32.totalorder 2, %s12
    // Predicated region
    $region49: #{upsample_block_forward.4} parent=5 // pred_check
      %p1681 = pneg %p1680
    $region50: #{upsample_block_forward.4} parent=5 // pred_check_branch
      %1683 = sbr.rel (%p1681) target = $region52
    $region51: #{upsample_block_forward.4} parent=5 // pred_region
      %s1684 = ssub.s32 %s12, 2
      // Predicated region
      $region53: #{upsample_block_forward.4} parent=51 // pred_check
        %p1685 = pneg %p236
      $region54: #{upsample_block_forward.4} parent=51 // pred_check_branch
        %1687 = sbr.rel (%p1685) target = $region56
      $region55: #{upsample_block_forward.4} parent=51 // pred_region
        %s1688 = smul.u32 8, %s26
        %p1689 = scmp.lt.s32.totalorder %s25, 1
        %s1690 = scalar_select %p1689, %s25, 1
        %p1691 = scmp.lt.s32.totalorder %s1688, 15
        %s1692 = scalar_select %p1691, %s1688, 15
        %p1693 = scmp.lt.s32.totalorder %s27, 0
        %s1694 = scalar_select %p1693, %s27, 0
        %s1695 = smul.addr %s1692, 2
        %s1696 = sadd.s32 %s1694, %s1695
        %s1697 = smul.addr %s1690, 32
        %s1698 = sadd.s32 %s1696, %s1697
        %s1699 = smul.addr %s1698, 4
        %s1700 = scalar_lea.vmem %s6, %s1699
      $region56: #{upsample_block_forward.4} parent=51 // pred_fallthru
        _
    $region52: #{upsample_block_forward.4} parent=5 // pred_fallthru
      _
  $region6: #{upsample_block_forward.4} parent=0 // loop_footer
    %s16 = sadd.s32 1, %s12
  $region7: #{upsample_block_forward.4} parent=0 // loop_footer_branch
    %11 = sbr.rel target = $region3
  $region8: #{upsample_block_forward.4} parent=0 // loop_exit
    _

// kernel: upsample_block_forward.5
$region0: #{upsample_block_forward.5}
  #allocation0 [shape = 'u32[]', space=smem, size = 0x4, offset = 0x4, fixed_abs, tag = 'smem constant byte address 0x4 - core index']
  #allocation1 [shape = 'u32[72,128]{1,0:T(1,128)}', space=vmem, size = 0x9000, scoped, tag = 'internal scratch']
  %s0 = inlined_call_operand.vmem [shape: bf16[2,18,18,128], index: 0, kind: input, shape index: {}, may-alias: {0,1}]
  %s1 = inlined_call_operand.vmem [shape: bf16[2,18,18,128], index: 1, kind: input, shape index: {}, may-alias: {0,1}]
  %s2 = inlined_call_operand.vmem [shape: bf16[3,384,128], index: 2, kind: input, shape index: {}]
  %s3 = inlined_call_operand.vmem [shape: f32[1,128], index: 3, kind: input, shape index: {}]
  %s4 = inlined_call_operand.vmem [shape: f32[2,16,16,128], index: 4, kind: output, shape index: {}]
  %s5 = sld [smem:[#allocation0]]
  $region49: #{upsample_block_forward.5} parent=0
    _
  %s7 = ssub.s32 1, %s5
  %s8 = scalar_select 0, %s7, %s5
  loop: start=0, step=1, limit=6
  $region2: #{upsample_block_forward.5} parent=0 // loop_pre_header
    _
  $region3: #{upsample_block_forward.5} parent=0 // loop_header
    %s10 = sphi 0, %s14
    %p11 = scmp.ge.s32.totalorder %s10, 6
    %s17 = sphi 0, %s36
    %s18 = sphi 0, %s32
    %s19 = sphi 0, %s28
    %s20 = sphi 0, %s17
    %s21 = sphi 0, %s18
    %s22 = sphi 0, %s19
    %s23 = sphi 0, %s20
    %s24 = sphi 0, %s21
    %s25 = sphi 0, %s22
    %s41 = sphi 0, %s43
    %s44 = sphi 0, %s41
    %s45 = sphi 0, %s44
    %s61 = sphi 0, %s45
    %s73 = sphi 0, %s75
    %s76 = sphi 0, %s73
    %s77 = sphi 0, %s76
    %s93 = sphi 0, %s77
    %s99 = sphi 0, %s101
    %s102 = sphi 0, %s99
    %s103 = sphi 0, %s102
    %s119 = sphi 0, %s103
    %s125 = sphi 0, %s127
    %s128 = sphi 0, %s125
    %s129 = sphi 0, %s128
    %s145 = sphi 0, %s129
    %s155 = sphi 0, %s157
    %s158 = sphi 0, %s155
    %s159 = sphi 0, %s158
    %s175 = sphi 0, %s159
  $region4: #{upsample_block_forward.5} parent=0 // loop_header_branch
    %13 = sbr.rel (%p11) target = $region8
  $region5: #{upsample_block_forward.5} parent=0 // loop_body
    %s15 = ssub.s32 %s10, 1
    %s16 = ssub.s32 %s10, 2
    %s26 = sadd.s32 1, %s19
    %p27 = scmp.ge.s32.totalorder %s26, 1
    %s28 = scalar_select %p27, 0, %s26
    %s29 = sadd.s32 1, %s18
    %s30 = scalar_select %p27, %s29, %s18
    %p31 = scmp.ge.s32.totalorder %s30, 2
    %s32 = scalar_select %p31, 0, %s30
    %s33 = sadd.s32 1, %s17
    %s34 = scalar_select %p31, %s33, %s17
    %p35 = scmp.ge.s32.totalorder %s34, 2
    %s36 = scalar_select %p35, 0, %s34
    %s37 = ssub.s32 %s17, %s36
    %s38 = ssub.s32 %s18, %s32
    %s39 = sor.u32 %s37, %s38
    %p40 = scmp.eq.s32.totalorder %s39, 0
    %s42 = sadd.s32 %s41, 1
    %s43 = scalar_select %p40, %s41, %s42
    %p46 = pneg %p40
    %p47 = scmp.eq.s32.totalorder %s10, 3
    %p48 = por %p46, %p47
    %p49 = scmp.ne.s32.totalorder %s41, %s44
    %p50 = scmp.eq.s32.totalorder %s10, 0
    %p51 = por %p49, %p50
    %p52 = scmp.ne.s32.totalorder %s41, %s44
    %p53 = scmp.eq.s32.totalorder %s15, 3
    %p54 = por %p52, %p53
    %p55 = scmp.ne.s32.totalorder %s44, %s45
    %p56 = scmp.eq.s32.totalorder %s15, 0
    %p57 = por %p55, %p56
    %p58 = scmp.ne.s32.totalorder %s44, %s45
    %p59 = scmp.eq.s32.totalorder %s16, 3
    %p60 = por %p58, %p59
    %p62 = scmp.ne.s32.totalorder %s45, %s61
    %p63 = scmp.eq.s32.totalorder %s16, 0
    %p64 = por %p62, %p63
    %s65 = sadd.s32 %s18, 1
    %s66 = smul.u32 %s65, 4
    %s67 = sadd.s32 %s32, 1
    %s68 = smul.u32 %s67, 4
    %s69 = ssub.s32 %s17, %s36
    %s70 = ssub.s32 %s66, %s68
    %s71 = sor.u32 %s69, %s70
    %p72 = scmp.eq.s32.totalorder %s71, 0
    %s74 = sadd.s32 %s73, 1
    %s75 = scalar_select %p72, %s73, %s74
    %p78 = pneg %p72
    %p79 = scmp.eq.s32.totalorder %s10, 3
    %p80 = por %p78, %p79
    %p81 = scmp.ne.s32.totalorder %s73, %s76
    %p82 = scmp.eq.s32.totalorder %s10, 0
    %p83 = por %p81, %p82
    %p84 = scmp.ne.s32.totalorder %s73, %s76
    %p85 = scmp.eq.s32.totalorder %s15, 3
    %p86 = por %p84, %p85
    %p87 = scmp.ne.s32.totalorder %s76, %s77
    %p88 = scmp.eq.s32.totalorder %s15, 0
    %p89 = por %p87, %p88
    %p90 = scmp.ne.s32.totalorder %s76, %s77
    %p91 = scmp.eq.s32.totalorder %s16, 3
    %p92 = por %p90, %p91
    %p94 = scmp.ne.s32.totalorder %s77, %s93
    %p95 = scmp.eq.s32.totalorder %s16, 0
    %p96 = por %p94, %p95
    %s97 = ssub.s32 %s19, %s28
    %p98 = scmp.eq.s32.totalorder %s97, 0
    %s100 = sadd.s32 %s99, 1
    %s101 = scalar_select %p98, %s99, %s100
    %p104 = pneg %p98
    %p105 = scmp.eq.s32.totalorder %s10, 3
    %p106 = por %p104, %p105
    %p107 = scmp.ne.s32.totalorder %s99, %s102
    %p108 = scmp.eq.s32.totalorder %s10, 0
    %p109 = por %p107, %p108
    %p110 = scmp.ne.s32.totalorder %s99, %s102
    %p111 = scmp.eq.s32.totalorder %s15, 3
    %p112 = por %p110, %p111
    %p113 = scmp.ne.s32.totalorder %s102, %s103
    %p114 = scmp.eq.s32.totalorder %s15, 0
    %p115 = por %p113, %p114
    %p116 = scmp.ne.s32.totalorder %s102, %s103
    %p117 = scmp.eq.s32.totalorder %s16, 3
    %p118 = por %p116, %p117
    %p120 = scmp.ne.s32.totalorder %s103, %s119
    %p121 = scmp.eq.s32.totalorder %s16, 0
    %p122 = por %p120, %p121
    %s123 = ssub.s32 %s19, %s28
    %p124 = scmp.eq.s32.totalorder %s123, 0
    %s126 = sadd.s32 %s125, 1
    %s127 = scalar_select %p124, %s125, %s126
    %p130 = pneg %p124
    %p131 = scmp.eq.s32.totalorder %s10, 3
    %p132 = por %p130, %p131
    %p133 = scmp.ne.s32.totalorder %s125, %s128
    %p134 = scmp.eq.s32.totalorder %s10, 0
    %p135 = por %p133, %p134
    %p136 = scmp.ne.s32.totalorder %s125, %s128
    %p137 = scmp.eq.s32.totalorder %s15, 3
    %p138 = por %p136, %p137
    %p139 = scmp.ne.s32.totalorder %s128, %s129
    %p140 = scmp.eq.s32.totalorder %s15, 0
    %p141 = por %p139, %p140
    %p142 = scmp.ne.s32.totalorder %s128, %s129
    %p143 = scmp.eq.s32.totalorder %s16, 3
    %p144 = por %p142, %p143
    %p146 = scmp.ne.s32.totalorder %s129, %s145
    %p147 = scmp.eq.s32.totalorder %s16, 0
    %p148 = por %p146, %p147
    %s149 = ssub.s32 %s17, %s36
    %s150 = ssub.s32 %s18, %s32
    %s151 = sor.u32 %s149, %s150
    %s152 = ssub.s32 %s19, %s28
    %s153 = sor.u32 %s151, %s152
    %p154 = scmp.eq.s32.totalorder %s153, 0
    %s156 = sadd.s32 %s155, 1
    %s157 = scalar_select %p154, %s155, %s156
    %p160 = pneg %p154
    %p161 = scmp.eq.s32.totalorder %s10, 3
    %p162 = por %p160, %p161
    %p163 = scmp.ne.s32.totalorder %s155, %s158
    %p164 = scmp.eq.s32.totalorder %s10, 0
    %p165 = por %p163, %p164
    %p166 = scmp.ne.s32.totalorder %s155, %s158
    %p167 = scmp.eq.s32.totalorder %s15, 3
    %p168 = por %p166, %p167
    %p169 = scmp.ne.s32.totalorder %s158, %s159
    %p170 = scmp.eq.s32.totalorder %s15, 0
    %p171 = por %p169, %p170
    %p172 = scmp.ne.s32.totalorder %s158, %s159
    %p173 = scmp.eq.s32.totalorder %s16, 3
    %p174 = por %p172, %p173
    %p176 = scmp.ne.s32.totalorder %s159, %s175
    %p177 = scmp.eq.s32.totalorder %s16, 0
    %p178 = por %p176, %p177
    %p179 = scmp.le.s32.totalorder 1, %s10
    %p180 = scmp.lt.s32.totalorder %s10, 5
    %p181 = pnand %p179, %p180
    %p182 = pneg %p181
    // Predicated region
    $region9: #{upsample_block_forward.5} parent=5 // pred_check
      _
    $region10: #{upsample_block_forward.5} parent=5 // pred_check_branch
      %184 = sbr.rel (%p181) target = $region12
    $region11: #{upsample_block_forward.5} parent=5 // pred_region
      %s185 = ssub.s32 %s10, 1
      // Predicated region
      $region13: #{upsample_block_forward.5} parent=11 // pred_check
        %p186 = pneg %p115
      $region14: #{upsample_block_forward.5} parent=11 // pred_check_branch
        %188 = sbr.rel (%p186) target = $region16
      $region15: #{upsample_block_forward.5} parent=11 // pred_region
        %p189 = scmp.lt.s32.totalorder %s22, 0
        %s190 = scalar_select %p189, %s22, 0
        %s191 = smul.addr %s190, 4
        %s192 = scalar_lea.vmem %s2, %s191
      $region16: #{upsample_block_forward.5} parent=11 // pred_fallthru
        _
      // Predicated region
      $region17: #{upsample_block_forward.5} parent=11 // pred_check
        %p193 = pneg %p141
      $region18: #{upsample_block_forward.5} parent=11 // pred_check_branch
        %195 = sbr.rel (%p193) target = $region20
      $region19: #{upsample_block_forward.5} parent=11 // pred_region
        %p196 = scmp.lt.s32.totalorder %s22, 0
        %s197 = scalar_select %p196, %s22, 0
        %s198 = scalar_lea.vmem %s3, %s197
      $region20: #{upsample_block_forward.5} parent=11 // pred_fallthru
        _
    $region12: #{upsample_block_forward.5} parent=5 // pred_fallthru
      _
    %p199 = scmp.lt.s32.totalorder %s10, 4
    // Predicated region
    $region21: #{upsample_block_forward.5} parent=5 // pred_check
      %p200 = pneg %p199
    $region22: #{upsample_block_forward.5} parent=5 // pred_check_branch
      %202 = sbr.rel (%p200) target = $region24
    $region23: #{upsample_block_forward.5} parent=5 // pred_region
      // Predicated region
      $region25: #{upsample_block_forward.5} parent=23 // pred_check
        %p203 = pneg %p51
      $region26: #{upsample_block_forward.5} parent=23 // pred_check_branch
        %205 = sbr.rel (%p203) target = $region28
      $region27: #{upsample_block_forward.5} parent=23 // pred_region
        %s206 = smul.u32 8, %s18
        %s207 = ssub.s32 18, %s206
        %p208 = scmp.lt.s32.totalorder %s207, 8
        %s209 = scalar_select %p208, %s207, 8
        %s210 = smul.u32 4, %s209
        %s211 = smul.u32 %s210, 3
        %p212 = scmp.lt.s32.totalorder %s17, 1
        %s213 = scalar_select %p212, %s17, 1
        %p214 = scmp.lt.s32.totalorder %s206, 17
        %s215 = scalar_select %p214, %s206, 17
        %s216 = smul.addr %s215, 3
        %s217 = smul.addr %s213, 54
        %s218 = sadd.s32 %s216, %s217
        %s219 = smul.addr %s218, 4
        %s220 = scalar_lea.vmem %s0, %s219
        %s221 = smul.u32 8, %s18
        %s222 = ssub.s32 18, %s221
        %p223 = scmp.lt.s32.totalorder %s222, 8
        %s224 = scalar_select %p223, %s222, 8
        %s225 = smul.u32 4, %s224
        %s226 = smul.u32 %s225, 3
      $region28: #{upsample_block_forward.5} parent=23 // pred_fallthru
        _
      // Predicated region
      $region29: #{upsample_block_forward.5} parent=23 // pred_check
        %p227 = pneg %p83
      $region30: #{upsample_block_forward.5} parent=23 // pred_check_branch
        %229 = sbr.rel (%p227) target = $region32
      $region31: #{upsample_block_forward.5} parent=23 // pred_region
        %s230 = sadd.s32 %s18, 1
        %s231 = smul.u32 %s230, 4
        %s232 = smul.u32 2, %s231
        %p233 = scmp.lt.s32.totalorder %s17, 1
        %s234 = scalar_select %p233, %s17, 1
        %p235 = scmp.lt.s32.totalorder %s232, 17
        %s236 = scalar_select %p235, %s232, 17
        %s237 = smul.addr %s236, 3
        %s238 = smul.addr %s234, 54
        %s239 = sadd.s32 %s237, %s238
        %s240 = smul.addr %s239, 4
        %s241 = scalar_lea.vmem %s1, %s240
        %s242 = sadd.s32 %s18, 1
        %s243 = smul.u32 %s242, 4
        %s244 = smul.u32 2, %s243
      $region32: #{upsample_block_forward.5} parent=23 // pred_fallthru
        _
    $region24: #{upsample_block_forward.5} parent=5 // pred_fallthru
      _
    %p245 = scmp.le.s32.totalorder 1, %s10
    %p246 = scmp.lt.s32.totalorder %s10, 5
    %p247 = pnand %p245, %p246
    %p248 = pneg %p247
    // Predicated region
    $region33: #{upsample_block_forward.5} parent=5 // pred_check
      _
    $region34: #{upsample_block_forward.5} parent=5 // pred_check_branch
      %250 = sbr.rel (%p247) target = $region36
    $region35: #{upsample_block_forward.5} parent=5 // pred_region
      %s251 = ssub.s32 %s10, 1
      %s252 = smul.u32 8, %s21
      %s253 = ssub.s32 18, %s252
      %p254 = scmp.lt.s32.totalorder %s253, 8
      %s255 = scalar_select %p254, %s253, 8
      %s256 = smul.u32 4, %s255
      %s257 = smul.u32 %s256, 3
      %p258 = scmp.lt.s32.totalorder %s20, 1
      %s259 = scalar_select %p258, %s20, 1
      %p260 = scmp.lt.s32.totalorder %s252, 17
      %s261 = scalar_select %p260, %s252, 17
      %s262 = smul.addr %s261, 3
      %s263 = smul.addr %s259, 54
      %s264 = sadd.s32 %s262, %s263
      %s265 = smul.addr %s264, 4
      %s266 = scalar_lea.vmem %s0, %s265
      %p267 = pneg %p57
      %p268 = pneg %p54
      %s269 = sadd.s32 %s21, 1
      %s270 = smul.u32 %s269, 4
      %s271 = smul.u32 2, %s270
      %p272 = scmp.lt.s32.totalorder %s20, 1
      %s273 = scalar_select %p272, %s20, 1
      %p274 = scmp.lt.s32.totalorder %s271, 17
      %s275 = scalar_select %p274, %s271, 17
      %s276 = smul.addr %s275, 3
      %s277 = smul.addr %s273, 54
      %s278 = sadd.s32 %s276, %s277
      %s279 = smul.addr %s278, 4
      %s280 = scalar_lea.vmem %s1, %s279
      %p281 = pneg %p89
      %p282 = pneg %p86
      %p283 = scmp.lt.s32.totalorder %s22, 0
      %s284 = scalar_select %p283, %s22, 0
      %s285 = smul.addr %s284, 4
      %s286 = scalar_lea.vmem %s2, %s285
      %p287 = pneg %p115
      %p288 = pneg %p112
      %p289 = scmp.lt.s32.totalorder %s22, 0
      %s290 = scalar_select %p289, %s22, 0
      %s291 = scalar_lea.vmem %s3, %s290
      %p292 = pneg %p141
      %p293 = pneg %p138
      %p294 = pneg %p171
      %p295 = pneg %p168
      %s296 = smul.u32 8, %s21
      %p297 = scmp.lt.s32.totalorder %s20, 1
      %s298 = scalar_select %p297, %s20, 1
      %p299 = scmp.lt.s32.totalorder %s296, 15
      %s300 = scalar_select %p299, %s296, 15
      %p301 = scmp.lt.s32.totalorder %s22, 0
      %s302 = scalar_select %p301, %s22, 0
      %s303 = smul.addr %s300, 2
      %s304 = sadd.s32 %s302, %s303
      %s305 = smul.addr %s298, 32
      %s306 = sadd.s32 %s304, %s305
      %s307 = smul.addr %s306, 8
      %s308 = scalar_lea.vmem %s4, %s307
      %s309 = smul.u32 8, %s21
      %s310 = ssub.s32 18, %s309
      %p311 = scmp.lt.s32.totalorder %s310, 8
      %s312 = scalar_select %p311, %s310, 8
      %s313 = smul.u32 4, %s312
      %s314 = smul.u32 %s313, 3
      %p315 = scmp.lt.s32.totalorder %s20, 1
      %s316 = scalar_select %p315, %s20, 1
      %p317 = scmp.lt.s32.totalorder %s309, 17
      %s318 = scalar_select %p317, %s309, 17
      %s319 = smul.addr %s318, 3
      %s320 = smul.addr %s316, 54
      %s321 = sadd.s32 %s319, %s320
      %s322 = smul.addr %s321, 4
      %s323 = scalar_lea.vmem %s0, %s322
      %s324 = smul.u32 8, %s21
      %s325 = ssub.s32 18, %s324
      %p326 = scmp.lt.s32.totalorder %s325, 8
      %s327 = scalar_select %p326, %s325, 8
      %s328 = smul.u32 4, %s327
      %s329 = smul.u32 %s328, 3
      %s330 = sadd.s32 %s21, 1
      %s331 = smul.u32 %s330, 4
      %s332 = smul.u32 2, %s331
      %p333 = scmp.lt.s32.totalorder %s20, 1
      %s334 = scalar_select %p333, %s20, 1
      %p335 = scmp.lt.s32.totalorder %s332, 17
      %s336 = scalar_select %p335, %s332, 17
      %s337 = smul.addr %s336, 3
      %s338 = smul.addr %s334, 54
      %s339 = sadd.s32 %s337, %s338
      %s340 = smul.addr %s339, 4
      %s341 = scalar_lea.vmem %s1, %s340
      %s342 = sadd.s32 %s21, 1
      %s343 = smul.u32 %s342, 4
      %s344 = smul.u32 2, %s343
      %p345 = scmp.lt.s32.totalorder %s22, 0
      %s346 = scalar_select %p345, %s22, 0
      %s347 = smul.addr %s346, 4
      %s348 = scalar_lea.vmem %s2, %s347
      %p349 = scmp.lt.s32.totalorder %s22, 0
      %s350 = scalar_select %p349, %s22, 0
      %s351 = scalar_lea.vmem %s3, %s350
      %s352 = smul.u32 8, %s21
      %p353 = scmp.lt.s32.totalorder %s20, 1
      %s354 = scalar_select %p353, %s20, 1
      %p355 = scmp.lt.s32.totalorder %s352, 15
      %s356 = scalar_select %p355, %s352, 15
      %p357 = scmp.lt.s32.totalorder %s22, 0
      %s358 = scalar_select %p357, %s22, 0
      %s359 = smul.addr %s356, 2
      %s360 = sadd.s32 %s358, %s359
      %s361 = smul.addr %s354, 32
      %s362 = sadd.s32 %s360, %s361
      %s363 = smul.addr %s362, 8
      %s364 = scalar_lea.vmem %s4, %s363
      %s365 = smul.u32 8, %s21
      %v366 = vld [vmem:[%s323] sm:$0xf]
      %v367 = vld [vmem:[%s323 + $0x4] sm:$0xf]
      %v368 = vld [vmem:[%s323 + $0x8] sm:$0x1]
      %v369 = vld [vmem:[%s323 + $0xc] sm:$0xf]
      %v370 = vld [vmem:[%s323 + $0x10] sm:$0xf]
      %v371 = vld [vmem:[%s323 + $0x14] sm:$0x1]
      %v372 = vld [vmem:[%s323 + $0x18] sm:$0xf]
      %v373 = vld [vmem:[%s323 + $0x1c] sm:$0xf]
      %v374 = vld [vmem:[%s323 + $0x20] sm:$0x1]
      %v375 = vld [vmem:[%s323 + $0x24] sm:$0xf]
      %v376 = vld [vmem:[%s323 + $0x28] sm:$0xf]
      %v377 = vld [vmem:[%s323 + $0x2c] sm:$0x1]
      %v378 = vld [vmem:[%s323 + $0x30] sm:$0xf]
      %v379 = vld [vmem:[%s323 + $0x34] sm:$0xf]
      %v380 = vld [vmem:[%s323 + $0x38] sm:$0x1]
      %v381 = vld [vmem:[%s323 + $0x3c] sm:$0xf]
      %v382 = vld [vmem:[%s323 + $0x40] sm:$0xf]
      %v383 = vld [vmem:[%s323 + $0x44] sm:$0x1]
      %v384 = vld [vmem:[%s323 + $0x48] sm:$0xf]
      %v385 = vld [vmem:[%s323 + $0x4c] sm:$0xf]
      %v386 = vld [vmem:[%s323 + $0x50] sm:$0x1]
      %v387 = vld [vmem:[%s323 + $0x54] sm:$0xf]
      %v388 = vld [vmem:[%s323 + $0x58] sm:$0xf]
      %v389 = vld [vmem:[%s323 + $0x5c] sm:$0x1]
      %v390 = vld [vmem:[%s341] sm:$0xf]
      %v391 = vld [vmem:[%s341 + $0x4] sm:$0xf]
      %v392 = vld [vmem:[%s341 + $0x8] sm:$0x1]
      %v393 = vld [vmem:[%s341 + $0xc] sm:$0xf]
      %v394 = vld [vmem:[%s341 + $0x10] sm:$0xf]
      %v395 = vld [vmem:[%s341 + $0x14] sm:$0x1]
      %v412 = vunpack.c.l.b16 %v366
      %v413 = vunpack.c.l.b16 %v367
      %v414 = vunpack.c.l.b16 %v369
      %v415 = vunpack.c.l.b16 %v370
      %v416 = vunpack.c.l.b16 %v372
      %v417 = vunpack.c.l.b16 %v373
      %v418 = vunpack.c.l.b16 %v375
      %v419 = vunpack.c.l.b16 %v376
      %v420 = vunpack.c.l.b16 %v378
      %v421 = vunpack.c.l.b16 %v379
      %v422 = vunpack.c.l.b16 %v381
      %v423 = vunpack.c.l.b16 %v382
      %v424 = vunpack.c.l.b16 %v384
      %v425 = vunpack.c.l.b16 %v385
      %v426 = vunpack.c.l.b16 %v387
      %v427 = vunpack.c.l.b16 %v388
      %v428 = vpack.c.b16 %v413, %v412
      %v429 = vpack.c.b16 %v415, %v414
      %v430 = vpack.c.b16 %v417, %v416
      %v431 = vpack.c.b16 %v419, %v418
      %v432 = vpack.c.b16 %v421, %v420
      %v433 = vpack.c.b16 %v423, %v422
      %v434 = vpack.c.b16 %v425, %v424
      %v435 = vpack.c.b16 %v427, %v426
      %v452 = vunpack.c.l.b16 %v368
      %v453 = vunpack.c.l.b16 %v371
      %v454 = vunpack.c.l.b16 %v374
      %v455 = vunpack.c.l.b16 %v377
      %v456 = vunpack.c.l.b16 %v380
      %v457 = vunpack.c.l.b16 %v383
      %v458 = vunpack.c.l.b16 %v386
      %v459 = vunpack.c.l.b16 %v389
      %v460 = vpack.c.b16 %v452, %v452
      %v461 = vpack.c.b16 %v453, %v453
      %v462 = vpack.c.b16 %v454, %v454
      %v463 = vpack.c.b16 %v455, %v455
      %v464 = vpack.c.b16 %v456, %v456
      %v465 = vpack.c.b16 %v457, %v457
      %v466 = vpack.c.b16 %v458, %v458
      %v467 = vpack.c.b16 %v459, %v459
      %vm468 = vsmask.f32 7424
      %v470 = vshrl.u32 %v428, 16
      %v472 = vshll.u32 %v428, 16
      %v474 = vrot.slane %v472, 1
      %v475 = vor.u32 %v470, %v474
      %v477 = vshll.u32 %v460, 16
      %v479 = vrot.slane %v477, 1
      %v480 = vsel %vm468, %v475, %v479
      %v482 = vshrl.u32 %v429, 16
      %v484 = vshll.u32 %v429, 16
      %v486 = vrot.slane %v484, 1
      %v487 = vor.u32 %v482, %v486
      %v489 = vshll.u32 %v461, 16
      %v491 = vrot.slane %v489, 1
      %v492 = vsel %vm468, %v487, %v491
      %v494 = vshrl.u32 %v430, 16
      %v496 = vshll.u32 %v430, 16
      %v498 = vrot.slane %v496, 1
      %v499 = vor.u32 %v494, %v498
      %v501 = vshll.u32 %v462, 16
      %v503 = vrot.slane %v501, 1
      %v504 = vsel %vm468, %v499, %v503
      %v506 = vshrl.u32 %v431, 16
      %v508 = vshll.u32 %v431, 16
      %v510 = vrot.slane %v508, 1
      %v511 = vor.u32 %v506, %v510
      %v513 = vshll.u32 %v463, 16
      %v515 = vrot.slane %v513, 1
      %v516 = vsel %vm468, %v511, %v515
      %v518 = vshrl.u32 %v432, 16
      %v520 = vshll.u32 %v432, 16
      %v522 = vrot.slane %v520, 1
      %v523 = vor.u32 %v518, %v522
      %v525 = vshll.u32 %v464, 16
      %v527 = vrot.slane %v525, 1
      %v528 = vsel %vm468, %v523, %v527
      %v530 = vshrl.u32 %v433, 16
      %v532 = vshll.u32 %v433, 16
      %v534 = vrot.slane %v532, 1
      %v535 = vor.u32 %v530, %v534
      %v537 = vshll.u32 %v465, 16
      %v539 = vrot.slane %v537, 1
      %v540 = vsel %vm468, %v535, %v539
      %v542 = vshrl.u32 %v434, 16
      %v544 = vshll.u32 %v434, 16
      %v546 = vrot.slane %v544, 1
      %v547 = vor.u32 %v542, %v546
      %v549 = vshll.u32 %v466, 16
      %v551 = vrot.slane %v549, 1
      %v552 = vsel %vm468, %v547, %v551
      %v554 = vshrl.u32 %v435, 16
      %v556 = vshll.u32 %v435, 16
      %v558 = vrot.slane %v556, 1
      %v559 = vor.u32 %v554, %v558
      %v561 = vshll.u32 %v467, 16
      %v563 = vrot.slane %v561, 1
      %v564 = vsel %vm468, %v559, %v563
      %vm573 = vcmask 1046528
      %v574 = vrot.slane %v428, 1
      %v575 = vrot.slane %v460, 1
      %v576 = vsel %vm573, %v574, %v575
      %v577 = vrot.slane %v429, 1
      %v578 = vrot.slane %v461, 1
      %v579 = vsel %vm573, %v577, %v578
      %v580 = vrot.slane %v430, 1
      %v581 = vrot.slane %v462, 1
      %v582 = vsel %vm573, %v580, %v581
      %v583 = vrot.slane %v431, 1
      %v584 = vrot.slane %v463, 1
      %v585 = vsel %vm573, %v583, %v584
      %v586 = vrot.slane %v432, 1
      %v587 = vrot.slane %v464, 1
      %v588 = vsel %vm573, %v586, %v587
      %v589 = vrot.slane %v433, 1
      %v590 = vrot.slane %v465, 1
      %v591 = vsel %vm573, %v589, %v590
      %v592 = vrot.slane %v434, 1
      %v593 = vrot.slane %v466, 1
      %v594 = vsel %vm573, %v592, %v593
      %v595 = vrot.slane %v435, 1
      %v596 = vrot.slane %v467, 1
      %v597 = vsel %vm573, %v595, %v596
      %v606 = vld [vmem:[%s348] sm:$0xf]
      %v607 = vld [vmem:[%s348 + $0x4] sm:$0xf]
      %v608 = vld [vmem:[%s348 + $0x8] sm:$0xf]
      %v609 = vld [vmem:[%s348 + $0xc] sm:$0xf]
      %v610 = vld [vmem:[%s348 + $0x10] sm:$0xf]
      %v611 = vld [vmem:[%s348 + $0x14] sm:$0xf]
      %v612 = vld [vmem:[%s348 + $0x18] sm:$0xf]
      %v613 = vld [vmem:[%s348 + $0x1c] sm:$0xf]
      %v614 = vld [vmem:[%s348 + $0x20] sm:$0xf]
      %v615 = vld [vmem:[%s348 + $0x24] sm:$0xf]
      %v616 = vld [vmem:[%s348 + $0x28] sm:$0xf]
      %v617 = vld [vmem:[%s348 + $0x2c] sm:$0xf]
      %v618 = vld [vmem:[%s348 + $0x30] sm:$0xf]
      %v619 = vld [vmem:[%s348 + $0x34] sm:$0xf]
      %v620 = vld [vmem:[%s348 + $0x38] sm:$0xf]
      %v621 = vld [vmem:[%s348 + $0x3c] sm:$0xf]
      %v622 = vld [vmem:[%s348 + $0x40] sm:$0xf]
      %v623 = vld [vmem:[%s348 + $0x44] sm:$0xf]
      %v624 = vld [vmem:[%s348 + $0x48] sm:$0xf]
      %v625 = vld [vmem:[%s348 + $0x4c] sm:$0xf]
      %v626 = vld [vmem:[%s348 + $0x50] sm:$0xf]
      %v627 = vld [vmem:[%s348 + $0x54] sm:$0xf]
      %v628 = vld [vmem:[%s348 + $0x58] sm:$0xf]
      %v629 = vld [vmem:[%s348 + $0x5c] sm:$0xf]
      %v630 = vld [vmem:[%s348 + $0x60] sm:$0xf]
      %v631 = vld [vmem:[%s348 + $0x64] sm:$0xf]
      %v632 = vld [vmem:[%s348 + $0x68] sm:$0xf]
      %v633 = vld [vmem:[%s348 + $0x6c] sm:$0xf]
      %v634 = vld [vmem:[%s348 + $0x70] sm:$0xf]
      %v635 = vld [vmem:[%s348 + $0x74] sm:$0xf]
      %v636 = vld [vmem:[%s348 + $0x78] sm:$0xf]
      %v637 = vld [vmem:[%s348 + $0x7c] sm:$0xf]
      %v638 = vld [vmem:[%s348 + $0x80] sm:$0xf]
      %v639 = vld [vmem:[%s348 + $0x84] sm:$0xf]
      %v640 = vld [vmem:[%s348 + $0x88] sm:$0xf]
      %v641 = vld [vmem:[%s348 + $0x8c] sm:$0xf]
      %v642 = vld [vmem:[%s348 + $0x90] sm:$0xf]
      %v643 = vld [vmem:[%s348 + $0x94] sm:$0xf]
      %v644 = vld [vmem:[%s348 + $0x98] sm:$0xf]
      %v645 = vld [vmem:[%s348 + $0x9c] sm:$0xf]
      %v646 = vld [vmem:[%s348 + $0xa0] sm:$0xf]
      %v647 = vld [vmem:[%s348 + $0xa4] sm:$0xf]
      %v648 = vld [vmem:[%s348 + $0xa8] sm:$0xf]
      %v649 = vld [vmem:[%s348 + $0xac] sm:$0xf]
      %v650 = vld [vmem:[%s348 + $0xb0] sm:$0xf]
      %v651 = vld [vmem:[%s348 + $0xb4] sm:$0xf]
      %v652 = vld [vmem:[%s348 + $0xb8] sm:$0xf]
      %v653 = vld [vmem:[%s348 + $0xbc] sm:$0xf]
      %v656 = vunpack.c.l.b16 %v390
      %v657 = vunpack.c.l.b16 %v391
      %v658 = vpack.c.b16 %v657, %v656
      %v661 = vunpack.c.l.b16 %v392
      %v662 = vpack.c.b16 %v661, %v661
      %v664 = vshrl.u32 %v658, 16
      %v666 = vshll.u32 %v658, 16
      %v668 = vrot.slane %v666, 1
      %v669 = vor.u32 %v664, %v668
      %v671 = vshll.u32 %v662, 16
      %v673 = vrot.slane %v671, 1
      %v674 = vsel %vm468, %v669, %v673
      %v676 = vrot.slane %v658, 1
      %v677 = vrot.slane %v662, 1
      %v678 = vsel %vm573, %v676, %v677
      %s680 = scalar_lea.vmem %s348, 192
      %v681 = vld [vmem:[%s680] sm:$0xf]
      %v682 = vld [vmem:[%s680 + $0x4] sm:$0xf]
      %v683 = vld [vmem:[%s680 + $0x8] sm:$0xf]
      %v684 = vld [vmem:[%s680 + $0xc] sm:$0xf]
      %v685 = vld [vmem:[%s680 + $0x10] sm:$0xf]
      %v686 = vld [vmem:[%s680 + $0x14] sm:$0xf]
      %v687 = vld [vmem:[%s680 + $0x18] sm:$0xf]
      %v688 = vld [vmem:[%s680 + $0x1c] sm:$0xf]
      %v689 = vld [vmem:[%s680 + $0x20] sm:$0xf]
      %v690 = vld [vmem:[%s680 + $0x24] sm:$0xf]
      %v691 = vld [vmem:[%s680 + $0x28] sm:$0xf]
      %v692 = vld [vmem:[%s680 + $0x2c] sm:$0xf]
      %v693 = vld [vmem:[%s680 + $0x30] sm:$0xf]
      %v694 = vld [vmem:[%s680 + $0x34] sm:$0xf]
      %v695 = vld [vmem:[%s680 + $0x38] sm:$0xf]
      %v696 = vld [vmem:[%s680 + $0x3c] sm:$0xf]
      %v697 = vld [vmem:[%s680 + $0x40] sm:$0xf]
      %v698 = vld [vmem:[%s680 + $0x44] sm:$0xf]
      %v699 = vld [vmem:[%s680 + $0x48] sm:$0xf]
      %v700 = vld [vmem:[%s680 + $0x4c] sm:$0xf]
      %v701 = vld [vmem:[%s680 + $0x50] sm:$0xf]
      %v702 = vld [vmem:[%s680 + $0x54] sm:$0xf]
      %v703 = vld [vmem:[%s680 + $0x58] sm:$0xf]
      %v704 = vld [vmem:[%s680 + $0x5c] sm:$0xf]
      %v705 = vld [vmem:[%s680 + $0x60] sm:$0xf]
      %v706 = vld [vmem:[%s680 + $0x64] sm:$0xf]
      %v707 = vld [vmem:[%s680 + $0x68] sm:$0xf]
      %v708 = vld [vmem:[%s680 + $0x6c] sm:$0xf]
      %v709 = vld [vmem:[%s680 + $0x70] sm:$0xf]
      %v710 = vld [vmem:[%s680 + $0x74] sm:$0xf]
      %v711 = vld [vmem:[%s680 + $0x78] sm:$0xf]
      %v712 = vld [vmem:[%s680 + $0x7c] sm:$0xf]
      %v713 = vld [vmem:[%s680 + $0x80] sm:$0xf]
      %v714 = vld [vmem:[%s680 + $0x84] sm:$0xf]
      %v715 = vld [vmem:[%s680 + $0x88] sm:$0xf]
      %v716 = vld [vmem:[%s680 + $0x8c] sm:$0xf]
      %v717 = vld [vmem:[%s680 + $0x90] sm:$0xf]
      %v718 = vld [vmem:[%s680 + $0x94] sm:$0xf]
      %v719 = vld [vmem:[%s680 + $0x98] sm:$0xf]
      %v720 = vld [vmem:[%s680 + $0x9c] sm:$0xf]
      %v721 = vld [vmem:[%s680 + $0xa0] sm:$0xf]
      %v722 = vld [vmem:[%s680 + $0xa4] sm:$0xf]
      %v723 = vld [vmem:[%s680 + $0xa8] sm:$0xf]
      %v724 = vld [vmem:[%s680 + $0xac] sm:$0xf]
      %v725 = vld [vmem:[%s680 + $0xb0] sm:$0xf]
      %v726 = vld [vmem:[%s680 + $0xb4] sm:$0xf]
      %v727 = vld [vmem:[%s680 + $0xb8] sm:$0xf]
      %v728 = vld [vmem:[%s680 + $0xbc] sm:$0xf]
      %v777 = vunpack.c.l.b16 %v681
      %v778 = vunpack.c.l.b16 %v682
      %v779 = vunpack.c.l.b16 %v683
      %v780 = vunpack.c.l.b16 %v684
      %v781 = vunpack.c.l.b16 %v685
      %v782 = vunpack.c.l.b16 %v686
      %v783 = vunpack.c.l.b16 %v687
      %v784 = vunpack.c.l.b16 %v688
      %v785 = vunpack.c.l.b16 %v689
      %v786 = vunpack.c.l.b16 %v690
      %v787 = vunpack.c.l.b16 %v691
      %v788 = vunpack.c.l.b16 %v692
      %v789 = vunpack.c.l.b16 %v693
      %v790 = vunpack.c.l.b16 %v694
      %v791 = vunpack.c.l.b16 %v695
      %v792 = vunpack.c.l.b16 %v696
      %v793 = vunpack.c.l.b16 %v697
      %v794 = vunpack.c.l.b16 %v698
      %v795 = vunpack.c.l.b16 %v699
      %v796 = vunpack.c.l.b16 %v700
      %v797 = vunpack.c.l.b16 %v701
      %v798 = vunpack.c.l.b16 %v702
      %v799 = vunpack.c.l.b16 %v703
      %v800 = vunpack.c.l.b16 %v704
      %v801 = vunpack.c.l.b16 %v705
      %v802 = vunpack.c.l.b16 %v706
      %v803 = vunpack.c.l.b16 %v707
      %v804 = vunpack.c.l.b16 %v708
      %v805 = vunpack.c.l.b16 %v709
      %v806 = vunpack.c.l.b16 %v710
      %v807 = vunpack.c.l.b16 %v711
      %v808 = vunpack.c.l.b16 %v712
      %v809 = vunpack.c.l.b16 %v713
      %v810 = vunpack.c.l.b16 %v714
      %v811 = vunpack.c.l.b16 %v715
      %v812 = vunpack.c.l.b16 %v716
      %v813 = vunpack.c.l.b16 %v717
      %v814 = vunpack.c.l.b16 %v718
      %v815 = vunpack.c.l.b16 %v719
      %v816 = vunpack.c.l.b16 %v720
      %v817 = vunpack.c.l.b16 %v721
      %v818 = vunpack.c.l.b16 %v722
      %v819 = vunpack.c.l.b16 %v723
      %v820 = vunpack.c.l.b16 %v724
      %v821 = vunpack.c.l.b16 %v725
      %v822 = vunpack.c.l.b16 %v726
      %v823 = vunpack.c.l.b16 %v727
      %v824 = vunpack.c.l.b16 %v728
      %v825 = vpack.c.b16 %v778, %v777
      %v826 = vpack.c.b16 %v780, %v779
      %v827 = vpack.c.b16 %v782, %v781
      %v828 = vpack.c.b16 %v784, %v783
      %v829 = vpack.c.b16 %v786, %v785
      %v830 = vpack.c.b16 %v788, %v787
      %v831 = vpack.c.b16 %v790, %v789
      %v832 = vpack.c.b16 %v792, %v791
      %v833 = vpack.c.b16 %v794, %v793
      %v834 = vpack.c.b16 %v796, %v795
      %v835 = vpack.c.b16 %v798, %v797
      %v836 = vpack.c.b16 %v800, %v799
      %v837 = vpack.c.b16 %v802, %v801
      %v838 = vpack.c.b16 %v804, %v803
      %v839 = vpack.c.b16 %v806, %v805
      %v840 = vpack.c.b16 %v808, %v807
      %v841 = vpack.c.b16 %v810, %v809
      %v842 = vpack.c.b16 %v812, %v811
      %v843 = vpack.c.b16 %v814, %v813
      %v844 = vpack.c.b16 %v816, %v815
      %v845 = vpack.c.b16 %v818, %v817
      %v846 = vpack.c.b16 %v820, %v819
      %v847 = vpack.c.b16 %v822, %v821
      %v848 = vpack.c.b16 %v824, %v823
      %873 = vmatpush.bf16.msra.mxu0 %v832
      %874 = vmatpush.bf16.msra.mxu0 %v831
      %875 = vmatpush.bf16.msra.mxu0 %v830
      %876 = vmatpush.bf16.msra.mxu0 %v829
      %877 = vmatpush.bf16.msra.mxu0 %v828
      %878 = vmatpush.bf16.msra.mxu0 %v827
      %879 = vmatpush.bf16.msra.mxu0 %v826
      %880 = vmatpush.bf16.msra.mxu0 %v825
      %881 = vmatmul.bf16.gmra.mxu0 %v429
      %v882 = vpop.f32.mrf.mxu0
      %v883 = vadd.f32 0.0, %v882
      %v884 = vpop.f32.mrf.mxu0
      %v885 = vadd.f32 0.0, %v884
      %886 = vmatmul.bf16.gmra.mxu0 %v430
      %v887 = vpop.f32.mrf.mxu0
      %v888 = vadd.f32 0.0, %v887
      %v889 = vpop.f32.mrf.mxu0
      %v890 = vadd.f32 0.0, %v889
      %891 = vmatmul.bf16.gmra.mxu0 %v431
      %v892 = vpop.f32.mrf.mxu0
      %v893 = vadd.f32 0.0, %v892
      %v894 = vpop.f32.mrf.mxu0
      %v895 = vadd.f32 0.0, %v894
      %896 = vmatmul.bf16.gmra.mxu0 %v432
      %v897 = vpop.f32.mrf.mxu0
      %v898 = vadd.f32 0.0, %v897
      %v899 = vpop.f32.mrf.mxu0
      %v900 = vadd.f32 0.0, %v899
      %901 = vmatmul.bf16.gmra.mxu0 %v433
      %v902 = vpop.f32.mrf.mxu0
      %v903 = vadd.f32 0.0, %v902
      %v904 = vpop.f32.mrf.mxu0
      %v905 = vadd.f32 0.0, %v904
      %906 = vmatmul.bf16.gmra.mxu0 %v434
      %v907 = vpop.f32.mrf.mxu0
      %v908 = vadd.f32 0.0, %v907
      %v909 = vpop.f32.mrf.mxu0
      %v910 = vadd.f32 0.0, %v909
      %911 = vmatmul.bf16.gmra.mxu0 %v435
      %v912 = vpop.f32.mrf.mxu0
      %v913 = vadd.f32 0.0, %v912
      %v914 = vpop.f32.mrf.mxu0
      %v915 = vadd.f32 0.0, %v914
      %916 = vmatmul.bf16.gmra.mxu0 %v658
      %v917 = vpop.f32.mrf.mxu0
      %v918 = vadd.f32 0.0, %v917
      %v919 = vpop.f32.mrf.mxu0
      %v920 = vadd.f32 0.0, %v919
      %921 = vdwg.mxu0
      %922 = vmatpush.bf16.msra.mxu0 %v840
      %923 = vmatpush.bf16.msra.mxu0 %v839
      %924 = vmatpush.bf16.msra.mxu0 %v838
      %925 = vmatpush.bf16.msra.mxu0 %v837
      %926 = vmatpush.bf16.msra.mxu0 %v836
      %927 = vmatpush.bf16.msra.mxu0 %v835
      %928 = vmatpush.bf16.msra.mxu0 %v834
      %929 = vmatpush.bf16.msra.mxu0 %v833
      %930 = vmatmul.bf16.gmra.mxu0 %v492
      %v931 = vpop.f32.mrf.mxu0
      %v932 = vadd.f32 %v883, %v931
      %v933 = vpop.f32.mrf.mxu0
      %v934 = vadd.f32 %v885, %v933
      %935 = vmatmul.bf16.gmra.mxu0 %v504
      %v936 = vpop.f32.mrf.mxu0
      %v937 = vadd.f32 %v888, %v936
      %v938 = vpop.f32.mrf.mxu0
      %v939 = vadd.f32 %v890, %v938
      %940 = vmatmul.bf16.gmra.mxu0 %v516
      %v941 = vpop.f32.mrf.mxu0
      %v942 = vadd.f32 %v893, %v941
      %v943 = vpop.f32.mrf.mxu0
      %v944 = vadd.f32 %v895, %v943
      %945 = vmatmul.bf16.gmra.mxu0 %v528
      %v946 = vpop.f32.mrf.mxu0
      %v947 = vadd.f32 %v898, %v946
      %v948 = vpop.f32.mrf.mxu0
      %v949 = vadd.f32 %v900, %v948
      %950 = vmatmul.bf16.gmra.mxu0 %v540
      %v951 = vpop.f32.mrf.mxu0
      %v952 = vadd.f32 %v903, %v951
      %v953 = vpop.f32.mrf.mxu0
      %v954 = vadd.f32 %v905, %v953
      %955 = vmatmul.bf16.gmra.mxu0 %v552
      %v956 = vpop.f32.mrf.mxu0
      %v957 = vadd.f32 %v908, %v956
      %v958 = vpop.f32.mrf.mxu0
      %v959 = vadd.f32 %v910, %v958
      %960 = vmatmul.bf16.gmra.mxu0 %v564
      %v961 = vpop.f32.mrf.mxu0
      %v962 = vadd.f32 %v913, %v961
      %v963 = vpop.f32.mrf.mxu0
      %v964 = vadd.f32 %v915, %v963
      %965 = vmatmul.bf16.gmra.mxu0 %v674
      %v966 = vpop.f32.mrf.mxu0
      %v967 = vadd.f32 %v918, %v966
      %v968 = vpop.f32.mrf.mxu0
      %v969 = vadd.f32 %v920, %v968
      %970 = vdwg.mxu0
      %971 = vmatpush.bf16.msra.mxu0 %v848
      %972 = vmatpush.bf16.msra.mxu0 %v847
      %973 = vmatpush.bf16.msra.mxu0 %v846
      %974 = vmatpush.bf16.msra.mxu0 %v845
      %975 = vmatpush.bf16.msra.mxu0 %v844
      %976 = vmatpush.bf16.msra.mxu0 %v843
      %977 = vmatpush.bf16.msra.mxu0 %v842
      %978 = vmatpush.bf16.msra.mxu0 %v841
      %979 = vmatmul.bf16.gmra.mxu0 %v579
      %v980 = vpop.f32.mrf.mxu0
      %v981 = vadd.f32 %v932, %v980
      %v982 = vpop.f32.mrf.mxu0
      %v983 = vadd.f32 %v934, %v982
      %984 = vmatmul.bf16.gmra.mxu0 %v582
      %v985 = vpop.f32.mrf.mxu0
      %v986 = vadd.f32 %v937, %v985
      %v987 = vpop.f32.mrf.mxu0
      %v988 = vadd.f32 %v939, %v987
      %989 = vmatmul.bf16.gmra.mxu0 %v585
      %v990 = vpop.f32.mrf.mxu0
      %v991 = vadd.f32 %v942, %v990
      %v992 = vpop.f32.mrf.mxu0
      %v993 = vadd.f32 %v944, %v992
      %994 = vmatmul.bf16.gmra.mxu0 %v588
      %v995 = vpop.f32.mrf.mxu0
      %v996 = vadd.f32 %v947, %v995
      %v997 = vpop.f32.mrf.mxu0
      %v998 = vadd.f32 %v949, %v997
      %999 = vmatmul.bf16.gmra.mxu0 %v591
      %v1000 = vpop.f32.mrf.mxu0
      %v1001 = vadd.f32 %v952, %v1000
      %v1002 = vpop.f32.mrf.mxu0
      %v1003 = vadd.f32 %v954, %v1002
      %1004 = vmatmul.bf16.gmra.mxu0 %v594
      %v1005 = vpop.f32.mrf.mxu0
      %v1006 = vadd.f32 %v957, %v1005
      %v1007 = vpop.f32.mrf.mxu0
      %v1008 = vadd.f32 %v959, %v1007
      %1009 = vmatmul.bf16.gmra.mxu0 %v597
      %v1010 = vpop.f32.mrf.mxu0
      %v1011 = vadd.f32 %v962, %v1010
      %v1012 = vpop.f32.mrf.mxu0
      %v1013 = vadd.f32 %v964, %v1012
      %1014 = vmatmul.bf16.gmra.mxu0 %v678
      %v1015 = vpop.f32.mrf.mxu0
      %v1016 = vadd.f32 %v967, %v1015
      %v1017 = vpop.f32.mrf.mxu0
      %v1018 = vadd.f32 %v969, %v1017
      %1019 = vdwg.mxu0
      %v1068 = vunpack.c.l.b16 %v606
      %v1069 = vunpack.c.l.b16 %v607
      %v1070 = vunpack.c.l.b16 %v608
      %v1071 = vunpack.c.l.b16 %v609
      %v1072 = vunpack.c.l.b16 %v610
      %v1073 = vunpack.c.l.b16 %v611
      %v1074 = vunpack.c.l.b16 %v612
      %v1075 = vunpack.c.l.b16 %v613
      %v1076 = vunpack.c.l.b16 %v614
      %v1077 = vunpack.c.l.b16 %v615
      %v1078 = vunpack.c.l.b16 %v616
      %v1079 = vunpack.c.l.b16 %v617
      %v1080 = vunpack.c.l.b16 %v618
      %v1081 = vunpack.c.l.b16 %v619
      %v1082 = vunpack.c.l.b16 %v620
      %v1083 = vunpack.c.l.b16 %v621
      %v1084 = vunpack.c.l.b16 %v622
      %v1085 = vunpack.c.l.b16 %v623
      %v1086 = vunpack.c.l.b16 %v624
      %v1087 = vunpack.c.l.b16 %v625
      %v1088 = vunpack.c.l.b16 %v626
      %v1089 = vunpack.c.l.b16 %v627
      %v1090 = vunpack.c.l.b16 %v628
      %v1091 = vunpack.c.l.b16 %v629
      %v1092 = vunpack.c.l.b16 %v630
      %v1093 = vunpack.c.l.b16 %v631
      %v1094 = vunpack.c.l.b16 %v632
      %v1095 = vunpack.c.l.b16 %v633
      %v1096 = vunpack.c.l.b16 %v634
      %v1097 = vunpack.c.l.b16 %v635
      %v1098 = vunpack.c.l.b16 %v636
      %v1099 = vunpack.c.l.b16 %v637
      %v1100 = vunpack.c.l.b16 %v638
      %v1101 = vunpack.c.l.b16 %v639
      %v1102 = vunpack.c.l.b16 %v640
      %v1103 = vunpack.c.l.b16 %v641
      %v1104 = vunpack.c.l.b16 %v642
      %v1105 = vunpack.c.l.b16 %v643
      %v1106 = vunpack.c.l.b16 %v644
      %v1107 = vunpack.c.l.b16 %v645
      %v1108 = vunpack.c.l.b16 %v646
      %v1109 = vunpack.c.l.b16 %v647
      %v1110 = vunpack.c.l.b16 %v648
      %v1111 = vunpack.c.l.b16 %v649
      %v1112 = vunpack.c.l.b16 %v650
      %v1113 = vunpack.c.l.b16 %v651
      %v1114 = vunpack.c.l.b16 %v652
      %v1115 = vunpack.c.l.b16 %v653
      %v1116 = vpack.c.b16 %v1069, %v1068
      %v1117 = vpack.c.b16 %v1071, %v1070
      %v1118 = vpack.c.b16 %v1073, %v1072
      %v1119 = vpack.c.b16 %v1075, %v1074
      %v1120 = vpack.c.b16 %v1077, %v1076
      %v1121 = vpack.c.b16 %v1079, %v1078
      %v1122 = vpack.c.b16 %v1081, %v1080
      %v1123 = vpack.c.b16 %v1083, %v1082
      %v1124 = vpack.c.b16 %v1085, %v1084
      %v1125 = vpack.c.b16 %v1087, %v1086
      %v1126 = vpack.c.b16 %v1089, %v1088
      %v1127 = vpack.c.b16 %v1091, %v1090
      %v1128 = vpack.c.b16 %v1093, %v1092
      %v1129 = vpack.c.b16 %v1095, %v1094
      %v1130 = vpack.c.b16 %v1097, %v1096
      %v1131 = vpack.c.b16 %v1099, %v1098
      %v1132 = vpack.c.b16 %v1101, %v1100
      %v1133 = vpack.c.b16 %v1103, %v1102
      %v1134 = vpack.c.b16 %v1105, %v1104
      %v1135 = vpack.c.b16 %v1107, %v1106
      %v1136 = vpack.c.b16 %v1109, %v1108
      %v1137 = vpack.c.b16 %v1111, %v1110
      %v1138 = vpack.c.b16 %v1113, %v1112
      %v1139 = vpack.c.b16 %v1115, %v1114
      %1164 = vmatpush.bf16.msra.mxu0 %v1123
      %1165 = vmatpush.bf16.msra.mxu0 %v1122
      %1166 = vmatpush.bf16.msra.mxu0 %v1121
      %1167 = vmatpush.bf16.msra.mxu0 %v1120
      %1168 = vmatpush.bf16.msra.mxu0 %v1119
      %1169 = vmatpush.bf16.msra.mxu0 %v1118
      %1170 = vmatpush.bf16.msra.mxu0 %v1117
      %1171 = vmatpush.bf16.msra.mxu0 %v1116
      %1172 = vmatmul.bf16.gmra.mxu0 %v428
      %v1173 = vpop.f32.mrf.mxu0
      %v1174 = vadd.f32 %v981, %v1173
      %v1175 = vpop.f32.mrf.mxu0
      %v1176 = vadd.f32 %v983, %v1175
      %1177 = vmatmul.bf16.gmra.mxu0 %v429
      %v1178 = vpop.f32.mrf.mxu0
      %v1179 = vadd.f32 %v986, %v1178
      %v1180 = vpop.f32.mrf.mxu0
      %v1181 = vadd.f32 %v988, %v1180
      %1182 = vmatmul.bf16.gmra.mxu0 %v430
      %v1183 = vpop.f32.mrf.mxu0
      %v1184 = vadd.f32 %v991, %v1183
      %v1185 = vpop.f32.mrf.mxu0
      %v1186 = vadd.f32 %v993, %v1185
      %1187 = vmatmul.bf16.gmra.mxu0 %v431
      %v1188 = vpop.f32.mrf.mxu0
      %v1189 = vadd.f32 %v996, %v1188
      %v1190 = vpop.f32.mrf.mxu0
      %v1191 = vadd.f32 %v998, %v1190
      %1192 = vmatmul.bf16.gmra.mxu0 %v432
      %v1193 = vpop.f32.mrf.mxu0
      %v1194 = vadd.f32 %v1001, %v1193
      %v1195 = vpop.f32.mrf.mxu0
      %v1196 = vadd.f32 %v1003, %v1195
      %1197 = vmatmul.bf16.gmra.mxu0 %v433
      %v1198 = vpop.f32.mrf.mxu0
      %v1199 = vadd.f32 %v1006, %v1198
      %v1200 = vpop.f32.mrf.mxu0
      %v1201 = vadd.f32 %v1008, %v1200
      %1202 = vmatmul.bf16.gmra.mxu0 %v434
      %v1203 = vpop.f32.mrf.mxu0
      %v1204 = vadd.f32 %v1011, %v1203
      %v1205 = vpop.f32.mrf.mxu0
      %v1206 = vadd.f32 %v1013, %v1205
      %1207 = vmatmul.bf16.gmra.mxu0 %v435
      %v1208 = vpop.f32.mrf.mxu0
      %v1209 = vadd.f32 %v1016, %v1208
      %v1210 = vpop.f32.mrf.mxu0
      %v1211 = vadd.f32 %v1018, %v1210
      %1212 = vdwg.mxu0
      %1213 = vmatpush.bf16.msra.mxu0 %v1131
      %1214 = vmatpush.bf16.msra.mxu0 %v1130
      %1215 = vmatpush.bf16.msra.mxu0 %v1129
      %1216 = vmatpush.bf16.msra.mxu0 %v1128
      %1217 = vmatpush.bf16.msra.mxu0 %v1127
      %1218 = vmatpush.bf16.msra.mxu0 %v1126
      %1219 = vmatpush.bf16.msra.mxu0 %v1125
      %1220 = vmatpush.bf16.msra.mxu0 %v1124
      %1221 = vmatmul.bf16.gmra.mxu0 %v480
      %v1222 = vpop.f32.mrf.mxu0
      %v1223 = vadd.f32 %v1174, %v1222
      %v1224 = vpop.f32.mrf.mxu0
      %v1225 = vadd.f32 %v1176, %v1224
      %1226 = vmatmul.bf16.gmra.mxu0 %v492
      %v1227 = vpop.f32.mrf.mxu0
      %v1228 = vadd.f32 %v1179, %v1227
      %v1229 = vpop.f32.mrf.mxu0
      %v1230 = vadd.f32 %v1181, %v1229
      %1231 = vmatmul.bf16.gmra.mxu0 %v504
      %v1232 = vpop.f32.mrf.mxu0
      %v1233 = vadd.f32 %v1184, %v1232
      %v1234 = vpop.f32.mrf.mxu0
      %v1235 = vadd.f32 %v1186, %v1234
      %1236 = vmatmul.bf16.gmra.mxu0 %v516
      %v1237 = vpop.f32.mrf.mxu0
      %v1238 = vadd.f32 %v1189, %v1237
      %v1239 = vpop.f32.mrf.mxu0
      %v1240 = vadd.f32 %v1191, %v1239
      %1241 = vmatmul.bf16.gmra.mxu0 %v528
      %v1242 = vpop.f32.mrf.mxu0
      %v1243 = vadd.f32 %v1194, %v1242
      %v1244 = vpop.f32.mrf.mxu0
      %v1245 = vadd.f32 %v1196, %v1244
      %1246 = vmatmul.bf16.gmra.mxu0 %v540
      %v1247 = vpop.f32.mrf.mxu0
      %v1248 = vadd.f32 %v1199, %v1247
      %v1249 = vpop.f32.mrf.mxu0
      %v1250 = vadd.f32 %v1201, %v1249
      %1251 = vmatmul.bf16.gmra.mxu0 %v552
      %v1252 = vpop.f32.mrf.mxu0
      %v1253 = vadd.f32 %v1204, %v1252
      %v1254 = vpop.f32.mrf.mxu0
      %v1255 = vadd.f32 %v1206, %v1254
      %1256 = vmatmul.bf16.gmra.mxu0 %v564
      %v1257 = vpop.f32.mrf.mxu0
      %v1258 = vadd.f32 %v1209, %v1257
      %v1259 = vpop.f32.mrf.mxu0
      %v1260 = vadd.f32 %v1211, %v1259
      %1261 = vdwg.mxu0
      %1262 = vmatpush.bf16.msra.mxu0 %v1139
      %1263 = vmatpush.bf16.msra.mxu0 %v1138
      %1264 = vmatpush.bf16.msra.mxu0 %v1137
      %1265 = vmatpush.bf16.msra.mxu0 %v1136
      %1266 = vmatpush.bf16.msra.mxu0 %v1135
      %1267 = vmatpush.bf16.msra.mxu0 %v1134
      %1268 = vmatpush.bf16.msra.mxu0 %v1133
      %1269 = vmatpush.bf16.msra.mxu0 %v1132
      %1270 = vmatmul.bf16.gmra.mxu0 %v576
      %v1271 = vpop.f32.mrf.mxu0
      %v1272 = vadd.f32 %v1223, %v1271
      %v1273 = vpop.f32.mrf.mxu0
      %v1274 = vadd.f32 %v1225, %v1273
      %1275 = vmatmul.bf16.gmra.mxu0 %v579
      %v1276 = vpop.f32.mrf.mxu0
      %v1277 = vadd.f32 %v1228, %v1276
      %v1278 = vpop.f32.mrf.mxu0
      %v1279 = vadd.f32 %v1230, %v1278
      %1280 = vmatmul.bf16.gmra.mxu0 %v582
      %v1281 = vpop.f32.mrf.mxu0
      %v1282 = vadd.f32 %v1233, %v1281
      %v1283 = vpop.f32.mrf.mxu0
      %v1284 = vadd.f32 %v1235, %v1283
      %1285 = vmatmul.bf16.gmra.mxu0 %v585
      %v1286 = vpop.f32.mrf.mxu0
      %v1287 = vadd.f32 %v1238, %v1286
      %v1288 = vpop.f32.mrf.mxu0
      %v1289 = vadd.f32 %v1240, %v1288
      %1290 = vmatmul.bf16.gmra.mxu0 %v588
      %v1291 = vpop.f32.mrf.mxu0
      %v1292 = vadd.f32 %v1243, %v1291
      %v1293 = vpop.f32.mrf.mxu0
      %v1294 = vadd.f32 %v1245, %v1293
      %1295 = vmatmul.bf16.gmra.mxu0 %v591
      %v1296 = vpop.f32.mrf.mxu0
      %v1297 = vadd.f32 %v1248, %v1296
      %v1298 = vpop.f32.mrf.mxu0
      %v1299 = vadd.f32 %v1250, %v1298
      %1300 = vmatmul.bf16.gmra.mxu0 %v594
      %v1301 = vpop.f32.mrf.mxu0
      %v1302 = vadd.f32 %v1253, %v1301
      %v1303 = vpop.f32.mrf.mxu0
      %v1304 = vadd.f32 %v1255, %v1303
      %1305 = vmatmul.bf16.gmra.mxu0 %v597
      %v1306 = vpop.f32.mrf.mxu0
      %v1307 = vadd.f32 %v1258, %v1306
      %v1308 = vpop.f32.mrf.mxu0
      %v1309 = vadd.f32 %v1260, %v1308
      %1310 = vdwg.mxu0
      %v1313 = vunpack.c.l.b16 %v393
      %v1314 = vunpack.c.l.b16 %v394
      %v1315 = vpack.c.b16 %v1314, %v1313
      %v1318 = vunpack.c.l.b16 %v395
      %v1319 = vpack.c.b16 %v1318, %v1318
      %v1321 = vshrl.u32 %v1315, 16
      %v1323 = vshll.u32 %v1315, 16
      %v1325 = vrot.slane %v1323, 1
      %v1326 = vor.u32 %v1321, %v1325
      %v1328 = vshll.u32 %v1319, 16
      %v1330 = vrot.slane %v1328, 1
      %v1331 = vsel %vm468, %v1326, %v1330
      %v1333 = vrot.slane %v1315, 1
      %v1334 = vrot.slane %v1319, 1
      %v1335 = vsel %vm573, %v1333, %v1334
      %s1337 = scalar_lea.vmem %s348, 384
      %v1338 = vld [vmem:[%s1337] sm:$0xf]
      %v1339 = vld [vmem:[%s1337 + $0x4] sm:$0xf]
      %v1340 = vld [vmem:[%s1337 + $0x8] sm:$0xf]
      %v1341 = vld [vmem:[%s1337 + $0xc] sm:$0xf]
      %v1342 = vld [vmem:[%s1337 + $0x10] sm:$0xf]
      %v1343 = vld [vmem:[%s1337 + $0x14] sm:$0xf]
      %v1344 = vld [vmem:[%s1337 + $0x18] sm:$0xf]
      %v1345 = vld [vmem:[%s1337 + $0x1c] sm:$0xf]
      %v1346 = vld [vmem:[%s1337 + $0x20] sm:$0xf]
      %v1347 = vld [vmem:[%s1337 + $0x24] sm:$0xf]
      %v1348 = vld [vmem:[%s1337 + $0x28] sm:$0xf]
      %v1349 = vld [vmem:[%s1337 + $0x2c] sm:$0xf]
      %v1350 = vld [vmem:[%s1337 + $0x30] sm:$0xf]
      %v1351 = vld [vmem:[%s1337 + $0x34] sm:$0xf]
      %v1352 = vld [vmem:[%s1337 + $0x38] sm:$0xf]
      %v1353 = vld [vmem:[%s1337 + $0x3c] sm:$0xf]
      %v1354 = vld [vmem:[%s1337 + $0x40] sm:$0xf]
      %v1355 = vld [vmem:[%s1337 + $0x44] sm:$0xf]
      %v1356 = vld [vmem:[%s1337 + $0x48] sm:$0xf]
      %v1357 = vld [vmem:[%s1337 + $0x4c] sm:$0xf]
      %v1358 = vld [vmem:[%s1337 + $0x50] sm:$0xf]
      %v1359 = vld [vmem:[%s1337 + $0x54] sm:$0xf]
      %v1360 = vld [vmem:[%s1337 + $0x58] sm:$0xf]
      %v1361 = vld [vmem:[%s1337 + $0x5c] sm:$0xf]
      %v1362 = vld [vmem:[%s1337 + $0x60] sm:$0xf]
      %v1363 = vld [vmem:[%s1337 + $0x64] sm:$0xf]
      %v1364 = vld [vmem:[%s1337 + $0x68] sm:$0xf]
      %v1365 = vld [vmem:[%s1337 + $0x6c] sm:$0xf]
      %v1366 = vld [vmem:[%s1337 + $0x70] sm:$0xf]
      %v1367 = vld [vmem:[%s1337 + $0x74] sm:$0xf]
      %v1368 = vld [vmem:[%s1337 + $0x78] sm:$0xf]
      %v1369 = vld [vmem:[%s1337 + $0x7c] sm:$0xf]
      %v1370 = vld [vmem:[%s1337 + $0x80] sm:$0xf]
      %v1371 = vld [vmem:[%s1337 + $0x84] sm:$0xf]
      %v1372 = vld [vmem:[%s1337 + $0x88] sm:$0xf]
      %v1373 = vld [vmem:[%s1337 + $0x8c] sm:$0xf]
      %v1374 = vld [vmem:[%s1337 + $0x90] sm:$0xf]
      %v1375 = vld [vmem:[%s1337 + $0x94] sm:$0xf]
      %v1376 = vld [vmem:[%s1337 + $0x98] sm:$0xf]
      %v1377 = vld [vmem:[%s1337 + $0x9c] sm:$0xf]
      %v1378 = vld [vmem:[%s1337 + $0xa0] sm:$0xf]
      %v1379 = vld [vmem:[%s1337 + $0xa4] sm:$0xf]
      %v1380 = vld [vmem:[%s1337 + $0xa8] sm:$0xf]
      %v1381 = vld [vmem:[%s1337 + $0xac] sm:$0xf]
      %v1382 = vld [vmem:[%s1337 + $0xb0] sm:$0xf]
      %v1383 = vld [vmem:[%s1337 + $0xb4] sm:$0xf]
      %v1384 = vld [vmem:[%s1337 + $0xb8] sm:$0xf]
      %v1385 = vld [vmem:[%s1337 + $0xbc] sm:$0xf]
      %v1434 = vunpack.c.l.b16 %v1338
      %v1435 = vunpack.c.l.b16 %v1339
      %v1436 = vunpack.c.l.b16 %v1340
      %v1437 = vunpack.c.l.b16 %v1341
      %v1438 = vunpack.c.l.b16 %v1342
      %v1439 = vunpack.c.l.b16 %v1343
      %v1440 = vunpack.c.l.b16 %v1344
      %v1441 = vunpack.c.l.b16 %v1345
      %v1442 = vunpack.c.l.b16 %v1346
      %v1443 = vunpack.c.l.b16 %v1347
      %v1444 = vunpack.c.l.b16 %v1348
      %v1445 = vunpack.c.l.b16 %v1349
      %v1446 = vunpack.c.l.b16 %v1350
      %v1447 = vunpack.c.l.b16 %v1351
      %v1448 = vunpack.c.l.b16 %v1352
      %v1449 = vunpack.c.l.b16 %v1353
      %v1450 = vunpack.c.l.b16 %v1354
      %v1451 = vunpack.c.l.b16 %v1355
      %v1452 = vunpack.c.l.b16 %v1356
      %v1453 = vunpack.c.l.b16 %v1357
      %v1454 = vunpack.c.l.b16 %v1358
      %v1455 = vunpack.c.l.b16 %v1359
      %v1456 = vunpack.c.l.b16 %v1360
      %v1457 = vunpack.c.l.b16 %v1361
      %v1458 = vunpack.c.l.b16 %v1362
      %v1459 = vunpack.c.l.b16 %v1363
      %v1460 = vunpack.c.l.b16 %v1364
      %v1461 = vunpack.c.l.b16 %v1365
      %v1462 = vunpack.c.l.b16 %v1366
      %v1463 = vunpack.c.l.b16 %v1367
      %v1464 = vunpack.c.l.b16 %v1368
      %v1465 = vunpack.c.l.b16 %v1369
      %v1466 = vunpack.c.l.b16 %v1370
      %v1467 = vunpack.c.l.b16 %v1371
      %v1468 = vunpack.c.l.b16 %v1372
      %v1469 = vunpack.c.l.b16 %v1373
      %v1470 = vunpack.c.l.b16 %v1374
      %v1471 = vunpack.c.l.b16 %v1375
      %v1472 = vunpack.c.l.b16 %v1376
      %v1473 = vunpack.c.l.b16 %v1377
      %v1474 = vunpack.c.l.b16 %v1378
      %v1475 = vunpack.c.l.b16 %v1379
      %v1476 = vunpack.c.l.b16 %v1380
      %v1477 = vunpack.c.l.b16 %v1381
      %v1478 = vunpack.c.l.b16 %v1382
      %v1479 = vunpack.c.l.b16 %v1383
      %v1480 = vunpack.c.l.b16 %v1384
      %v1481 = vunpack.c.l.b16 %v1385
      %v1482 = vpack.c.b16 %v1435, %v1434
      %v1483 = vpack.c.b16 %v1437, %v1436
      %v1484 = vpack.c.b16 %v1439, %v1438
      %v1485 = vpack.c.b16 %v1441, %v1440
      %v1486 = vpack.c.b16 %v1443, %v1442
      %v1487 = vpack.c.b16 %v1445, %v1444
      %v1488 = vpack.c.b16 %v1447, %v1446
      %v1489 = vpack.c.b16 %v1449, %v1448
      %v1490 = vpack.c.b16 %v1451, %v1450
      %v1491 = vpack.c.b16 %v1453, %v1452
      %v1492 = vpack.c.b16 %v1455, %v1454
      %v1493 = vpack.c.b16 %v1457, %v1456
      %v1494 = vpack.c.b16 %v1459, %v1458
      %v1495 = vpack.c.b16 %v1461, %v1460
      %v1496 = vpack.c.b16 %v1463, %v1462
      %v1497 = vpack.c.b16 %v1465, %v1464
      %v1498 = vpack.c.b16 %v1467, %v1466
      %v1499 = vpack.c.b16 %v1469, %v1468
      %v1500 = vpack.c.b16 %v1471, %v1470
      %v1501 = vpack.c.b16 %v1473, %v1472
      %v1502 = vpack.c.b16 %v1475, %v1474
      %v1503 = vpack.c.b16 %v1477, %v1476
      %v1504 = vpack.c.b16 %v1479, %v1478
      %v1505 = vpack.c.b16 %v1481, %v1480
      %1530 = vmatpush.bf16.msra.mxu0 %v1489
      %1531 = vmatpush.bf16.msra.mxu0 %v1488
      %1532 = vmatpush.bf16.msra.mxu0 %v1487
      %1533 = vmatpush.bf16.msra.mxu0 %v1486
      %1534 = vmatpush.bf16.msra.mxu0 %v1485
      %1535 = vmatpush.bf16.msra.mxu0 %v1484
      %1536 = vmatpush.bf16.msra.mxu0 %v1483
      %1537 = vmatpush.bf16.msra.mxu0 %v1482
      %1538 = vmatmul.bf16.gmra.mxu0 %v430
      %v1539 = vpop.f32.mrf.mxu0
      %v1540 = vadd.f32 0.0, %v1539
      %v1541 = vpop.f32.mrf.mxu0
      %v1542 = vadd.f32 0.0, %v1541
      %1543 = vmatmul.bf16.gmra.mxu0 %v431
      %v1544 = vpop.f32.mrf.mxu0
      %v1545 = vadd.f32 0.0, %v1544
      %v1546 = vpop.f32.mrf.mxu0
      %v1547 = vadd.f32 0.0, %v1546
      %1548 = vmatmul.bf16.gmra.mxu0 %v432
      %v1549 = vpop.f32.mrf.mxu0
      %v1550 = vadd.f32 0.0, %v1549
      %v1551 = vpop.f32.mrf.mxu0
      %v1552 = vadd.f32 0.0, %v1551
      %1553 = vmatmul.bf16.gmra.mxu0 %v433
      %v1554 = vpop.f32.mrf.mxu0
      %v1555 = vadd.f32 0.0, %v1554
      %v1556 = vpop.f32.mrf.mxu0
      %v1557 = vadd.f32 0.0, %v1556
      %1558 = vmatmul.bf16.gmra.mxu0 %v434
      %v1559 = vpop.f32.mrf.mxu0
      %v1560 = vadd.f32 0.0, %v1559
      %v1561 = vpop.f32.mrf.mxu0
      %v1562 = vadd.f32 0.0, %v1561
      %1563 = vmatmul.bf16.gmra.mxu0 %v435
      %v1564 = vpop.f32.mrf.mxu0
      %v1565 = vadd.f32 0.0, %v1564
      %v1566 = vpop.f32.mrf.mxu0
      %v1567 = vadd.f32 0.0, %v1566
      %1568 = vmatmul.bf16.gmra.mxu0 %v658
      %v1569 = vpop.f32.mrf.mxu0
      %v1570 = vadd.f32 0.0, %v1569
      %v1571 = vpop.f32.mrf.mxu0
      %v1572 = vadd.f32 0.0, %v1571
      %1573 = vmatmul.bf16.gmra.mxu0 %v1315
      %v1574 = vpop.f32.mrf.mxu0
      %v1575 = vadd.f32 0.0, %v1574
      %v1576 = vpop.f32.mrf.mxu0
      %v1577 = vadd.f32 0.0, %v1576
      %1578 = vdwg.mxu0
      %1579 = vmatpush.bf16.msra.mxu0 %v1497
      %1580 = vmatpush.bf16.msra.mxu0 %v1496
      %1581 = vmatpush.bf16.msra.mxu0 %v1495
      %1582 = vmatpush.bf16.msra.mxu0 %v1494
      %1583 = vmatpush.bf16.msra.mxu0 %v1493
      %1584 = vmatpush.bf16.msra.mxu0 %v1492
      %1585 = vmatpush.bf16.msra.mxu0 %v1491
      %1586 = vmatpush.bf16.msra.mxu0 %v1490
      %1587 = vmatmul.bf16.gmra.mxu0 %v504
      %v1588 = vpop.f32.mrf.mxu0
      %v1589 = vadd.f32 %v1540, %v1588
      %v1590 = vpop.f32.mrf.mxu0
      %v1591 = vadd.f32 %v1542, %v1590
      %1592 = vmatmul.bf16.gmra.mxu0 %v516
      %v1593 = vpop.f32.mrf.mxu0
      %v1594 = vadd.f32 %v1545, %v1593
      %v1595 = vpop.f32.mrf.mxu0
      %v1596 = vadd.f32 %v1547, %v1595
      %1597 = vmatmul.bf16.gmra.mxu0 %v528
      %v1598 = vpop.f32.mrf.mxu0
      %v1599 = vadd.f32 %v1550, %v1598
      %v1600 = vpop.f32.mrf.mxu0
      %v1601 = vadd.f32 %v1552, %v1600
      %1602 = vmatmul.bf16.gmra.mxu0 %v540
      %v1603 = vpop.f32.mrf.mxu0
      %v1604 = vadd.f32 %v1555, %v1603
      %v1605 = vpop.f32.mrf.mxu0
      %v1606 = vadd.f32 %v1557, %v1605
      %1607 = vmatmul.bf16.gmra.mxu0 %v552
      %v1608 = vpop.f32.mrf.mxu0
      %v1609 = vadd.f32 %v1560, %v1608
      %v1610 = vpop.f32.mrf.mxu0
      %v1611 = vadd.f32 %v1562, %v1610
      %1612 = vmatmul.bf16.gmra.mxu0 %v564
      %v1613 = vpop.f32.mrf.mxu0
      %v1614 = vadd.f32 %v1565, %v1613
      %v1615 = vpop.f32.mrf.mxu0
      %v1616 = vadd.f32 %v1567, %v1615
      %1617 = vmatmul.bf16.gmra.mxu0 %v674
      %v1618 = vpop.f32.mrf.mxu0
      %v1619 = vadd.f32 %v1570, %v1618
      %v1620 = vpop.f32.mrf.mxu0
      %v1621 = vadd.f32 %v1572, %v1620
      %1622 = vmatmul.bf16.gmra.mxu0 %v1331
      %v1623 = vpop.f32.mrf.mxu0
      %v1624 = vadd.f32 %v1575, %v1623
      %v1625 = vpop.f32.mrf.mxu0
      %v1626 = vadd.f32 %v1577, %v1625
      %1627 = vdwg.mxu0
      %1628 = vmatpush.bf16.msra.mxu0 %v1505
      %1629 = vmatpush.bf16.msra.mxu0 %v1504
      %1630 = vmatpush.bf16.msra.mxu0 %v1503
      %1631 = vmatpush.bf16.msra.mxu0 %v1502
      %1632 = vmatpush.bf16.msra.mxu0 %v1501
      %1633 = vmatpush.bf16.msra.mxu0 %v1500
      %1634 = vmatpush.bf16.msra.mxu0 %v1499
      %1635 = vmatpush.bf16.msra.mxu0 %v1498
      %1636 = vmatmul.bf16.gmra.mxu0 %v582
      %v1637 = vpop.f32.mrf.mxu0
      %v1638 = vadd.f32 %v1589, %v1637
      %v1639 = vpop.f32.mrf.mxu0
      %v1640 = vadd.f32 %v1591, %v1639
      %1641 = vmatmul.bf16.gmra.mxu0 %v585
      %v1642 = vpop.f32.mrf.mxu0
      %v1643 = vadd.f32 %v1594, %v1642
      %v1644 = vpop.f32.mrf.mxu0
      %v1645 = vadd.f32 %v1596, %v1644
      %1646 = vmatmul.bf16.gmra.mxu0 %v588
      %v1647 = vpop.f32.mrf.mxu0
      %v1648 = vadd.f32 %v1599, %v1647
      %v1649 = vpop.f32.mrf.mxu0
      %v1650 = vadd.f32 %v1601, %v1649
      %1651 = vmatmul.bf16.gmra.mxu0 %v591
      %v1652 = vpop.f32.mrf.mxu0
      %v1653 = vadd.f32 %v1604, %v1652
      %v1654 = vpop.f32.mrf.mxu0
      %v1655 = vadd.f32 %v1606, %v1654
      %1656 = vmatmul.bf16.gmra.mxu0 %v594
      %v1657 = vpop.f32.mrf.mxu0
      %v1658 = vadd.f32 %v1609, %v1657
      %v1659 = vpop.f32.mrf.mxu0
      %v1660 = vadd.f32 %v1611, %v1659
      %1661 = vmatmul.bf16.gmra.mxu0 %v597
      %v1662 = vpop.f32.mrf.mxu0
      %v1663 = vadd.f32 %v1614, %v1662
      %v1664 = vpop.f32.mrf.mxu0
      %v1665 = vadd.f32 %v1616, %v1664
      %1666 = vmatmul.bf16.gmra.mxu0 %v678
      %v1667 = vpop.f32.mrf.mxu0
      %v1668 = vadd.f32 %v1619, %v1667
      %v1669 = vpop.f32.mrf.mxu0
      %v1670 = vadd.f32 %v1621, %v1669
      %1671 = vmatmul.bf16.gmra.mxu0 %v1335
      %v1672 = vpop.f32.mrf.mxu0
      %v1673 = vadd.f32 %v1624, %v1672
      %v1674 = vpop.f32.mrf.mxu0
      %v1675 = vadd.f32 %v1626, %v1674
      %1676 = vdwg.mxu0
      %v1677 = vadd.f32 %v1272, %v1638
      %v1678 = vadd.f32 %v1274, %v1640
      %v1679 = vadd.f32 %v1277, %v1643
      %v1680 = vadd.f32 %v1279, %v1645
      %v1681 = vadd.f32 %v1282, %v1648
      %v1682 = vadd.f32 %v1284, %v1650
      %v1683 = vadd.f32 %v1287, %v1653
      %v1684 = vadd.f32 %v1289, %v1655
      %v1685 = vadd.f32 %v1292, %v1658
      %v1686 = vadd.f32 %v1294, %v1660
      %v1687 = vadd.f32 %v1297, %v1663
      %v1688 = vadd.f32 %v1299, %v1665
      %v1689 = vadd.f32 %v1302, %v1668
      %v1690 = vadd.f32 %v1304, %v1670
      %v1691 = vadd.f32 %v1307, %v1673
      %v1692 = vadd.f32 %v1309, %v1675
      %v1693 = vld [vmem:[%s351] sm:$0x1]
      %v1695 = vperm.slane %v1693, 0
      %v1697 = vadd.f32 %v1677, %v1695
      %v1698 = vadd.f32 %v1678, %v1695
      %v1699 = vadd.f32 %v1679, %v1695
      %v1700 = vadd.f32 %v1680, %v1695
      %v1701 = vadd.f32 %v1681, %v1695
      %v1702 = vadd.f32 %v1682, %v1695
      %v1703 = vadd.f32 %v1683, %v1695
      %v1704 = vadd.f32 %v1684, %v1695
      %v1705 = vadd.f32 %v1685, %v1695
      %v1706 = vadd.f32 %v1686, %v1695
      %v1707 = vadd.f32 %v1687, %v1695
      %v1708 = vadd.f32 %v1688, %v1695
      %v1709 = vadd.f32 %v1689, %v1695
      %v1710 = vadd.f32 %v1690, %v1695
      %v1711 = vadd.f32 %v1691, %v1695
      %v1712 = vadd.f32 %v1692, %v1695
      %v1713 = vmax.f32 %v1697, 0.0
      %v1714 = vmax.f32 %v1698, 0.0
      %v1715 = vmax.f32 %v1699, 0.0
      %v1716 = vmax.f32 %v1700, 0.0
      %v1717 = vmax.f32 %v1701, 0.0
      %v1718 = vmax.f32 %v1702, 0.0
      %v1719 = vmax.f32 %v1703, 0.0
      %v1720 = vmax.f32 %v1704, 0.0
      %v1721 = vmax.f32 %v1705, 0.0
      %v1722 = vmax.f32 %v1706, 0.0
      %v1723 = vmax.f32 %v1707, 0.0
      %v1724 = vmax.f32 %v1708, 0.0
      %v1725 = vmax.f32 %v1709, 0.0
      %v1726 = vmax.f32 %v1710, 0.0
      %v1727 = vmax.f32 %v1711, 0.0
      %v1728 = vmax.f32 %v1712, 0.0
      %1729 = vst [vmem:[%s364] sm:$0xff] %v1713
      %1730 = vst [vmem:[%s364 + $0x8] sm:$0xff] %v1714
      %1731 = vst [vmem:[%s364 + $0x10] sm:$0xff] %v1715
      %1732 = vst [vmem:[%s364 + $0x18] sm:$0xff] %v1716
      %1733 = vst [vmem:[%s364 + $0x20] sm:$0xff] %v1717
      %1734 = vst [vmem:[%s364 + $0x28] sm:$0xff] %v1718
      %1735 = vst [vmem:[%s364 + $0x30] sm:$0xff] %v1719
      %1736 = vst [vmem:[%s364 + $0x38] sm:$0xff] %v1720
      %1737 = vst [vmem:[%s364 + $0x40] sm:$0xff] %v1721
      %1738 = vst [vmem:[%s364 + $0x48] sm:$0xff] %v1722
      %1739 = vst [vmem:[%s364 + $0x50] sm:$0xff] %v1723
      %1740 = vst [vmem:[%s364 + $0x58] sm:$0xff] %v1724
      %1741 = vst [vmem:[%s364 + $0x60] sm:$0xff] %v1725
      %1742 = vst [vmem:[%s364 + $0x68] sm:$0xff] %v1726
      %1743 = vst [vmem:[%s364 + $0x70] sm:$0xff] %v1727
      %1744 = vst [vmem:[%s364 + $0x78] sm:$0xff] %v1728
      %s1745 = smul.u32 8, %s21
      %p1746 = scmp.lt.s32.totalorder %s20, 1
      %s1747 = scalar_select %p1746, %s20, 1
      %p1748 = scmp.lt.s32.totalorder %s1745, 15
      %s1749 = scalar_select %p1748, %s1745, 15
      %p1750 = scmp.lt.s32.totalorder %s22, 0
      %s1751 = scalar_select %p1750, %s22, 0
      %s1752 = smul.addr %s1749, 2
      %s1753 = sadd.s32 %s1751, %s1752
      %s1754 = smul.addr %s1747, 32
      %s1755 = sadd.s32 %s1753, %s1754
      %s1756 = smul.addr %s1755, 8
      %s1757 = scalar_lea.vmem %s4, %s1756
      // Predicated region
      $region37: #{upsample_block_forward.5} parent=35 // pred_check
        %p1758 = pneg %p168
      $region38: #{upsample_block_forward.5} parent=35 // pred_check_branch
        %1760 = sbr.rel (%p1758) target = $region40
      $region39: #{upsample_block_forward.5} parent=35 // pred_region
        %s1761 = smul.u32 8, %s21
      $region40: #{upsample_block_forward.5} parent=35 // pred_fallthru
        _
    $region36: #{upsample_block_forward.5} parent=5 // pred_fallthru
      _
    %p1762 = scmp.le.s32.totalorder 2, %s10
    // Predicated region
    $region41: #{upsample_block_forward.5} parent=5 // pred_check
      %p1763 = pneg %p1762
    $region42: #{upsample_block_forward.5} parent=5 // pred_check_branch
      %1765 = sbr.rel (%p1763) target = $region44
    $region43: #{upsample_block_forward.5} parent=5 // pred_region
      %s1766 = ssub.s32 %s10, 2
      // Predicated region
      $region45: #{upsample_block_forward.5} parent=43 // pred_check
        %p1767 = pneg %p174
      $region46: #{upsample_block_forward.5} parent=43 // pred_check_branch
        %1769 = sbr.rel (%p1767) target = $region48
      $region47: #{upsample_block_forward.5} parent=43 // pred_region
        %s1770 = smul.u32 8, %s24
        %p1771 = scmp.lt.s32.totalorder %s23, 1
        %s1772 = scalar_select %p1771, %s23, 1
        %p1773 = scmp.lt.s32.totalorder %s1770, 15
        %s1774 = scalar_select %p1773, %s1770, 15
        %p1775 = scmp.lt.s32.totalorder %s25, 0
        %s1776 = scalar_select %p1775, %s25, 0
        %s1777 = smul.addr %s1774, 2
        %s1778 = sadd.s32 %s1776, %s1777
        %s1779 = smul.addr %s1772, 32
        %s1780 = sadd.s32 %s1778, %s1779
        %s1781 = smul.addr %s1780, 8
        %s1782 = scalar_lea.vmem %s4, %s1781
      $region48: #{upsample_block_forward.5} parent=43 // pred_fallthru
        _
    $region44: #{upsample_block_forward.5} parent=5 // pred_fallthru
      _
  $region6: #{upsample_block_forward.5} parent=0 // loop_footer
    %s14 = sadd.s32 1, %s10
  $region7: #{upsample_block_forward.5} parent=0 // loop_footer_branch
    %9 = sbr.rel target = $region3
  $region8: #{upsample_block_forward.5} parent=0 // loop_exit
    _

</llo_original>
